<compile_context>
chip_gen: v7x
topology: tpu7x:2x2x1
jax: 0.10.0
libtpu: 0.0.40
codegen_flags: <defaults>
</compile_context>

<pallas_src>
import jax
import jax.numpy as jnp
from jax.experimental import pallas as pl
from jax.experimental.pallas import tpu as pltpu

INPUT_SIZE = 6
HIDDEN_SIZE = 20
HIDDEN_2_SIZE = 26
OUTPUT_SIZE = 1

# Eval-mode RReLU slope: (lower + upper) / 2 with PyTorch defaults 1/8, 1/3.
_RRELU_SLOPE = (1.0 / 8.0 + 1.0 / 3.0) / 2.0
# TODO(synk): training-mode RReLU samples a random per-element slope; only the
# deterministic eval-mode behavior is implemented here.

_LANES = 128
_XCOLS = 8               # x padded to 8 columns: 6 features + bias col + 1 zero
_BIAS_COL = INPUT_SIZE   # column 6 of x carries a constant 1.0 (layer-1 bias)

# Packed weight slab layout (rows of a (272, 128) f32 slab, ~136 KiB):
_ROW_W1 = 0                    # rows   0..7   : W1 aug (8,128); rows 0..5 = W1, row 6 = b1
_ROW_W2 = _ROW_W1 + _XCOLS     # rows   8..135 : W2 full (128,128); rows 0..19 = W2 (lanes 0..25)
_ROW_W3 = _ROW_W2 + _LANES     # rows 136..263 : W3 bcast (128,128); rows 0..25 = w3[k] on all lanes
_ROW_B2 = _ROW_W3 + _LANES     # row  264      : b2 on lanes 0..25
_ROW_B3 = _ROW_B2 + 1          # row  265      : b3 replicated on all 128 lanes
_SLAB_ROWS = 272               # padded to a sublane multiple of 8

_TB = 128   # batch tile; works on v5e/v6e/v7x (raise to 256+ on v6e/v7x if desired)
_HIGHEST = jax.lax.Precision.HIGHEST


def _ff_kernel(slab_ref, x_ref, o_ref):
    # Static slices of the resident weight slab (DMA'd once for the whole grid).
    w1 = slab_ref[_ROW_W1:_ROW_W1 + _XCOLS, :]        # (8, 128)
    w2 = slab_ref[_ROW_W2:_ROW_W2 + _LANES, :]        # (128, 128)
    w3 = slab_ref[_ROW_W3:_ROW_W3 + _LANES, :]        # (128, 128)
    b2_row = slab_ref[_ROW_B2:_ROW_B2 + 1, :]         # (1, 128), zero beyond lane 25
    b3_row = slab_ref[_ROW_B3:_ROW_B3 + 1, :]         # (1, 128), b3 on every lane

    x = x_ref[...]                                    # (TB, 8): 6 features + 1.0 bias col

    # Layer 1 (MXU): (TB,8) @ (8,128); b1 is folded into row 6 (x col 6 == 1.0).
    h1 = jnp.dot(x, w1, preferred_element_type=jnp.float32, precision=_HIGHEST)
    h1 = jnp.where(h1 >= 0.0, h1, h1 * _RRELU_SLOPE)  # RReLU, eval mode

    # Layer 2 (MXU): (TB,128) @ (128,128) + b2.  Padded lanes -> sigmoid(0)=0.5.
    h2 = jnp.dot(h1, w2, preferred_element_type=jnp.float32, precision=_HIGHEST)
    h2 = jax.nn.sigmoid(h2 + b2_row)

    # Layer 3 (MXU): w3 is replicated across all 128 output lanes so the result
    # is lane-dense (every lane of a row equals the scalar output).  Padded
    # rows of w3 are zero, so the 0.5 padded lanes of h2 do not leak.
    out = jnp.dot(h2, w3, preferred_element_type=jnp.float32, precision=_HIGHEST)
    o_ref[...] = (out + b3_row).astype(o_ref.dtype)


def pack_params(params):
    """Pack (w1, b1, w2, b2, w3, b3) into one (272, 128) f32 weight slab.

    Weights are given as (in_features, out_features) (i.e. PyTorch W^T)."""
    w1, b1, w2, b2, w3, b3 = params
    w1 = jnp.asarray(w1, jnp.float32).reshape(INPUT_SIZE, HIDDEN_SIZE)
    b1 = jnp.asarray(b1, jnp.float32).reshape(HIDDEN_SIZE)
    w2 = jnp.asarray(w2, jnp.float32).reshape(HIDDEN_SIZE, HIDDEN_2_SIZE)
    b2 = jnp.asarray(b2, jnp.float32).reshape(HIDDEN_2_SIZE)
    w3 = jnp.asarray(w3, jnp.float32).reshape(HIDDEN_2_SIZE, OUTPUT_SIZE)
    b3 = jnp.asarray(b3, jnp.float32).reshape(())

    slab = jnp.zeros((_SLAB_ROWS, _LANES), jnp.float32)
    # Layer 1: rows 0..5 = W1 (lanes 0..19), row 6 = b1 (matches x bias column 6).
    slab = slab.at[_ROW_W1:_ROW_W1 + INPUT_SIZE, :HIDDEN_SIZE].set(w1)
    slab = slab.at[_ROW_W1 + _BIAS_COL, :HIDDEN_SIZE].set(b1)
    # Layer 2: rows 0..19 = W2 in lanes 0..25; bias row.
    slab = slab.at[_ROW_W2:_ROW_W2 + HIDDEN_SIZE, :HIDDEN_2_SIZE].set(w2)
    slab = slab.at[_ROW_B2, :HIDDEN_2_SIZE].set(b2)
    # Layer 3: each of the 26 rows holds w3[k] replicated across all 128 lanes.
    slab = slab.at[_ROW_W3:_ROW_W3 + HIDDEN_2_SIZE, :].set(
        jnp.broadcast_to(w3, (HIDDEN_2_SIZE, _LANES)))
    slab = slab.at[_ROW_B3, :].set(b3)
    return slab


@jax.jit
def action_conditioned_ff_batched(x, packed_slab):
    """Batched forward: x of shape (B, 6) -> (B, 1) f32."""
    x = jnp.asarray(x, jnp.float32).reshape(-1, INPUT_SIZE)
    b = x.shape[0]
    b_pad = -(-b // _TB) * _TB

    # Tiny per-call prep: (B_pad, 8) with a constant 1.0 bias column.
    x_aug = jnp.zeros((b_pad, _XCOLS), jnp.float32)
    x_aug = x_aug.at[:b, :INPUT_SIZE].set(x)
    x_aug = x_aug.at[:, _BIAS_COL].set(1.0)

    out = pl.pallas_call(
        _ff_kernel,
        out_shape=jax.ShapeDtypeStruct((b_pad, _LANES), jnp.float32),
        grid=(b_pad // _TB,),
        in_specs=[
            pl.BlockSpec((_SLAB_ROWS, _LANES), lambda i: (0, 0)),  # weights resident
            pl.BlockSpec((_TB, _XCOLS), lambda i: (i, 0)),         # x tile per step
        ],
        out_specs=pl.BlockSpec((_TB, _LANES), lambda i: (i, 0)),   # lane-dense output
        compiler_params=pltpu.CompilerParams(
            dimension_semantics=("parallel",)),
    )(packed_slab, x_aug)

    return out[:b, :OUTPUT_SIZE]  # every lane holds the same value; take column 0


def action_conditioned_ff(x, packed_slab):
    """Single-sample forward matching the PyTorch module: (6,) -> (1,)."""
    x = jnp.asarray(x, jnp.float32).reshape(1, INPUT_SIZE)
    return action_conditioned_ff_batched(x, packed_slab).reshape(OUTPUT_SIZE)


def init_params(key):
    """Deterministic init mirroring nn.Linear's U(-1/sqrt(fan_in), +1/sqrt(fan_in)).

    Weights are stored as (in_features, out_features)."""
    def linear(key, fan_in, fan_out):
        kw, kb = jax.random.split(key)
        bound = 1.0 / jnp.sqrt(fan_in)
        w = jax.random.uniform(kw, (fan_in, fan_out), jnp.float32,
                               minval=-bound, maxval=bound)
        b = jax.random.uniform(kb, (fan_out,), jnp.float32,
                               minval=-bound, maxval=bound)
        return w, b

    k1, k2, k3 = jax.random.split(key, 3)
    w1, b1 = linear(k1, INPUT_SIZE, HIDDEN_SIZE)
    w2, b2 = linear(k2, HIDDEN_SIZE, HIDDEN_2_SIZE)
    w3, b3 = linear(k3, HIDDEN_2_SIZE, OUTPUT_SIZE)
    return (w1, b1, w2, b2, w3, b3)


def _reference(x, params):
    """Plain-JAX reference of the same forward pass, for verification."""
    x = jnp.asarray(x, jnp.float32).reshape(-1, INPUT_SIZE)
    w1, b1, w2, b2, w3, b3 = params
    h1 = jnp.dot(x, w1, precision=_HIGHEST) + b1[None, :]
    h1 = jnp.where(h1 >= 0.0, h1, h1 * _RRELU_SLOPE)
    h2 = jax.nn.sigmoid(jnp.dot(h1, w2, precision=_HIGHEST) + b2[None, :])
    return jnp.dot(h2, w3, precision=_HIGHEST) + b3        # (B, 1)


if __name__ == "__main__":
    key = jax.random.PRNGKey(0)
    kx, kp = jax.random.split(key)

    params = init_params(kp)
    packed = pack_params(params)

    # Single sample, matching the PyTorch module forward: (6,) -> (1,).
    x1 = jax.random.normal(kx, (INPUT_SIZE,), dtype=jnp.float32)
    y1 = action_conditioned_ff(x1, packed)
    jax.block_until_ready(y1)
    y1_ref = _reference(x1, params).reshape(OUTPUT_SIZE)
    assert y1.shape == (OUTPUT_SIZE,)
    assert jnp.allclose(y1, y1_ref, atol=1e-4, rtol=1e-4), (y1, y1_ref)

    # Small batch through the same kernel (weights resident across the grid).
    xb = jax.random.normal(jax.random.PRNGKey(1), (16, INPUT_SIZE),
                           dtype=jnp.float32)
    yb = action_conditioned_ff_batched(xb, packed)
    jax.block_until_ready(yb)
    yb_ref = _reference(xb, params)
    assert yb.shape == (16, OUTPUT_SIZE)
    assert jnp.allclose(yb, yb_ref, atol=1e-4, rtol=1e-4), (yb, yb_ref)

    print("KERNEL_OK")
</pallas_src>

<mosaic_0001>
module attributes {stable_mosaic.version = 11 : i64} {
  func.func @_ff_kernel(%arg0: i32, %arg1: memref<272x128xf32, #tpu.memory_space<vmem>>, %arg2: memref<128x8xf32, #tpu.memory_space<vmem>>, %arg3: memref<128x128xf32, #tpu.memory_space<vmem>>) attributes {dimension_semantics = [#tpu.dimension_semantics<parallel>], iteration_bounds = array<i64: 1>, scalar_prefetch = 0 : i64, scratch_operands = 0 : i64, tpu.core_type = #tpu.core_type<tc>, window_params = [{pipeline_mode = #tpu.pipeline_mode<synchronous>, transform_indices = @transform_0, window_bounds = array<i64: 272, 128>}, {transform_indices = @transform_1, window_bounds = array<i64: 128, 8>}, {transform_indices = @transform_2, window_bounds = array<i64: 128, 128>}]} {
    %c0 = arith.constant 0 : index
    %c0_0 = arith.constant 0 : index
    %0 = vector.load %arg1[%c0, %c0_0] : memref<272x128xf32, #tpu.memory_space<vmem>>, vector<8x128xf32>
    %c8 = arith.constant 8 : index
    %c0_1 = arith.constant 0 : index
    %1 = vector.load %arg1[%c8, %c0_1] : memref<272x128xf32, #tpu.memory_space<vmem>>, vector<128x128xf32>
    %c136 = arith.constant 136 : index
    %c0_2 = arith.constant 0 : index
    %2 = vector.load %arg1[%c136, %c0_2] : memref<272x128xf32, #tpu.memory_space<vmem>>, vector<128x128xf32>
    %c264 = arith.constant 264 : index
    %c0_3 = arith.constant 0 : index
    %3 = vector.load %arg1[%c264, %c0_3] : memref<272x128xf32, #tpu.memory_space<vmem>>, vector<1x128xf32>
    %c265 = arith.constant 265 : index
    %c0_4 = arith.constant 0 : index
    %4 = vector.load %arg1[%c265, %c0_4] : memref<272x128xf32, #tpu.memory_space<vmem>>, vector<1x128xf32>
    %c0_5 = arith.constant 0 : index
    %c0_6 = arith.constant 0 : index
    %5 = vector.load %arg2[%c0_5, %c0_6] : memref<128x8xf32, #tpu.memory_space<vmem>>, vector<128x8xf32>
    %cst = arith.constant dense<0.000000e+00> : vector<128x128xf32>
    %6 = tpu.matmul %5, %0, %cst {dimension_numbers = #tpu.dot_dimension_numbers<[1], [0], [0], [1], [0, 0, 1, 1], [], []>, precision = #tpu.contract_precision<fp32>} : vector<128x8xf32>, vector<8x128xf32>, vector<128x128xf32> -> vector<128x128xf32>
    %cst_7 = arith.constant 0.000000e+00 : f32
    %7 = vector.broadcast %cst_7 : f32 to vector<128x128xf32>
    %8 = arith.cmpf oge, %6, %7 : vector<128x128xf32>
    %cst_8 = arith.constant 0.229166672 : f32
    %9 = vector.broadcast %cst_8 : f32 to vector<128x128xf32>
    %10 = arith.mulf %6, %9 : vector<128x128xf32>
    %11 = arith.select %8, %6, %10 : vector<128x128xi1>, vector<128x128xf32>
    %cst_9 = arith.constant dense<0.000000e+00> : vector<128x128xf32>
    %12 = tpu.matmul %11, %1, %cst_9 {dimension_numbers = #tpu.dot_dimension_numbers<[1], [0], [0], [1], [0, 0, 1, 1], [], []>, precision = #tpu.contract_precision<fp32>} : vector<128x128xf32>, vector<128x128xf32>, vector<128x128xf32> -> vector<128x128xf32>
    %13 = vector.broadcast %3 : vector<1x128xf32> to vector<128x128xf32>
    %14 = arith.addf %12, %13 : vector<128x128xf32>
    %15 = arith.negf %14 : vector<128x128xf32>
    %16 = math.exp %15 : vector<128x128xf32>
    %cst_10 = arith.constant 1.000000e+00 : f32
    %17 = vector.broadcast %cst_10 : f32 to vector<128x128xf32>
    %18 = arith.addf %17, %16 : vector<128x128xf32>
    %19 = arith.divf %17, %18 : vector<128x128xf32>
    %cst_11 = arith.constant dense<0.000000e+00> : vector<128x128xf32>
    %20 = tpu.matmul %19, %2, %cst_11 {dimension_numbers = #tpu.dot_dimension_numbers<[1], [0], [0], [1], [0, 0, 1, 1], [], []>, precision = #tpu.contract_precision<fp32>} : vector<128x128xf32>, vector<128x128xf32>, vector<128x128xf32> -> vector<128x128xf32>
    %21 = vector.broadcast %4 : vector<1x128xf32> to vector<128x128xf32>
    %22 = arith.addf %20, %21 : vector<128x128xf32>
    %c0_12 = arith.constant 0 : index
    %c0_13 = arith.constant 0 : index
    %23 = vector.load %arg3[%c0_12, %c0_13] : memref<128x128xf32, #tpu.memory_space<vmem>>, vector<128x128xf32>
    tpu.vector_store %arg3[%c0_12, %c0_13], %22 {strides = array<i32>} : memref<128x128xf32, #tpu.memory_space<vmem>>, vector<128x128xf32>,
    return
  }
  func.func @transform_0(%arg0: i32) -> (i32, i32) {
    %c0_i32 = arith.constant 0 : i32
    %c0_i32_0 = arith.constant 0 : i32
    %c0_i32_1 = arith.constant 0 : i32
    return %c0_i32, %c0_i32_0 : i32, i32
  }
  func.func @transform_1(%arg0: i32) -> (i32, i32) {
    %c0_i32 = arith.constant 0 : i32
    %c0_i32_0 = arith.constant 0 : i32
    return %arg0, %c0_i32 : i32, i32
  }
  func.func @transform_2(%arg0: i32) -> (i32, i32) {
    %c0_i32 = arith.constant 0 : i32
    %c0_i32_0 = arith.constant 0 : i32
    return %arg0, %c0_i32 : i32, i32
  }
}

</mosaic_0001>

<llo_original>
// kernel: action_conditioned_ff_batched.1
$region0: #{action_conditioned_ff_batched.1}
  #allocation0 [shape = 'u32[]', space=smem, size = 0x4, offset = 0x4, fixed_abs, tag = 'smem constant byte address 0x4 - core index']
  #allocation1 [shape = 'u32[144,128]{1,0:T(1,128)}', space=vmem, size = 0x12000, scoped, tag = 'internal scratch']
  %s0 = inlined_call_operand.vmem [shape: f32[272,128], index: 0, kind: input, shape index: {}]
  %s1 = inlined_call_operand.vmem [shape: f32[128,8], index: 1, kind: input, shape index: {}]
  %s2 = inlined_call_operand.vmem [shape: f32[128,128], index: 2, kind: output, shape index: {}]
  %s3 = sld [smem:[#allocation0]]
  $region18: #{action_conditioned_ff_batched.1} parent=0
    _
  %s5 = ssub.s32 1, %s3
  %s6 = scalar_select 0, %s5, %s3
  // Predicated region
  $region2: #{action_conditioned_ff_batched.1} parent=0 // pred_check
    _
  $region3: #{action_conditioned_ff_batched.1} parent=0 // pred_check_branch
    %8 = sbr.rel (0) target = $region5
  $region4: #{action_conditioned_ff_batched.1} parent=0 // pred_region
    _
  $region5: #{action_conditioned_ff_batched.1} parent=0 // pred_fallthru
    _
  // Predicated region
  $region6: #{action_conditioned_ff_batched.1} parent=0 // pred_check
    _
  $region7: #{action_conditioned_ff_batched.1} parent=0 // pred_check_branch
    %10 = sbr.rel (0) target = $region9
  $region8: #{action_conditioned_ff_batched.1} parent=0 // pred_region
    _
  $region9: #{action_conditioned_ff_batched.1} parent=0 // pred_fallthru
    _
  %v11 = vld [vmem:[%s0] sm:$0xff]
  %v12 = vld [vmem:[%s0 + $0x8] sm:$0xff]
  %v13 = vld [vmem:[%s0 + $0x10] sm:$0xff]
  %v14 = vld [vmem:[%s0 + $0x18] sm:$0xff]
  %v15 = vld [vmem:[%s0 + $0x20] sm:$0xff]
  %v16 = vld [vmem:[%s0 + $0x28] sm:$0xff]
  %v17 = vld [vmem:[%s0 + $0x30] sm:$0xff]
  %v18 = vld [vmem:[%s0 + $0x38] sm:$0xff]
  %v19 = vld [vmem:[%s0 + $0x40] sm:$0xff]
  %v20 = vld [vmem:[%s0 + $0x48] sm:$0xff]
  %v21 = vld [vmem:[%s0 + $0x50] sm:$0xff]
  %v22 = vld [vmem:[%s0 + $0x58] sm:$0xff]
  %v23 = vld [vmem:[%s0 + $0x60] sm:$0xff]
  %v24 = vld [vmem:[%s0 + $0x68] sm:$0xff]
  %v25 = vld [vmem:[%s0 + $0x70] sm:$0xff]
  %v26 = vld [vmem:[%s0 + $0x78] sm:$0xff]
  %v27 = vld [vmem:[%s0 + $0x80] sm:$0xff]
  %v28 = vld [vmem:[%s0 + $0x88] sm:$0xff]
  %v29 = vld [vmem:[%s0 + $0x90] sm:$0xff]
  %v30 = vld [vmem:[%s0 + $0x98] sm:$0xff]
  %v31 = vld [vmem:[%s0 + $0xa0] sm:$0xff]
  %v32 = vld [vmem:[%s0 + $0xa8] sm:$0xff]
  %v33 = vld [vmem:[%s0 + $0xb0] sm:$0xff]
  %v34 = vld [vmem:[%s0 + $0xb8] sm:$0xff]
  %v35 = vld [vmem:[%s0 + $0xc0] sm:$0xff]
  %v36 = vld [vmem:[%s0 + $0xc8] sm:$0xff]
  %v37 = vld [vmem:[%s0 + $0xd0] sm:$0xff]
  %v38 = vld [vmem:[%s0 + $0xd8] sm:$0xff]
  %v39 = vld [vmem:[%s0 + $0xe0] sm:$0xff]
  %v40 = vld [vmem:[%s0 + $0xe8] sm:$0xff]
  %v41 = vld [vmem:[%s0 + $0xf0] sm:$0xff]
  %v42 = vld [vmem:[%s0 + $0xf8] sm:$0xff]
  %v43 = vld [vmem:[%s0 + $0x100] sm:$0xff]
  %v44 = vld [vmem:[%s0 + $0x108] sm:$0x1]
  %v45 = vld [vmem:[%s0 + $0x109] sm:$0x1]
  %v46 = vld [vmem:[%s1] sm:$0xff]
  %v47 = vld [vmem:[%s1 + $0x8] sm:$0xff]
  %v48 = vld [vmem:[%s1 + $0x10] sm:$0xff]
  %v49 = vld [vmem:[%s1 + $0x18] sm:$0xff]
  %v50 = vld [vmem:[%s1 + $0x20] sm:$0xff]
  %v51 = vld [vmem:[%s1 + $0x28] sm:$0xff]
  %v52 = vld [vmem:[%s1 + $0x30] sm:$0xff]
  %v53 = vld [vmem:[%s1 + $0x38] sm:$0xff]
  %v54 = vld [vmem:[%s1 + $0x40] sm:$0xff]
  %v55 = vld [vmem:[%s1 + $0x48] sm:$0xff]
  %v56 = vld [vmem:[%s1 + $0x50] sm:$0xff]
  %v57 = vld [vmem:[%s1 + $0x58] sm:$0xff]
  %v58 = vld [vmem:[%s1 + $0x60] sm:$0xff]
  %v59 = vld [vmem:[%s1 + $0x68] sm:$0xff]
  %v60 = vld [vmem:[%s1 + $0x70] sm:$0xff]
  %v61 = vld [vmem:[%s1 + $0x78] sm:$0xff]
  %vm62 = vcmask 64512
  %v64 = vsel %vm62, %v46, 0
  %v67 = vsel %vm62, %v47, 0
  %v70 = vsel %vm62, %v48, 0
  %v73 = vsel %vm62, %v49, 0
  %v76 = vsel %vm62, %v50, 0
  %v79 = vsel %vm62, %v51, 0
  %v82 = vsel %vm62, %v52, 0
  %v85 = vsel %vm62, %v53, 0
  %v88 = vsel %vm62, %v54, 0
  %v91 = vsel %vm62, %v55, 0
  %v94 = vsel %vm62, %v56, 0
  %v97 = vsel %vm62, %v57, 0
  %v100 = vsel %vm62, %v58, 0
  %v103 = vsel %vm62, %v59, 0
  %v106 = vsel %vm62, %v60, 0
  %v109 = vsel %vm62, %v61, 0
  %111 = vmatprep.subr.mxu0 0.0
  %v112 = vand.u32 %v11, 4294901760
  %113 = vmatpush1.msra.mxu0 %v112
  %114 = vmatprep.subr.mxu0 0.0
  %115 = vmatpush1.msra.mxu0 0.0
  %116 = vmatprep.subr.mxu0 0.0
  %117 = vmatpush1.msra.mxu0 0.0
  %118 = vmatprep.subr.mxu0 0.0
  %119 = vmatpush1.msra.mxu0 0.0
  %120 = vmatprep.subr.mxu0 0.0
  %121 = vmatpush1.msra.mxu0 0.0
  %122 = vmatprep.subr.mxu0 0.0
  %123 = vmatpush1.msra.mxu0 0.0
  %124 = vmatprep.subr.mxu0 0.0
  %125 = vmatpush1.msra.mxu0 0.0
  %126 = vmatprep.subr.mxu0 0.0
  %127 = vmatpush1.msra.mxu0 0.0
  %128 = vmatprep.subr.mxu0 0.0
  %129 = vmatpush1.msra.mxu0 0.0
  %130 = vmatprep.subr.mxu0 0.0
  %131 = vmatpush1.msra.mxu0 0.0
  %132 = vmatprep.subr.mxu0 0.0
  %133 = vmatpush1.msra.mxu0 0.0
  %134 = vmatprep.subr.mxu0 0.0
  %135 = vmatpush1.msra.mxu0 0.0
  %136 = vmatprep.subr.mxu0 0.0
  %137 = vmatpush1.msra.mxu0 0.0
  %138 = vmatprep.subr.mxu0 0.0
  %139 = vmatpush1.msra.mxu0 0.0
  %140 = vmatprep.subr.mxu0 0.0
  %141 = vmatpush1.msra.mxu0 0.0
  %142 = vmatprep.subr.mxu0 0.0
  %143 = vmatpush1.msra.mxu0 0.0
  %144 = vmatprep.subr.mxu0 0.0
  %145 = vmatpush1.msra.mxu0 0.0
  %146 = vmatprep.subr.mxu0 0.0
  %147 = vmatpush1.msra.mxu0 0.0
  %148 = vmatprep.subr.mxu0 0.0
  %149 = vmatpush1.msra.mxu0 0.0
  %150 = vmatprep.subr.mxu0 0.0
  %151 = vmatpush1.msra.mxu0 0.0
  %152 = vmatprep.subr.mxu0 0.0
  %153 = vmatpush1.msra.mxu0 0.0
  %154 = vmatprep.subr.mxu0 0.0
  %155 = vmatpush1.msra.mxu0 0.0
  %156 = vmatprep.subr.mxu0 0.0
  %157 = vmatpush1.msra.mxu0 0.0
  %158 = vmatprep.subr.mxu0 0.0
  %159 = vmatpush1.msra.mxu0 0.0
  %160 = vmatprep.subr.mxu0 0.0
  %161 = vmatpush1.msra.mxu0 0.0
  %162 = vmatprep.subr.mxu0 0.0
  %163 = vmatpush1.msra.mxu0 0.0
  %164 = vmatprep.subr.mxu0 0.0
  %165 = vmatpush1.msra.mxu0 0.0
  %166 = vmatprep.subr.mxu0 0.0
  %167 = vmatpush1.msra.mxu0 0.0
  %168 = vmatprep.subr.mxu0 0.0
  %169 = vmatpush1.msra.mxu0 0.0
  %170 = vmatprep.subr.mxu0 0.0
  %171 = vmatpush1.msra.mxu0 0.0
  %172 = vmatprep.subr.mxu0 0.0
  %173 = vmatpush1.msra.mxu0 0.0
  %174 = vmatprep.subr.mxu0 0.0
  %175 = vmatpush1.msra.mxu0 0.0
  %176 = vmatprep.mubr.f32.mxu0 0.0
  %v177 = vand.u32 %v64, 4294901760
  %v178 = vsub.f32 %v64, %v177
  %v179 = vand.u32 %v178, 4294901760
  %v180 = vsub.f32 %v178, %v179
  %v181 = vand.u32 %v180, 4294901760
  %182 = vmatmul.mubr.f32.gmra.mrb[0].mxu0 %v181
  %v183 = vpop.f32.mrb[0].mxu0
  %v184 = vadd.f32 0.0, %v183
  %v185 = vpop.f32.mrb[0].mxu0
  %186 = vmatprep.mubr.f32.mxu0 0.0
  %v187 = vand.u32 %v67, 4294901760
  %v188 = vsub.f32 %v67, %v187
  %v189 = vand.u32 %v188, 4294901760
  %v190 = vsub.f32 %v188, %v189
  %v191 = vand.u32 %v190, 4294901760
  %192 = vmatmul.mubr.f32.gmra.mrb[0].mxu0 %v191
  %v193 = vpop.f32.mrb[0].mxu0
  %v194 = vadd.f32 0.0, %v193
  %v195 = vpop.f32.mrb[0].mxu0
  %196 = vmatprep.mubr.f32.mxu0 0.0
  %v197 = vand.u32 %v70, 4294901760
  %v198 = vsub.f32 %v70, %v197
  %v199 = vand.u32 %v198, 4294901760
  %v200 = vsub.f32 %v198, %v199
  %v201 = vand.u32 %v200, 4294901760
  %202 = vmatmul.mubr.f32.gmra.mrb[0].mxu0 %v201
  %v203 = vpop.f32.mrb[0].mxu0
  %v204 = vadd.f32 0.0, %v203
  %v205 = vpop.f32.mrb[0].mxu0
  %206 = vmatprep.mubr.f32.mxu0 0.0
  %v207 = vand.u32 %v73, 4294901760
  %v208 = vsub.f32 %v73, %v207
  %v209 = vand.u32 %v208, 4294901760
  %v210 = vsub.f32 %v208, %v209
  %v211 = vand.u32 %v210, 4294901760
  %212 = vmatmul.mubr.f32.gmra.mrb[0].mxu0 %v211
  %v213 = vpop.f32.mrb[0].mxu0
  %v214 = vadd.f32 0.0, %v213
  %v215 = vpop.f32.mrb[0].mxu0
  %216 = vmatprep.mubr.f32.mxu0 0.0
  %v217 = vand.u32 %v76, 4294901760
  %v218 = vsub.f32 %v76, %v217
  %v219 = vand.u32 %v218, 4294901760
  %v220 = vsub.f32 %v218, %v219
  %v221 = vand.u32 %v220, 4294901760
  %222 = vmatmul.mubr.f32.gmra.mrb[0].mxu0 %v221
  %v223 = vpop.f32.mrb[0].mxu0
  %v224 = vadd.f32 0.0, %v223
  %v225 = vpop.f32.mrb[0].mxu0
  %226 = vmatprep.mubr.f32.mxu0 0.0
  %v227 = vand.u32 %v79, 4294901760
  %v228 = vsub.f32 %v79, %v227
  %v229 = vand.u32 %v228, 4294901760
  %v230 = vsub.f32 %v228, %v229
  %v231 = vand.u32 %v230, 4294901760
  %232 = vmatmul.mubr.f32.gmra.mrb[0].mxu0 %v231
  %v233 = vpop.f32.mrb[0].mxu0
  %v234 = vadd.f32 0.0, %v233
  %v235 = vpop.f32.mrb[0].mxu0
  %236 = vmatprep.mubr.f32.mxu0 0.0
  %v237 = vand.u32 %v82, 4294901760
  %v238 = vsub.f32 %v82, %v237
  %v239 = vand.u32 %v238, 4294901760
  %v240 = vsub.f32 %v238, %v239
  %v241 = vand.u32 %v240, 4294901760
  %242 = vmatmul.mubr.f32.gmra.mrb[0].mxu0 %v241
  %v243 = vpop.f32.mrb[0].mxu0
  %v244 = vadd.f32 0.0, %v243
  %v245 = vpop.f32.mrb[0].mxu0
  %246 = vmatprep.mubr.f32.mxu0 0.0
  %v247 = vand.u32 %v85, 4294901760
  %v248 = vsub.f32 %v85, %v247
  %v249 = vand.u32 %v248, 4294901760
  %v250 = vsub.f32 %v248, %v249
  %v251 = vand.u32 %v250, 4294901760
  %252 = vmatmul.mubr.f32.gmra.mrb[0].mxu0 %v251
  %v253 = vpop.f32.mrb[0].mxu0
  %v254 = vadd.f32 0.0, %v253
  %v255 = vpop.f32.mrb[0].mxu0
  %256 = vmatprep.mubr.f32.mxu0 0.0
  %v257 = vand.u32 %v88, 4294901760
  %v258 = vsub.f32 %v88, %v257
  %v259 = vand.u32 %v258, 4294901760
  %v260 = vsub.f32 %v258, %v259
  %v261 = vand.u32 %v260, 4294901760
  %262 = vmatmul.mubr.f32.gmra.mrb[0].mxu0 %v261
  %v263 = vpop.f32.mrb[0].mxu0
  %v264 = vadd.f32 0.0, %v263
  %v265 = vpop.f32.mrb[0].mxu0
  %266 = vmatprep.mubr.f32.mxu0 0.0
  %v267 = vand.u32 %v91, 4294901760
  %v268 = vsub.f32 %v91, %v267
  %v269 = vand.u32 %v268, 4294901760
  %v270 = vsub.f32 %v268, %v269
  %v271 = vand.u32 %v270, 4294901760
  %272 = vmatmul.mubr.f32.gmra.mrb[0].mxu0 %v271
  %v273 = vpop.f32.mrb[0].mxu0
  %v274 = vadd.f32 0.0, %v273
  %v275 = vpop.f32.mrb[0].mxu0
  %276 = vmatprep.mubr.f32.mxu0 0.0
  %v277 = vand.u32 %v94, 4294901760
  %v278 = vsub.f32 %v94, %v277
  %v279 = vand.u32 %v278, 4294901760
  %v280 = vsub.f32 %v278, %v279
  %v281 = vand.u32 %v280, 4294901760
  %282 = vmatmul.mubr.f32.gmra.mrb[0].mxu0 %v281
  %v283 = vpop.f32.mrb[0].mxu0
  %v284 = vadd.f32 0.0, %v283
  %v285 = vpop.f32.mrb[0].mxu0
  %286 = vmatprep.mubr.f32.mxu0 0.0
  %v287 = vand.u32 %v97, 4294901760
  %v288 = vsub.f32 %v97, %v287
  %v289 = vand.u32 %v288, 4294901760
  %v290 = vsub.f32 %v288, %v289
  %v291 = vand.u32 %v290, 4294901760
  %292 = vmatmul.mubr.f32.gmra.mrb[0].mxu0 %v291
  %v293 = vpop.f32.mrb[0].mxu0
  %v294 = vadd.f32 0.0, %v293
  %v295 = vpop.f32.mrb[0].mxu0
  %296 = vmatprep.mubr.f32.mxu0 0.0
  %v297 = vand.u32 %v100, 4294901760
  %v298 = vsub.f32 %v100, %v297
  %v299 = vand.u32 %v298, 4294901760
  %v300 = vsub.f32 %v298, %v299
  %v301 = vand.u32 %v300, 4294901760
  %302 = vmatmul.mubr.f32.gmra.mrb[0].mxu0 %v301
  %v303 = vpop.f32.mrb[0].mxu0
  %v304 = vadd.f32 0.0, %v303
  %v305 = vpop.f32.mrb[0].mxu0
  %306 = vmatprep.mubr.f32.mxu0 0.0
  %v307 = vand.u32 %v103, 4294901760
  %v308 = vsub.f32 %v103, %v307
  %v309 = vand.u32 %v308, 4294901760
  %v310 = vsub.f32 %v308, %v309
  %v311 = vand.u32 %v310, 4294901760
  %312 = vmatmul.mubr.f32.gmra.mrb[0].mxu0 %v311
  %v313 = vpop.f32.mrb[0].mxu0
  %v314 = vadd.f32 0.0, %v313
  %v315 = vpop.f32.mrb[0].mxu0
  %316 = vmatprep.mubr.f32.mxu0 0.0
  %v317 = vand.u32 %v106, 4294901760
  %v318 = vsub.f32 %v106, %v317
  %v319 = vand.u32 %v318, 4294901760
  %v320 = vsub.f32 %v318, %v319
  %v321 = vand.u32 %v320, 4294901760
  %322 = vmatmul.mubr.f32.gmra.mrb[0].mxu0 %v321
  %v323 = vpop.f32.mrb[0].mxu0
  %v324 = vadd.f32 0.0, %v323
  %v325 = vpop.f32.mrb[0].mxu0
  %326 = vmatprep.mubr.f32.mxu0 0.0
  %v327 = vand.u32 %v109, 4294901760
  %v328 = vsub.f32 %v109, %v327
  %v329 = vand.u32 %v328, 4294901760
  %v330 = vsub.f32 %v328, %v329
  %v331 = vand.u32 %v330, 4294901760
  %332 = vmatmul.mubr.f32.gmra.mrb[0].mxu0 %v331
  %v333 = vpop.f32.mrb[0].mxu0
  %v334 = vadd.f32 0.0, %v333
  %v335 = vpop.f32.mrb[0].mxu0
  %336 = vdwg.mxu0
  %337 = vmatprep.subr.mxu0 0.0
  %v338 = vand.u32 %v11, 4294901760
  %v339 = vsub.f32 %v11, %v338
  %v340 = vand.u32 %v339, 4294901760
  %v341 = vsub.f32 %v339, %v340
  %v342 = vand.u32 %v341, 4294901760
  %343 = vmatpush1.msra.mxu0 %v342
  %344 = vmatprep.subr.mxu0 0.0
  %345 = vmatpush1.msra.mxu0 0.0
  %346 = vmatprep.subr.mxu0 0.0
  %347 = vmatpush1.msra.mxu0 0.0
  %348 = vmatprep.subr.mxu0 0.0
  %349 = vmatpush1.msra.mxu0 0.0
  %350 = vmatprep.subr.mxu0 0.0
  %351 = vmatpush1.msra.mxu0 0.0
  %352 = vmatprep.subr.mxu0 0.0
  %353 = vmatpush1.msra.mxu0 0.0
  %354 = vmatprep.subr.mxu0 0.0
  %355 = vmatpush1.msra.mxu0 0.0
  %356 = vmatprep.subr.mxu0 0.0
  %357 = vmatpush1.msra.mxu0 0.0
  %358 = vmatprep.subr.mxu0 0.0
  %359 = vmatpush1.msra.mxu0 0.0
  %360 = vmatprep.subr.mxu0 0.0
  %361 = vmatpush1.msra.mxu0 0.0
  %362 = vmatprep.subr.mxu0 0.0
  %363 = vmatpush1.msra.mxu0 0.0
  %364 = vmatprep.subr.mxu0 0.0
  %365 = vmatpush1.msra.mxu0 0.0
  %366 = vmatprep.subr.mxu0 0.0
  %367 = vmatpush1.msra.mxu0 0.0
  %368 = vmatprep.subr.mxu0 0.0
  %369 = vmatpush1.msra.mxu0 0.0
  %370 = vmatprep.subr.mxu0 0.0
  %371 = vmatpush1.msra.mxu0 0.0
  %372 = vmatprep.subr.mxu0 0.0
  %373 = vmatpush1.msra.mxu0 0.0
  %374 = vmatprep.subr.mxu0 0.0
  %375 = vmatpush1.msra.mxu0 0.0
  %376 = vmatprep.subr.mxu0 0.0
  %377 = vmatpush1.msra.mxu0 0.0
  %378 = vmatprep.subr.mxu0 0.0
  %379 = vmatpush1.msra.mxu0 0.0
  %380 = vmatprep.subr.mxu0 0.0
  %381 = vmatpush1.msra.mxu0 0.0
  %382 = vmatprep.subr.mxu0 0.0
  %383 = vmatpush1.msra.mxu0 0.0
  %384 = vmatprep.subr.mxu0 0.0
  %385 = vmatpush1.msra.mxu0 0.0
  %386 = vmatprep.subr.mxu0 0.0
  %387 = vmatpush1.msra.mxu0 0.0
  %388 = vmatprep.subr.mxu0 0.0
  %389 = vmatpush1.msra.mxu0 0.0
  %390 = vmatprep.subr.mxu0 0.0
  %391 = vmatpush1.msra.mxu0 0.0
  %392 = vmatprep.subr.mxu0 0.0
  %393 = vmatpush1.msra.mxu0 0.0
  %394 = vmatprep.subr.mxu0 0.0
  %395 = vmatpush1.msra.mxu0 0.0
  %396 = vmatprep.subr.mxu0 0.0
  %397 = vmatpush1.msra.mxu0 0.0
  %398 = vmatprep.subr.mxu0 0.0
  %399 = vmatpush1.msra.mxu0 0.0
  %400 = vmatprep.subr.mxu0 0.0
  %401 = vmatpush1.msra.mxu0 0.0
  %402 = vmatprep.subr.mxu0 0.0
  %403 = vmatpush1.msra.mxu0 0.0
  %404 = vmatprep.subr.mxu0 0.0
  %405 = vmatpush1.msra.mxu0 0.0
  %406 = vmatprep.mubr.f32.mxu0 0.0
  %v407 = vand.u32 %v64, 4294901760
  %408 = vmatmul.mubr.f32.gmra.mrb[0].mxu0 %v407
  %v409 = vpop.f32.mrb[0].mxu0
  %v410 = vadd.f32 %v184, %v409
  %v411 = vpop.f32.mrb[0].mxu0
  %412 = vmatprep.mubr.f32.mxu0 0.0
  %v413 = vand.u32 %v67, 4294901760
  %414 = vmatmul.mubr.f32.gmra.mrb[0].mxu0 %v413
  %v415 = vpop.f32.mrb[0].mxu0
  %v416 = vadd.f32 %v194, %v415
  %v417 = vpop.f32.mrb[0].mxu0
  %418 = vmatprep.mubr.f32.mxu0 0.0
  %v419 = vand.u32 %v70, 4294901760
  %420 = vmatmul.mubr.f32.gmra.mrb[0].mxu0 %v419
  %v421 = vpop.f32.mrb[0].mxu0
  %v422 = vadd.f32 %v204, %v421
  %v423 = vpop.f32.mrb[0].mxu0
  %424 = vmatprep.mubr.f32.mxu0 0.0
  %v425 = vand.u32 %v73, 4294901760
  %426 = vmatmul.mubr.f32.gmra.mrb[0].mxu0 %v425
  %v427 = vpop.f32.mrb[0].mxu0
  %v428 = vadd.f32 %v214, %v427
  %v429 = vpop.f32.mrb[0].mxu0
  %430 = vmatprep.mubr.f32.mxu0 0.0
  %v431 = vand.u32 %v76, 4294901760
  %432 = vmatmul.mubr.f32.gmra.mrb[0].mxu0 %v431
  %v433 = vpop.f32.mrb[0].mxu0
  %v434 = vadd.f32 %v224, %v433
  %v435 = vpop.f32.mrb[0].mxu0
  %436 = vmatprep.mubr.f32.mxu0 0.0
  %v437 = vand.u32 %v79, 4294901760
  %438 = vmatmul.mubr.f32.gmra.mrb[0].mxu0 %v437
  %v439 = vpop.f32.mrb[0].mxu0
  %v440 = vadd.f32 %v234, %v439
  %v441 = vpop.f32.mrb[0].mxu0
  %442 = vmatprep.mubr.f32.mxu0 0.0
  %v443 = vand.u32 %v82, 4294901760
  %444 = vmatmul.mubr.f32.gmra.mrb[0].mxu0 %v443
  %v445 = vpop.f32.mrb[0].mxu0
  %v446 = vadd.f32 %v244, %v445
  %v447 = vpop.f32.mrb[0].mxu0
  %448 = vmatprep.mubr.f32.mxu0 0.0
  %v449 = vand.u32 %v85, 4294901760
  %450 = vmatmul.mubr.f32.gmra.mrb[0].mxu0 %v449
  %v451 = vpop.f32.mrb[0].mxu0
  %v452 = vadd.f32 %v254, %v451
  %v453 = vpop.f32.mrb[0].mxu0
  %454 = vmatprep.mubr.f32.mxu0 0.0
  %v455 = vand.u32 %v88, 4294901760
  %456 = vmatmul.mubr.f32.gmra.mrb[0].mxu0 %v455
  %v457 = vpop.f32.mrb[0].mxu0
  %v458 = vadd.f32 %v264, %v457
  %v459 = vpop.f32.mrb[0].mxu0
  %460 = vmatprep.mubr.f32.mxu0 0.0
  %v461 = vand.u32 %v91, 4294901760
  %462 = vmatmul.mubr.f32.gmra.mrb[0].mxu0 %v461
  %v463 = vpop.f32.mrb[0].mxu0
  %v464 = vadd.f32 %v274, %v463
  %v465 = vpop.f32.mrb[0].mxu0
  %466 = vmatprep.mubr.f32.mxu0 0.0
  %v467 = vand.u32 %v94, 4294901760
  %468 = vmatmul.mubr.f32.gmra.mrb[0].mxu0 %v467
  %v469 = vpop.f32.mrb[0].mxu0
  %v470 = vadd.f32 %v284, %v469
  %v471 = vpop.f32.mrb[0].mxu0
  %472 = vmatprep.mubr.f32.mxu0 0.0
  %v473 = vand.u32 %v97, 4294901760
  %474 = vmatmul.mubr.f32.gmra.mrb[0].mxu0 %v473
  %v475 = vpop.f32.mrb[0].mxu0
  %v476 = vadd.f32 %v294, %v475
  %v477 = vpop.f32.mrb[0].mxu0
  %478 = vmatprep.mubr.f32.mxu0 0.0
  %v479 = vand.u32 %v100, 4294901760
  %480 = vmatmul.mubr.f32.gmra.mrb[0].mxu0 %v479
  %v481 = vpop.f32.mrb[0].mxu0
  %v482 = vadd.f32 %v304, %v481
  %v483 = vpop.f32.mrb[0].mxu0
  %484 = vmatprep.mubr.f32.mxu0 0.0
  %v485 = vand.u32 %v103, 4294901760
  %486 = vmatmul.mubr.f32.gmra.mrb[0].mxu0 %v485
  %v487 = vpop.f32.mrb[0].mxu0
  %v488 = vadd.f32 %v314, %v487
  %v489 = vpop.f32.mrb[0].mxu0
  %490 = vmatprep.mubr.f32.mxu0 0.0
  %v491 = vand.u32 %v106, 4294901760
  %492 = vmatmul.mubr.f32.gmra.mrb[0].mxu0 %v491
  %v493 = vpop.f32.mrb[0].mxu0
  %v494 = vadd.f32 %v324, %v493
  %v495 = vpop.f32.mrb[0].mxu0
  %496 = vmatprep.mubr.f32.mxu0 0.0
  %v497 = vand.u32 %v109, 4294901760
  %498 = vmatmul.mubr.f32.gmra.mrb[0].mxu0 %v497
  %v499 = vpop.f32.mrb[0].mxu0
  %v500 = vadd.f32 %v334, %v499
  %v501 = vpop.f32.mrb[0].mxu0
  %502 = vdwg.mxu0
  %503 = vmatprep.subr.mxu0 0.0
  %v504 = vand.u32 %v11, 4294901760
  %v505 = vsub.f32 %v11, %v504
  %506 = vmatpush1.msra.mxu0 %v505
  %507 = vmatprep.subr.mxu0 0.0
  %508 = vmatpush1.msra.mxu0 0.0
  %509 = vmatprep.subr.mxu0 0.0
  %510 = vmatpush1.msra.mxu0 0.0
  %511 = vmatprep.subr.mxu0 0.0
  %512 = vmatpush1.msra.mxu0 0.0
  %513 = vmatprep.subr.mxu0 0.0
  %514 = vmatpush1.msra.mxu0 0.0
  %515 = vmatprep.subr.mxu0 0.0
  %516 = vmatpush1.msra.mxu0 0.0
  %517 = vmatprep.subr.mxu0 0.0
  %518 = vmatpush1.msra.mxu0 0.0
  %519 = vmatprep.subr.mxu0 0.0
  %520 = vmatpush1.msra.mxu0 0.0
  %521 = vmatprep.subr.mxu0 0.0
  %522 = vmatpush1.msra.mxu0 0.0
  %523 = vmatprep.subr.mxu0 0.0
  %524 = vmatpush1.msra.mxu0 0.0
  %525 = vmatprep.subr.mxu0 0.0
  %526 = vmatpush1.msra.mxu0 0.0
  %527 = vmatprep.subr.mxu0 0.0
  %528 = vmatpush1.msra.mxu0 0.0
  %529 = vmatprep.subr.mxu0 0.0
  %530 = vmatpush1.msra.mxu0 0.0
  %531 = vmatprep.subr.mxu0 0.0
  %532 = vmatpush1.msra.mxu0 0.0
  %533 = vmatprep.subr.mxu0 0.0
  %534 = vmatpush1.msra.mxu0 0.0
  %535 = vmatprep.subr.mxu0 0.0
  %536 = vmatpush1.msra.mxu0 0.0
  %537 = vmatprep.subr.mxu0 0.0
  %538 = vmatpush1.msra.mxu0 0.0
  %539 = vmatprep.subr.mxu0 0.0
  %540 = vmatpush1.msra.mxu0 0.0
  %541 = vmatprep.subr.mxu0 0.0
  %542 = vmatpush1.msra.mxu0 0.0
  %543 = vmatprep.subr.mxu0 0.0
  %544 = vmatpush1.msra.mxu0 0.0
  %545 = vmatprep.subr.mxu0 0.0
  %546 = vmatpush1.msra.mxu0 0.0
  %547 = vmatprep.subr.mxu0 0.0
  %548 = vmatpush1.msra.mxu0 0.0
  %549 = vmatprep.subr.mxu0 0.0
  %550 = vmatpush1.msra.mxu0 0.0
  %551 = vmatprep.subr.mxu0 0.0
  %552 = vmatpush1.msra.mxu0 0.0
  %553 = vmatprep.subr.mxu0 0.0
  %554 = vmatpush1.msra.mxu0 0.0
  %555 = vmatprep.subr.mxu0 0.0
  %556 = vmatpush1.msra.mxu0 0.0
  %557 = vmatprep.subr.mxu0 0.0
  %558 = vmatpush1.msra.mxu0 0.0
  %559 = vmatprep.subr.mxu0 0.0
  %560 = vmatpush1.msra.mxu0 0.0
  %561 = vmatprep.subr.mxu0 0.0
  %562 = vmatpush1.msra.mxu0 0.0
  %563 = vmatprep.subr.mxu0 0.0
  %564 = vmatpush1.msra.mxu0 0.0
  %565 = vmatprep.subr.mxu0 0.0
  %566 = vmatpush1.msra.mxu0 0.0
  %567 = vmatprep.subr.mxu0 0.0
  %568 = vmatpush1.msra.mxu0 0.0
  %569 = vmatprep.mubr.f32.mxu0 0.0
  %v570 = vand.u32 %v64, 4294901760
  %v571 = vsub.f32 %v64, %v570
  %572 = vmatmul.mubr.f32.gmra.mrb[0].mxu0 %v571
  %v573 = vpop.f32.mrb[0].mxu0
  %v574 = vadd.f32 %v410, %v573
  %v575 = vpop.f32.mrb[0].mxu0
  %576 = vmatprep.mubr.f32.mxu0 0.0
  %v577 = vand.u32 %v67, 4294901760
  %v578 = vsub.f32 %v67, %v577
  %579 = vmatmul.mubr.f32.gmra.mrb[0].mxu0 %v578
  %v580 = vpop.f32.mrb[0].mxu0
  %v581 = vadd.f32 %v416, %v580
  %v582 = vpop.f32.mrb[0].mxu0
  %583 = vmatprep.mubr.f32.mxu0 0.0
  %v584 = vand.u32 %v70, 4294901760
  %v585 = vsub.f32 %v70, %v584
  %586 = vmatmul.mubr.f32.gmra.mrb[0].mxu0 %v585
  %v587 = vpop.f32.mrb[0].mxu0
  %v588 = vadd.f32 %v422, %v587
  %v589 = vpop.f32.mrb[0].mxu0
  %590 = vmatprep.mubr.f32.mxu0 0.0
  %v591 = vand.u32 %v73, 4294901760
  %v592 = vsub.f32 %v73, %v591
  %593 = vmatmul.mubr.f32.gmra.mrb[0].mxu0 %v592
  %v594 = vpop.f32.mrb[0].mxu0
  %v595 = vadd.f32 %v428, %v594
  %v596 = vpop.f32.mrb[0].mxu0
  %597 = vmatprep.mubr.f32.mxu0 0.0
  %v598 = vand.u32 %v76, 4294901760
  %v599 = vsub.f32 %v76, %v598
  %600 = vmatmul.mubr.f32.gmra.mrb[0].mxu0 %v599
  %v601 = vpop.f32.mrb[0].mxu0
  %v602 = vadd.f32 %v434, %v601
  %v603 = vpop.f32.mrb[0].mxu0
  %604 = vmatprep.mubr.f32.mxu0 0.0
  %v605 = vand.u32 %v79, 4294901760
  %v606 = vsub.f32 %v79, %v605
  %607 = vmatmul.mubr.f32.gmra.mrb[0].mxu0 %v606
  %v608 = vpop.f32.mrb[0].mxu0
  %v609 = vadd.f32 %v440, %v608
  %v610 = vpop.f32.mrb[0].mxu0
  %611 = vmatprep.mubr.f32.mxu0 0.0
  %v612 = vand.u32 %v82, 4294901760
  %v613 = vsub.f32 %v82, %v612
  %614 = vmatmul.mubr.f32.gmra.mrb[0].mxu0 %v613
  %v615 = vpop.f32.mrb[0].mxu0
  %v616 = vadd.f32 %v446, %v615
  %v617 = vpop.f32.mrb[0].mxu0
  %618 = vmatprep.mubr.f32.mxu0 0.0
  %v619 = vand.u32 %v85, 4294901760
  %v620 = vsub.f32 %v85, %v619
  %621 = vmatmul.mubr.f32.gmra.mrb[0].mxu0 %v620
  %v622 = vpop.f32.mrb[0].mxu0
  %v623 = vadd.f32 %v452, %v622
  %v624 = vpop.f32.mrb[0].mxu0
  %625 = vmatprep.mubr.f32.mxu0 0.0
  %v626 = vand.u32 %v88, 4294901760
  %v627 = vsub.f32 %v88, %v626
  %628 = vmatmul.mubr.f32.gmra.mrb[0].mxu0 %v627
  %v629 = vpop.f32.mrb[0].mxu0
  %v630 = vadd.f32 %v458, %v629
  %v631 = vpop.f32.mrb[0].mxu0
  %632 = vmatprep.mubr.f32.mxu0 0.0
  %v633 = vand.u32 %v91, 4294901760
  %v634 = vsub.f32 %v91, %v633
  %635 = vmatmul.mubr.f32.gmra.mrb[0].mxu0 %v634
  %v636 = vpop.f32.mrb[0].mxu0
  %v637 = vadd.f32 %v464, %v636
  %v638 = vpop.f32.mrb[0].mxu0
  %639 = vmatprep.mubr.f32.mxu0 0.0
  %v640 = vand.u32 %v94, 4294901760
  %v641 = vsub.f32 %v94, %v640
  %642 = vmatmul.mubr.f32.gmra.mrb[0].mxu0 %v641
  %v643 = vpop.f32.mrb[0].mxu0
  %v644 = vadd.f32 %v470, %v643
  %v645 = vpop.f32.mrb[0].mxu0
  %646 = vmatprep.mubr.f32.mxu0 0.0
  %v647 = vand.u32 %v97, 4294901760
  %v648 = vsub.f32 %v97, %v647
  %649 = vmatmul.mubr.f32.gmra.mrb[0].mxu0 %v648
  %v650 = vpop.f32.mrb[0].mxu0
  %v651 = vadd.f32 %v476, %v650
  %v652 = vpop.f32.mrb[0].mxu0
  %653 = vmatprep.mubr.f32.mxu0 0.0
  %v654 = vand.u32 %v100, 4294901760
  %v655 = vsub.f32 %v100, %v654
  %656 = vmatmul.mubr.f32.gmra.mrb[0].mxu0 %v655
  %v657 = vpop.f32.mrb[0].mxu0
  %v658 = vadd.f32 %v482, %v657
  %v659 = vpop.f32.mrb[0].mxu0
  %660 = vmatprep.mubr.f32.mxu0 0.0
  %v661 = vand.u32 %v103, 4294901760
  %v662 = vsub.f32 %v103, %v661
  %663 = vmatmul.mubr.f32.gmra.mrb[0].mxu0 %v662
  %v664 = vpop.f32.mrb[0].mxu0
  %v665 = vadd.f32 %v488, %v664
  %v666 = vpop.f32.mrb[0].mxu0
  %667 = vmatprep.mubr.f32.mxu0 0.0
  %v668 = vand.u32 %v106, 4294901760
  %v669 = vsub.f32 %v106, %v668
  %670 = vmatmul.mubr.f32.gmra.mrb[0].mxu0 %v669
  %v671 = vpop.f32.mrb[0].mxu0
  %v672 = vadd.f32 %v494, %v671
  %v673 = vpop.f32.mrb[0].mxu0
  %674 = vmatprep.mubr.f32.mxu0 0.0
  %v675 = vand.u32 %v109, 4294901760
  %v676 = vsub.f32 %v109, %v675
  %677 = vmatmul.mubr.f32.gmra.mrb[0].mxu0 %v676
  %v678 = vpop.f32.mrb[0].mxu0
  %v679 = vadd.f32 %v500, %v678
  %v680 = vpop.f32.mrb[0].mxu0
  %681 = vdwg.mxu0
  %682 = vmatprep.subr.mxu0 0.0
  %v683 = vand.u32 %v11, 4294901760
  %684 = vmatpush1.msra.mxu0 %v683
  %685 = vmatprep.subr.mxu0 0.0
  %686 = vmatpush1.msra.mxu0 0.0
  %687 = vmatprep.subr.mxu0 0.0
  %688 = vmatpush1.msra.mxu0 0.0
  %689 = vmatprep.subr.mxu0 0.0
  %690 = vmatpush1.msra.mxu0 0.0
  %691 = vmatprep.subr.mxu0 0.0
  %692 = vmatpush1.msra.mxu0 0.0
  %693 = vmatprep.subr.mxu0 0.0
  %694 = vmatpush1.msra.mxu0 0.0
  %695 = vmatprep.subr.mxu0 0.0
  %696 = vmatpush1.msra.mxu0 0.0
  %697 = vmatprep.subr.mxu0 0.0
  %698 = vmatpush1.msra.mxu0 0.0
  %699 = vmatprep.subr.mxu0 0.0
  %700 = vmatpush1.msra.mxu0 0.0
  %701 = vmatprep.subr.mxu0 0.0
  %702 = vmatpush1.msra.mxu0 0.0
  %703 = vmatprep.subr.mxu0 0.0
  %704 = vmatpush1.msra.mxu0 0.0
  %705 = vmatprep.subr.mxu0 0.0
  %706 = vmatpush1.msra.mxu0 0.0
  %707 = vmatprep.subr.mxu0 0.0
  %708 = vmatpush1.msra.mxu0 0.0
  %709 = vmatprep.subr.mxu0 0.0
  %710 = vmatpush1.msra.mxu0 0.0
  %711 = vmatprep.subr.mxu0 0.0
  %712 = vmatpush1.msra.mxu0 0.0
  %713 = vmatprep.subr.mxu0 0.0
  %714 = vmatpush1.msra.mxu0 0.0
  %715 = vmatprep.subr.mxu0 0.0
  %716 = vmatpush1.msra.mxu0 0.0
  %717 = vmatprep.subr.mxu0 0.0
  %718 = vmatpush1.msra.mxu0 0.0
  %719 = vmatprep.subr.mxu0 0.0
  %720 = vmatpush1.msra.mxu0 0.0
  %721 = vmatprep.subr.mxu0 0.0
  %722 = vmatpush1.msra.mxu0 0.0
  %723 = vmatprep.subr.mxu0 0.0
  %724 = vmatpush1.msra.mxu0 0.0
  %725 = vmatprep.subr.mxu0 0.0
  %726 = vmatpush1.msra.mxu0 0.0
  %727 = vmatprep.subr.mxu0 0.0
  %728 = vmatpush1.msra.mxu0 0.0
  %729 = vmatprep.subr.mxu0 0.0
  %730 = vmatpush1.msra.mxu0 0.0
  %731 = vmatprep.subr.mxu0 0.0
  %732 = vmatpush1.msra.mxu0 0.0
  %733 = vmatprep.subr.mxu0 0.0
  %734 = vmatpush1.msra.mxu0 0.0
  %735 = vmatprep.subr.mxu0 0.0
  %736 = vmatpush1.msra.mxu0 0.0
  %737 = vmatprep.subr.mxu0 0.0
  %738 = vmatpush1.msra.mxu0 0.0
  %739 = vmatprep.subr.mxu0 0.0
  %740 = vmatpush1.msra.mxu0 0.0
  %741 = vmatprep.subr.mxu0 0.0
  %742 = vmatpush1.msra.mxu0 0.0
  %743 = vmatprep.subr.mxu0 0.0
  %744 = vmatpush1.msra.mxu0 0.0
  %745 = vmatprep.subr.mxu0 0.0
  %746 = vmatpush1.msra.mxu0 0.0
  %747 = vmatprep.mubr.f32.mxu0 0.0
  %v748 = vand.u32 %v64, 4294901760
  %v749 = vsub.f32 %v64, %v748
  %v750 = vand.u32 %v749, 4294901760
  %751 = vmatmul.mubr.f32.gmra.mrb[0].mxu0 %v750
  %v752 = vpop.f32.mrb[0].mxu0
  %v753 = vadd.f32 %v574, %v752
  %v754 = vpop.f32.mrb[0].mxu0
  %755 = vmatprep.mubr.f32.mxu0 0.0
  %v756 = vand.u32 %v67, 4294901760
  %v757 = vsub.f32 %v67, %v756
  %v758 = vand.u32 %v757, 4294901760
  %759 = vmatmul.mubr.f32.gmra.mrb[0].mxu0 %v758
  %v760 = vpop.f32.mrb[0].mxu0
  %v761 = vadd.f32 %v581, %v760
  %v762 = vpop.f32.mrb[0].mxu0
  %763 = vmatprep.mubr.f32.mxu0 0.0
  %v764 = vand.u32 %v70, 4294901760
  %v765 = vsub.f32 %v70, %v764
  %v766 = vand.u32 %v765, 4294901760
  %767 = vmatmul.mubr.f32.gmra.mrb[0].mxu0 %v766
  %v768 = vpop.f32.mrb[0].mxu0
  %v769 = vadd.f32 %v588, %v768
  %v770 = vpop.f32.mrb[0].mxu0
  %771 = vmatprep.mubr.f32.mxu0 0.0
  %v772 = vand.u32 %v73, 4294901760
  %v773 = vsub.f32 %v73, %v772
  %v774 = vand.u32 %v773, 4294901760
  %775 = vmatmul.mubr.f32.gmra.mrb[0].mxu0 %v774
  %v776 = vpop.f32.mrb[0].mxu0
  %v777 = vadd.f32 %v595, %v776
  %v778 = vpop.f32.mrb[0].mxu0
  %779 = vmatprep.mubr.f32.mxu0 0.0
  %v780 = vand.u32 %v76, 4294901760
  %v781 = vsub.f32 %v76, %v780
  %v782 = vand.u32 %v781, 4294901760
  %783 = vmatmul.mubr.f32.gmra.mrb[0].mxu0 %v782
  %v784 = vpop.f32.mrb[0].mxu0
  %v785 = vadd.f32 %v602, %v784
  %v786 = vpop.f32.mrb[0].mxu0
  %787 = vmatprep.mubr.f32.mxu0 0.0
  %v788 = vand.u32 %v79, 4294901760
  %v789 = vsub.f32 %v79, %v788
  %v790 = vand.u32 %v789, 4294901760
  %791 = vmatmul.mubr.f32.gmra.mrb[0].mxu0 %v790
  %v792 = vpop.f32.mrb[0].mxu0
  %v793 = vadd.f32 %v609, %v792
  %v794 = vpop.f32.mrb[0].mxu0
  %795 = vmatprep.mubr.f32.mxu0 0.0
  %v796 = vand.u32 %v82, 4294901760
  %v797 = vsub.f32 %v82, %v796
  %v798 = vand.u32 %v797, 4294901760
  %799 = vmatmul.mubr.f32.gmra.mrb[0].mxu0 %v798
  %v800 = vpop.f32.mrb[0].mxu0
  %v801 = vadd.f32 %v616, %v800
  %v802 = vpop.f32.mrb[0].mxu0
  %803 = vmatprep.mubr.f32.mxu0 0.0
  %v804 = vand.u32 %v85, 4294901760
  %v805 = vsub.f32 %v85, %v804
  %v806 = vand.u32 %v805, 4294901760
  %807 = vmatmul.mubr.f32.gmra.mrb[0].mxu0 %v806
  %v808 = vpop.f32.mrb[0].mxu0
  %v809 = vadd.f32 %v623, %v808
  %v810 = vpop.f32.mrb[0].mxu0
  %811 = vmatprep.mubr.f32.mxu0 0.0
  %v812 = vand.u32 %v88, 4294901760
  %v813 = vsub.f32 %v88, %v812
  %v814 = vand.u32 %v813, 4294901760
  %815 = vmatmul.mubr.f32.gmra.mrb[0].mxu0 %v814
  %v816 = vpop.f32.mrb[0].mxu0
  %v817 = vadd.f32 %v630, %v816
  %v818 = vpop.f32.mrb[0].mxu0
  %819 = vmatprep.mubr.f32.mxu0 0.0
  %v820 = vand.u32 %v91, 4294901760
  %v821 = vsub.f32 %v91, %v820
  %v822 = vand.u32 %v821, 4294901760
  %823 = vmatmul.mubr.f32.gmra.mrb[0].mxu0 %v822
  %v824 = vpop.f32.mrb[0].mxu0
  %v825 = vadd.f32 %v637, %v824
  %v826 = vpop.f32.mrb[0].mxu0
  %827 = vmatprep.mubr.f32.mxu0 0.0
  %v828 = vand.u32 %v94, 4294901760
  %v829 = vsub.f32 %v94, %v828
  %v830 = vand.u32 %v829, 4294901760
  %831 = vmatmul.mubr.f32.gmra.mrb[0].mxu0 %v830
  %v832 = vpop.f32.mrb[0].mxu0
  %v833 = vadd.f32 %v644, %v832
  %v834 = vpop.f32.mrb[0].mxu0
  %835 = vmatprep.mubr.f32.mxu0 0.0
  %v836 = vand.u32 %v97, 4294901760
  %v837 = vsub.f32 %v97, %v836
  %v838 = vand.u32 %v837, 4294901760
  %839 = vmatmul.mubr.f32.gmra.mrb[0].mxu0 %v838
  %v840 = vpop.f32.mrb[0].mxu0
  %v841 = vadd.f32 %v651, %v840
  %v842 = vpop.f32.mrb[0].mxu0
  %843 = vmatprep.mubr.f32.mxu0 0.0
  %v844 = vand.u32 %v100, 4294901760
  %v845 = vsub.f32 %v100, %v844
  %v846 = vand.u32 %v845, 4294901760
  %847 = vmatmul.mubr.f32.gmra.mrb[0].mxu0 %v846
  %v848 = vpop.f32.mrb[0].mxu0
  %v849 = vadd.f32 %v658, %v848
  %v850 = vpop.f32.mrb[0].mxu0
  %851 = vmatprep.mubr.f32.mxu0 0.0
  %v852 = vand.u32 %v103, 4294901760
  %v853 = vsub.f32 %v103, %v852
  %v854 = vand.u32 %v853, 4294901760
  %855 = vmatmul.mubr.f32.gmra.mrb[0].mxu0 %v854
  %v856 = vpop.f32.mrb[0].mxu0
  %v857 = vadd.f32 %v665, %v856
  %v858 = vpop.f32.mrb[0].mxu0
  %859 = vmatprep.mubr.f32.mxu0 0.0
  %v860 = vand.u32 %v106, 4294901760
  %v861 = vsub.f32 %v106, %v860
  %v862 = vand.u32 %v861, 4294901760
  %863 = vmatmul.mubr.f32.gmra.mrb[0].mxu0 %v862
  %v864 = vpop.f32.mrb[0].mxu0
  %v865 = vadd.f32 %v672, %v864
  %v866 = vpop.f32.mrb[0].mxu0
  %867 = vmatprep.mubr.f32.mxu0 0.0
  %v868 = vand.u32 %v109, 4294901760
  %v869 = vsub.f32 %v109, %v868
  %v870 = vand.u32 %v869, 4294901760
  %871 = vmatmul.mubr.f32.gmra.mrb[0].mxu0 %v870
  %v872 = vpop.f32.mrb[0].mxu0
  %v873 = vadd.f32 %v679, %v872
  %v874 = vpop.f32.mrb[0].mxu0
  %875 = vdwg.mxu0
  %876 = vmatprep.subr.mxu0 0.0
  %v877 = vand.u32 %v11, 4294901760
  %v878 = vsub.f32 %v11, %v877
  %v879 = vand.u32 %v878, 4294901760
  %880 = vmatpush1.msra.mxu0 %v879
  %881 = vmatprep.subr.mxu0 0.0
  %882 = vmatpush1.msra.mxu0 0.0
  %883 = vmatprep.subr.mxu0 0.0
  %884 = vmatpush1.msra.mxu0 0.0
  %885 = vmatprep.subr.mxu0 0.0
  %886 = vmatpush1.msra.mxu0 0.0
  %887 = vmatprep.subr.mxu0 0.0
  %888 = vmatpush1.msra.mxu0 0.0
  %889 = vmatprep.subr.mxu0 0.0
  %890 = vmatpush1.msra.mxu0 0.0
  %891 = vmatprep.subr.mxu0 0.0
  %892 = vmatpush1.msra.mxu0 0.0
  %893 = vmatprep.subr.mxu0 0.0
  %894 = vmatpush1.msra.mxu0 0.0
  %895 = vmatprep.subr.mxu0 0.0
  %896 = vmatpush1.msra.mxu0 0.0
  %897 = vmatprep.subr.mxu0 0.0
  %898 = vmatpush1.msra.mxu0 0.0
  %899 = vmatprep.subr.mxu0 0.0
  %900 = vmatpush1.msra.mxu0 0.0
  %901 = vmatprep.subr.mxu0 0.0
  %902 = vmatpush1.msra.mxu0 0.0
  %903 = vmatprep.subr.mxu0 0.0
  %904 = vmatpush1.msra.mxu0 0.0
  %905 = vmatprep.subr.mxu0 0.0
  %906 = vmatpush1.msra.mxu0 0.0
  %907 = vmatprep.subr.mxu0 0.0
  %908 = vmatpush1.msra.mxu0 0.0
  %909 = vmatprep.subr.mxu0 0.0
  %910 = vmatpush1.msra.mxu0 0.0
  %911 = vmatprep.subr.mxu0 0.0
  %912 = vmatpush1.msra.mxu0 0.0
  %913 = vmatprep.subr.mxu0 0.0
  %914 = vmatpush1.msra.mxu0 0.0
  %915 = vmatprep.subr.mxu0 0.0
  %916 = vmatpush1.msra.mxu0 0.0
  %917 = vmatprep.subr.mxu0 0.0
  %918 = vmatpush1.msra.mxu0 0.0
  %919 = vmatprep.subr.mxu0 0.0
  %920 = vmatpush1.msra.mxu0 0.0
  %921 = vmatprep.subr.mxu0 0.0
  %922 = vmatpush1.msra.mxu0 0.0
  %923 = vmatprep.subr.mxu0 0.0
  %924 = vmatpush1.msra.mxu0 0.0
  %925 = vmatprep.subr.mxu0 0.0
  %926 = vmatpush1.msra.mxu0 0.0
  %927 = vmatprep.subr.mxu0 0.0
  %928 = vmatpush1.msra.mxu0 0.0
  %929 = vmatprep.subr.mxu0 0.0
  %930 = vmatpush1.msra.mxu0 0.0
  %931 = vmatprep.subr.mxu0 0.0
  %932 = vmatpush1.msra.mxu0 0.0
  %933 = vmatprep.subr.mxu0 0.0
  %934 = vmatpush1.msra.mxu0 0.0
  %935 = vmatprep.subr.mxu0 0.0
  %936 = vmatpush1.msra.mxu0 0.0
  %937 = vmatprep.subr.mxu0 0.0
  %938 = vmatpush1.msra.mxu0 0.0
  %939 = vmatprep.subr.mxu0 0.0
  %940 = vmatpush1.msra.mxu0 0.0
  %941 = vmatprep.subr.mxu0 0.0
  %942 = vmatpush1.msra.mxu0 0.0
  %943 = vmatprep.mubr.f32.mxu0 0.0
  %v944 = vand.u32 %v64, 4294901760
  %945 = vmatmul.mubr.f32.gmra.mrb[0].mxu0 %v944
  %v946 = vpop.f32.mrb[0].mxu0
  %v947 = vadd.f32 %v753, %v946
  %v948 = vpop.f32.mrb[0].mxu0
  %949 = vmatprep.mubr.f32.mxu0 0.0
  %v950 = vand.u32 %v67, 4294901760
  %951 = vmatmul.mubr.f32.gmra.mrb[0].mxu0 %v950
  %v952 = vpop.f32.mrb[0].mxu0
  %v953 = vadd.f32 %v761, %v952
  %v954 = vpop.f32.mrb[0].mxu0
  %955 = vmatprep.mubr.f32.mxu0 0.0
  %v956 = vand.u32 %v70, 4294901760
  %957 = vmatmul.mubr.f32.gmra.mrb[0].mxu0 %v956
  %v958 = vpop.f32.mrb[0].mxu0
  %v959 = vadd.f32 %v769, %v958
  %v960 = vpop.f32.mrb[0].mxu0
  %961 = vmatprep.mubr.f32.mxu0 0.0
  %v962 = vand.u32 %v73, 4294901760
  %963 = vmatmul.mubr.f32.gmra.mrb[0].mxu0 %v962
  %v964 = vpop.f32.mrb[0].mxu0
  %v965 = vadd.f32 %v777, %v964
  %v966 = vpop.f32.mrb[0].mxu0
  %967 = vmatprep.mubr.f32.mxu0 0.0
  %v968 = vand.u32 %v76, 4294901760
  %969 = vmatmul.mubr.f32.gmra.mrb[0].mxu0 %v968
  %v970 = vpop.f32.mrb[0].mxu0
  %v971 = vadd.f32 %v785, %v970
  %v972 = vpop.f32.mrb[0].mxu0
  %973 = vmatprep.mubr.f32.mxu0 0.0
  %v974 = vand.u32 %v79, 4294901760
  %975 = vmatmul.mubr.f32.gmra.mrb[0].mxu0 %v974
  %v976 = vpop.f32.mrb[0].mxu0
  %v977 = vadd.f32 %v793, %v976
  %v978 = vpop.f32.mrb[0].mxu0
  %979 = vmatprep.mubr.f32.mxu0 0.0
  %v980 = vand.u32 %v82, 4294901760
  %981 = vmatmul.mubr.f32.gmra.mrb[0].mxu0 %v980
  %v982 = vpop.f32.mrb[0].mxu0
  %v983 = vadd.f32 %v801, %v982
  %v984 = vpop.f32.mrb[0].mxu0
  %985 = vmatprep.mubr.f32.mxu0 0.0
  %v986 = vand.u32 %v85, 4294901760
  %987 = vmatmul.mubr.f32.gmra.mrb[0].mxu0 %v986
  %v988 = vpop.f32.mrb[0].mxu0
  %v989 = vadd.f32 %v809, %v988
  %v990 = vpop.f32.mrb[0].mxu0
  %991 = vmatprep.mubr.f32.mxu0 0.0
  %v992 = vand.u32 %v88, 4294901760
  %993 = vmatmul.mubr.f32.gmra.mrb[0].mxu0 %v992
  %v994 = vpop.f32.mrb[0].mxu0
  %v995 = vadd.f32 %v817, %v994
  %v996 = vpop.f32.mrb[0].mxu0
  %997 = vmatprep.mubr.f32.mxu0 0.0
  %v998 = vand.u32 %v91, 4294901760
  %999 = vmatmul.mubr.f32.gmra.mrb[0].mxu0 %v998
  %v1000 = vpop.f32.mrb[0].mxu0
  %v1001 = vadd.f32 %v825, %v1000
  %v1002 = vpop.f32.mrb[0].mxu0
  %1003 = vmatprep.mubr.f32.mxu0 0.0
  %v1004 = vand.u32 %v94, 4294901760
  %1005 = vmatmul.mubr.f32.gmra.mrb[0].mxu0 %v1004
  %v1006 = vpop.f32.mrb[0].mxu0
  %v1007 = vadd.f32 %v833, %v1006
  %v1008 = vpop.f32.mrb[0].mxu0
  %1009 = vmatprep.mubr.f32.mxu0 0.0
  %v1010 = vand.u32 %v97, 4294901760
  %1011 = vmatmul.mubr.f32.gmra.mrb[0].mxu0 %v1010
  %v1012 = vpop.f32.mrb[0].mxu0
  %v1013 = vadd.f32 %v841, %v1012
  %v1014 = vpop.f32.mrb[0].mxu0
  %1015 = vmatprep.mubr.f32.mxu0 0.0
  %v1016 = vand.u32 %v100, 4294901760
  %1017 = vmatmul.mubr.f32.gmra.mrb[0].mxu0 %v1016
  %v1018 = vpop.f32.mrb[0].mxu0
  %v1019 = vadd.f32 %v849, %v1018
  %v1020 = vpop.f32.mrb[0].mxu0
  %1021 = vmatprep.mubr.f32.mxu0 0.0
  %v1022 = vand.u32 %v103, 4294901760
  %1023 = vmatmul.mubr.f32.gmra.mrb[0].mxu0 %v1022
  %v1024 = vpop.f32.mrb[0].mxu0
  %v1025 = vadd.f32 %v857, %v1024
  %v1026 = vpop.f32.mrb[0].mxu0
  %1027 = vmatprep.mubr.f32.mxu0 0.0
  %v1028 = vand.u32 %v106, 4294901760
  %1029 = vmatmul.mubr.f32.gmra.mrb[0].mxu0 %v1028
  %v1030 = vpop.f32.mrb[0].mxu0
  %v1031 = vadd.f32 %v865, %v1030
  %v1032 = vpop.f32.mrb[0].mxu0
  %1033 = vmatprep.mubr.f32.mxu0 0.0
  %v1034 = vand.u32 %v109, 4294901760
  %1035 = vmatmul.mubr.f32.gmra.mrb[0].mxu0 %v1034
  %v1036 = vpop.f32.mrb[0].mxu0
  %v1037 = vadd.f32 %v873, %v1036
  %v1038 = vpop.f32.mrb[0].mxu0
  %1039 = vdwg.mxu0
  %1040 = vmatprep.subr.mxu0 0.0
  %v1041 = vand.u32 %v11, 4294901760
  %1042 = vmatpush1.msra.mxu0 %v1041
  %1043 = vmatprep.subr.mxu0 0.0
  %1044 = vmatpush1.msra.mxu0 0.0
  %1045 = vmatprep.subr.mxu0 0.0
  %1046 = vmatpush1.msra.mxu0 0.0
  %1047 = vmatprep.subr.mxu0 0.0
  %1048 = vmatpush1.msra.mxu0 0.0
  %1049 = vmatprep.subr.mxu0 0.0
  %1050 = vmatpush1.msra.mxu0 0.0
  %1051 = vmatprep.subr.mxu0 0.0
  %1052 = vmatpush1.msra.mxu0 0.0
  %1053 = vmatprep.subr.mxu0 0.0
  %1054 = vmatpush1.msra.mxu0 0.0
  %1055 = vmatprep.subr.mxu0 0.0
  %1056 = vmatpush1.msra.mxu0 0.0
  %1057 = vmatprep.subr.mxu0 0.0
  %1058 = vmatpush1.msra.mxu0 0.0
  %1059 = vmatprep.subr.mxu0 0.0
  %1060 = vmatpush1.msra.mxu0 0.0
  %1061 = vmatprep.subr.mxu0 0.0
  %1062 = vmatpush1.msra.mxu0 0.0
  %1063 = vmatprep.subr.mxu0 0.0
  %1064 = vmatpush1.msra.mxu0 0.0
  %1065 = vmatprep.subr.mxu0 0.0
  %1066 = vmatpush1.msra.mxu0 0.0
  %1067 = vmatprep.subr.mxu0 0.0
  %1068 = vmatpush1.msra.mxu0 0.0
  %1069 = vmatprep.subr.mxu0 0.0
  %1070 = vmatpush1.msra.mxu0 0.0
  %1071 = vmatprep.subr.mxu0 0.0
  %1072 = vmatpush1.msra.mxu0 0.0
  %1073 = vmatprep.subr.mxu0 0.0
  %1074 = vmatpush1.msra.mxu0 0.0
  %1075 = vmatprep.subr.mxu0 0.0
  %1076 = vmatpush1.msra.mxu0 0.0
  %1077 = vmatprep.subr.mxu0 0.0
  %1078 = vmatpush1.msra.mxu0 0.0
  %1079 = vmatprep.subr.mxu0 0.0
  %1080 = vmatpush1.msra.mxu0 0.0
  %1081 = vmatprep.subr.mxu0 0.0
  %1082 = vmatpush1.msra.mxu0 0.0
  %1083 = vmatprep.subr.mxu0 0.0
  %1084 = vmatpush1.msra.mxu0 0.0
  %1085 = vmatprep.subr.mxu0 0.0
  %1086 = vmatpush1.msra.mxu0 0.0
  %1087 = vmatprep.subr.mxu0 0.0
  %1088 = vmatpush1.msra.mxu0 0.0
  %1089 = vmatprep.subr.mxu0 0.0
  %1090 = vmatpush1.msra.mxu0 0.0
  %1091 = vmatprep.subr.mxu0 0.0
  %1092 = vmatpush1.msra.mxu0 0.0
  %1093 = vmatprep.subr.mxu0 0.0
  %1094 = vmatpush1.msra.mxu0 0.0
  %1095 = vmatprep.subr.mxu0 0.0
  %1096 = vmatpush1.msra.mxu0 0.0
  %1097 = vmatprep.subr.mxu0 0.0
  %1098 = vmatpush1.msra.mxu0 0.0
  %1099 = vmatprep.subr.mxu0 0.0
  %1100 = vmatpush1.msra.mxu0 0.0
  %1101 = vmatprep.subr.mxu0 0.0
  %1102 = vmatpush1.msra.mxu0 0.0
  %1103 = vmatprep.subr.mxu0 0.0
  %1104 = vmatpush1.msra.mxu0 0.0
  %1105 = vmatprep.mubr.f32.mxu0 0.0
  %v1106 = vand.u32 %v64, 4294901760
  %1107 = vmatmul.mubr.f32.gmra.mrb[0].mxu0 %v1106
  %v1108 = vpop.f32.mrb[0].mxu0
  %v1109 = vadd.f32 %v947, %v1108
  %v1110 = vpop.f32.mrb[0].mxu0
  %1111 = vmatprep.mubr.f32.mxu0 0.0
  %v1112 = vand.u32 %v67, 4294901760
  %1113 = vmatmul.mubr.f32.gmra.mrb[0].mxu0 %v1112
  %v1114 = vpop.f32.mrb[0].mxu0
  %v1115 = vadd.f32 %v953, %v1114
  %v1116 = vpop.f32.mrb[0].mxu0
  %1117 = vmatprep.mubr.f32.mxu0 0.0
  %v1118 = vand.u32 %v70, 4294901760
  %1119 = vmatmul.mubr.f32.gmra.mrb[0].mxu0 %v1118
  %v1120 = vpop.f32.mrb[0].mxu0
  %v1121 = vadd.f32 %v959, %v1120
  %v1122 = vpop.f32.mrb[0].mxu0
  %1123 = vmatprep.mubr.f32.mxu0 0.0
  %v1124 = vand.u32 %v73, 4294901760
  %1125 = vmatmul.mubr.f32.gmra.mrb[0].mxu0 %v1124
  %v1126 = vpop.f32.mrb[0].mxu0
  %v1127 = vadd.f32 %v965, %v1126
  %v1128 = vpop.f32.mrb[0].mxu0
  %1129 = vmatprep.mubr.f32.mxu0 0.0
  %v1130 = vand.u32 %v76, 4294901760
  %1131 = vmatmul.mubr.f32.gmra.mrb[0].mxu0 %v1130
  %v1132 = vpop.f32.mrb[0].mxu0
  %v1133 = vadd.f32 %v971, %v1132
  %v1134 = vpop.f32.mrb[0].mxu0
  %1135 = vmatprep.mubr.f32.mxu0 0.0
  %v1136 = vand.u32 %v79, 4294901760
  %1137 = vmatmul.mubr.f32.gmra.mrb[0].mxu0 %v1136
  %v1138 = vpop.f32.mrb[0].mxu0
  %v1139 = vadd.f32 %v977, %v1138
  %v1140 = vpop.f32.mrb[0].mxu0
  %1141 = vmatprep.mubr.f32.mxu0 0.0
  %v1142 = vand.u32 %v82, 4294901760
  %1143 = vmatmul.mubr.f32.gmra.mrb[0].mxu0 %v1142
  %v1144 = vpop.f32.mrb[0].mxu0
  %v1145 = vadd.f32 %v983, %v1144
  %v1146 = vpop.f32.mrb[0].mxu0
  %1147 = vmatprep.mubr.f32.mxu0 0.0
  %v1148 = vand.u32 %v85, 4294901760
  %1149 = vmatmul.mubr.f32.gmra.mrb[0].mxu0 %v1148
  %v1150 = vpop.f32.mrb[0].mxu0
  %v1151 = vadd.f32 %v989, %v1150
  %v1152 = vpop.f32.mrb[0].mxu0
  %1153 = vmatprep.mubr.f32.mxu0 0.0
  %v1154 = vand.u32 %v88, 4294901760
  %1155 = vmatmul.mubr.f32.gmra.mrb[0].mxu0 %v1154
  %v1156 = vpop.f32.mrb[0].mxu0
  %v1157 = vadd.f32 %v995, %v1156
  %v1158 = vpop.f32.mrb[0].mxu0
  %1159 = vmatprep.mubr.f32.mxu0 0.0
  %v1160 = vand.u32 %v91, 4294901760
  %1161 = vmatmul.mubr.f32.gmra.mrb[0].mxu0 %v1160
  %v1162 = vpop.f32.mrb[0].mxu0
  %v1163 = vadd.f32 %v1001, %v1162
  %v1164 = vpop.f32.mrb[0].mxu0
  %1165 = vmatprep.mubr.f32.mxu0 0.0
  %v1166 = vand.u32 %v94, 4294901760
  %1167 = vmatmul.mubr.f32.gmra.mrb[0].mxu0 %v1166
  %v1168 = vpop.f32.mrb[0].mxu0
  %v1169 = vadd.f32 %v1007, %v1168
  %v1170 = vpop.f32.mrb[0].mxu0
  %1171 = vmatprep.mubr.f32.mxu0 0.0
  %v1172 = vand.u32 %v97, 4294901760
  %1173 = vmatmul.mubr.f32.gmra.mrb[0].mxu0 %v1172
  %v1174 = vpop.f32.mrb[0].mxu0
  %v1175 = vadd.f32 %v1013, %v1174
  %v1176 = vpop.f32.mrb[0].mxu0
  %1177 = vmatprep.mubr.f32.mxu0 0.0
  %v1178 = vand.u32 %v100, 4294901760
  %1179 = vmatmul.mubr.f32.gmra.mrb[0].mxu0 %v1178
  %v1180 = vpop.f32.mrb[0].mxu0
  %v1181 = vadd.f32 %v1019, %v1180
  %v1182 = vpop.f32.mrb[0].mxu0
  %1183 = vmatprep.mubr.f32.mxu0 0.0
  %v1184 = vand.u32 %v103, 4294901760
  %1185 = vmatmul.mubr.f32.gmra.mrb[0].mxu0 %v1184
  %v1186 = vpop.f32.mrb[0].mxu0
  %v1187 = vadd.f32 %v1025, %v1186
  %v1188 = vpop.f32.mrb[0].mxu0
  %1189 = vmatprep.mubr.f32.mxu0 0.0
  %v1190 = vand.u32 %v106, 4294901760
  %1191 = vmatmul.mubr.f32.gmra.mrb[0].mxu0 %v1190
  %v1192 = vpop.f32.mrb[0].mxu0
  %v1193 = vadd.f32 %v1031, %v1192
  %v1194 = vpop.f32.mrb[0].mxu0
  %1195 = vmatprep.mubr.f32.mxu0 0.0
  %v1196 = vand.u32 %v109, 4294901760
  %1197 = vmatmul.mubr.f32.gmra.mrb[0].mxu0 %v1196
  %v1198 = vpop.f32.mrb[0].mxu0
  %v1199 = vadd.f32 %v1037, %v1198
  %v1200 = vpop.f32.mrb[0].mxu0
  %1201 = vdwg.mxu0
  %vm1202 = vcmp.ge.f32.partialorder %v1109, 0.0
  %vm1203 = vcmp.ge.f32.partialorder %v1115, 0.0
  %vm1204 = vcmp.ge.f32.partialorder %v1121, 0.0
  %vm1205 = vcmp.ge.f32.partialorder %v1127, 0.0
  %vm1206 = vcmp.ge.f32.partialorder %v1133, 0.0
  %vm1207 = vcmp.ge.f32.partialorder %v1139, 0.0
  %vm1208 = vcmp.ge.f32.partialorder %v1145, 0.0
  %vm1209 = vcmp.ge.f32.partialorder %v1151, 0.0
  %vm1210 = vcmp.ge.f32.partialorder %v1157, 0.0
  %vm1211 = vcmp.ge.f32.partialorder %v1163, 0.0
  %vm1212 = vcmp.ge.f32.partialorder %v1169, 0.0
  %vm1213 = vcmp.ge.f32.partialorder %v1175, 0.0
  %vm1214 = vcmp.ge.f32.partialorder %v1181, 0.0
  %vm1215 = vcmp.ge.f32.partialorder %v1187, 0.0
  %vm1216 = vcmp.ge.f32.partialorder %v1193, 0.0
  %vm1217 = vcmp.ge.f32.partialorder %v1199, 0.0
  %v1218 = vmul.f32 %v1109, 0.22916667
  %v1219 = vmul.f32 %v1115, 0.22916667
  %v1220 = vmul.f32 %v1121, 0.22916667
  %v1221 = vmul.f32 %v1127, 0.22916667
  %v1222 = vmul.f32 %v1133, 0.22916667
  %v1223 = vmul.f32 %v1139, 0.22916667
  %v1224 = vmul.f32 %v1145, 0.22916667
  %v1225 = vmul.f32 %v1151, 0.22916667
  %v1226 = vmul.f32 %v1157, 0.22916667
  %v1227 = vmul.f32 %v1163, 0.22916667
  %v1228 = vmul.f32 %v1169, 0.22916667
  %v1229 = vmul.f32 %v1175, 0.22916667
  %v1230 = vmul.f32 %v1181, 0.22916667
  %v1231 = vmul.f32 %v1187, 0.22916667
  %v1232 = vmul.f32 %v1193, 0.22916667
  %v1233 = vmul.f32 %v1199, 0.22916667
  %v1234 = vsel %vm1202, %v1109, %v1218
  %v1235 = vsel %vm1203, %v1115, %v1219
  %v1236 = vsel %vm1204, %v1121, %v1220
  %v1237 = vsel %vm1205, %v1127, %v1221
  %v1238 = vsel %vm1206, %v1133, %v1222
  %v1239 = vsel %vm1207, %v1139, %v1223
  %v1240 = vsel %vm1208, %v1145, %v1224
  %v1241 = vsel %vm1209, %v1151, %v1225
  %v1242 = vsel %vm1210, %v1157, %v1226
  %v1243 = vsel %vm1211, %v1163, %v1227
  %v1244 = vsel %vm1212, %v1169, %v1228
  %v1245 = vsel %vm1213, %v1175, %v1229
  %v1246 = vsel %vm1214, %v1181, %v1230
  %v1247 = vsel %vm1215, %v1187, %v1231
  %v1248 = vsel %vm1216, %v1193, %v1232
  %v1249 = vsel %vm1217, %v1199, %v1233
  %v1250 = vlaneseq
  %v1251 = vshrl.u32 %v1250, 7
  %v1252 = vsub.s32 0, %v1251
  %v1253 = vrot.slane %v44, %v1252
  %1254 = vmatprep.subr.mxu0 0.0
  %v1255 = vand.u32 %v12, 4294901760
  %1256 = vmatpush1.msra.mxu0 %v1255
  %1257 = vmatprep.subr.mxu0 0.0
  %v1258 = vand.u32 %v13, 4294901760
  %1259 = vmatpush1.msra.mxu0 %v1258
  %1260 = vmatprep.subr.mxu0 0.0
  %v1261 = vand.u32 %v14, 4294901760
  %1262 = vmatpush1.msra.mxu0 %v1261
  %1263 = vmatprep.subr.mxu0 0.0
  %v1264 = vand.u32 %v15, 4294901760
  %1265 = vmatpush1.msra.mxu0 %v1264
  %1266 = vmatprep.subr.mxu0 0.0
  %v1267 = vand.u32 %v16, 4294901760
  %1268 = vmatpush1.msra.mxu0 %v1267
  %1269 = vmatprep.subr.mxu0 0.0
  %v1270 = vand.u32 %v17, 4294901760
  %1271 = vmatpush1.msra.mxu0 %v1270
  %1272 = vmatprep.subr.mxu0 0.0
  %v1273 = vand.u32 %v18, 4294901760
  %1274 = vmatpush1.msra.mxu0 %v1273
  %1275 = vmatprep.subr.mxu0 0.0
  %v1276 = vand.u32 %v19, 4294901760
  %1277 = vmatpush1.msra.mxu0 %v1276
  %1278 = vmatprep.subr.mxu0 0.0
  %v1279 = vand.u32 %v20, 4294901760
  %1280 = vmatpush1.msra.mxu0 %v1279
  %1281 = vmatprep.subr.mxu0 0.0
  %v1282 = vand.u32 %v21, 4294901760
  %1283 = vmatpush1.msra.mxu0 %v1282
  %1284 = vmatprep.subr.mxu0 0.0
  %v1285 = vand.u32 %v22, 4294901760
  %1286 = vmatpush1.msra.mxu0 %v1285
  %1287 = vmatprep.subr.mxu0 0.0
  %v1288 = vand.u32 %v23, 4294901760
  %1289 = vmatpush1.msra.mxu0 %v1288
  %1290 = vmatprep.subr.mxu0 0.0
  %v1291 = vand.u32 %v24, 4294901760
  %1292 = vmatpush1.msra.mxu0 %v1291
  %1293 = vmatprep.subr.mxu0 0.0
  %v1294 = vand.u32 %v25, 4294901760
  %1295 = vmatpush1.msra.mxu0 %v1294
  %1296 = vmatprep.subr.mxu0 0.0
  %v1297 = vand.u32 %v26, 4294901760
  %1298 = vmatpush1.msra.mxu0 %v1297
  %1299 = vmatprep.subr.mxu0 0.0
  %v1300 = vand.u32 %v27, 4294901760
  %1301 = vmatpush1.msra.mxu0 %v1300
  %1302 = vmatprep.subr.mxu0 0.0
  %1303 = vmatpush1.msra.mxu0 0.0
  %1304 = vmatprep.subr.mxu0 0.0
  %1305 = vmatpush1.msra.mxu0 0.0
  %1306 = vmatprep.subr.mxu0 0.0
  %1307 = vmatpush1.msra.mxu0 0.0
  %1308 = vmatprep.subr.mxu0 0.0
  %1309 = vmatpush1.msra.mxu0 0.0
  %1310 = vmatprep.subr.mxu0 0.0
  %1311 = vmatpush1.msra.mxu0 0.0
  %1312 = vmatprep.subr.mxu0 0.0
  %1313 = vmatpush1.msra.mxu0 0.0
  %1314 = vmatprep.subr.mxu0 0.0
  %1315 = vmatpush1.msra.mxu0 0.0
  %1316 = vmatprep.subr.mxu0 0.0
  %1317 = vmatpush1.msra.mxu0 0.0
  %1318 = vmatprep.subr.mxu0 0.0
  %1319 = vmatpush1.msra.mxu0 0.0
  %1320 = vmatprep.subr.mxu0 0.0
  %1321 = vmatpush1.msra.mxu0 0.0
  %1322 = vmatprep.subr.mxu0 0.0
  %1323 = vmatpush1.msra.mxu0 0.0
  %1324 = vmatprep.subr.mxu0 0.0
  %1325 = vmatpush1.msra.mxu0 0.0
  %1326 = vmatprep.subr.mxu0 0.0
  %1327 = vmatpush1.msra.mxu0 0.0
  %1328 = vmatprep.subr.mxu0 0.0
  %1329 = vmatpush1.msra.mxu0 0.0
  %1330 = vmatprep.subr.mxu0 0.0
  %1331 = vmatpush1.msra.mxu0 0.0
  %1332 = vmatprep.subr.mxu0 0.0
  %1333 = vmatpush1.msra.mxu0 0.0
  %1334 = vmatprep.mubr.f32.mxu0 0.0
  %v1335 = vand.u32 %v1234, 4294901760
  %v1336 = vsub.f32 %v1234, %v1335
  %v1337 = vand.u32 %v1336, 4294901760
  %v1338 = vsub.f32 %v1336, %v1337
  %v1339 = vand.u32 %v1338, 4294901760
  %1340 = vmatmul.mubr.f32.gmra.mrb[0].mxu0 %v1339
  %v1341 = vpop.f32.mrb[0].mxu0
  %v1342 = vadd.f32 %v1253, %v1341
  %v1343 = vpop.f32.mrb[0].mxu0
  %1344 = vmatprep.mubr.f32.mxu0 0.0
  %v1345 = vand.u32 %v1235, 4294901760
  %v1346 = vsub.f32 %v1235, %v1345
  %v1347 = vand.u32 %v1346, 4294901760
  %v1348 = vsub.f32 %v1346, %v1347
  %v1349 = vand.u32 %v1348, 4294901760
  %1350 = vmatmul.mubr.f32.gmra.mrb[0].mxu0 %v1349
  %v1351 = vpop.f32.mrb[0].mxu0
  %v1352 = vadd.f32 %v1253, %v1351
  %v1353 = vpop.f32.mrb[0].mxu0
  %1354 = vmatprep.mubr.f32.mxu0 0.0
  %v1355 = vand.u32 %v1236, 4294901760
  %v1356 = vsub.f32 %v1236, %v1355
  %v1357 = vand.u32 %v1356, 4294901760
  %v1358 = vsub.f32 %v1356, %v1357
  %v1359 = vand.u32 %v1358, 4294901760
  %1360 = vmatmul.mubr.f32.gmra.mrb[0].mxu0 %v1359
  %v1361 = vpop.f32.mrb[0].mxu0
  %v1362 = vadd.f32 %v1253, %v1361
  %v1363 = vpop.f32.mrb[0].mxu0
  %1364 = vmatprep.mubr.f32.mxu0 0.0
  %v1365 = vand.u32 %v1237, 4294901760
  %v1366 = vsub.f32 %v1237, %v1365
  %v1367 = vand.u32 %v1366, 4294901760
  %v1368 = vsub.f32 %v1366, %v1367
  %v1369 = vand.u32 %v1368, 4294901760
  %1370 = vmatmul.mubr.f32.gmra.mrb[0].mxu0 %v1369
  %v1371 = vpop.f32.mrb[0].mxu0
  %v1372 = vadd.f32 %v1253, %v1371
  %v1373 = vpop.f32.mrb[0].mxu0
  %1374 = vmatprep.mubr.f32.mxu0 0.0
  %v1375 = vand.u32 %v1238, 4294901760
  %v1376 = vsub.f32 %v1238, %v1375
  %v1377 = vand.u32 %v1376, 4294901760
  %v1378 = vsub.f32 %v1376, %v1377
  %v1379 = vand.u32 %v1378, 4294901760
  %1380 = vmatmul.mubr.f32.gmra.mrb[0].mxu0 %v1379
  %v1381 = vpop.f32.mrb[0].mxu0
  %v1382 = vadd.f32 %v1253, %v1381
  %v1383 = vpop.f32.mrb[0].mxu0
  %1384 = vmatprep.mubr.f32.mxu0 0.0
  %v1385 = vand.u32 %v1239, 4294901760
  %v1386 = vsub.f32 %v1239, %v1385
  %v1387 = vand.u32 %v1386, 4294901760
  %v1388 = vsub.f32 %v1386, %v1387
  %v1389 = vand.u32 %v1388, 4294901760
  %1390 = vmatmul.mubr.f32.gmra.mrb[0].mxu0 %v1389
  %v1391 = vpop.f32.mrb[0].mxu0
  %v1392 = vadd.f32 %v1253, %v1391
  %v1393 = vpop.f32.mrb[0].mxu0
  %1394 = vmatprep.mubr.f32.mxu0 0.0
  %v1395 = vand.u32 %v1240, 4294901760
  %v1396 = vsub.f32 %v1240, %v1395
  %v1397 = vand.u32 %v1396, 4294901760
  %v1398 = vsub.f32 %v1396, %v1397
  %v1399 = vand.u32 %v1398, 4294901760
  %1400 = vmatmul.mubr.f32.gmra.mrb[0].mxu0 %v1399
  %v1401 = vpop.f32.mrb[0].mxu0
  %v1402 = vadd.f32 %v1253, %v1401
  %v1403 = vpop.f32.mrb[0].mxu0
  %1404 = vmatprep.mubr.f32.mxu0 0.0
  %v1405 = vand.u32 %v1241, 4294901760
  %v1406 = vsub.f32 %v1241, %v1405
  %v1407 = vand.u32 %v1406, 4294901760
  %v1408 = vsub.f32 %v1406, %v1407
  %v1409 = vand.u32 %v1408, 4294901760
  %1410 = vmatmul.mubr.f32.gmra.mrb[0].mxu0 %v1409
  %v1411 = vpop.f32.mrb[0].mxu0
  %v1412 = vadd.f32 %v1253, %v1411
  %v1413 = vpop.f32.mrb[0].mxu0
  %1414 = vmatprep.mubr.f32.mxu0 0.0
  %v1415 = vand.u32 %v1242, 4294901760
  %v1416 = vsub.f32 %v1242, %v1415
  %v1417 = vand.u32 %v1416, 4294901760
  %v1418 = vsub.f32 %v1416, %v1417
  %v1419 = vand.u32 %v1418, 4294901760
  %1420 = vmatmul.mubr.f32.gmra.mrb[0].mxu0 %v1419
  %v1421 = vpop.f32.mrb[0].mxu0
  %v1422 = vadd.f32 %v1253, %v1421
  %v1423 = vpop.f32.mrb[0].mxu0
  %1424 = vmatprep.mubr.f32.mxu0 0.0
  %v1425 = vand.u32 %v1243, 4294901760
  %v1426 = vsub.f32 %v1243, %v1425
  %v1427 = vand.u32 %v1426, 4294901760
  %v1428 = vsub.f32 %v1426, %v1427
  %v1429 = vand.u32 %v1428, 4294901760
  %1430 = vmatmul.mubr.f32.gmra.mrb[0].mxu0 %v1429
  %v1431 = vpop.f32.mrb[0].mxu0
  %v1432 = vadd.f32 %v1253, %v1431
  %v1433 = vpop.f32.mrb[0].mxu0
  %1434 = vmatprep.mubr.f32.mxu0 0.0
  %v1435 = vand.u32 %v1244, 4294901760
  %v1436 = vsub.f32 %v1244, %v1435
  %v1437 = vand.u32 %v1436, 4294901760
  %v1438 = vsub.f32 %v1436, %v1437
  %v1439 = vand.u32 %v1438, 4294901760
  %1440 = vmatmul.mubr.f32.gmra.mrb[0].mxu0 %v1439
  %v1441 = vpop.f32.mrb[0].mxu0
  %v1442 = vadd.f32 %v1253, %v1441
  %v1443 = vpop.f32.mrb[0].mxu0
  %1444 = vmatprep.mubr.f32.mxu0 0.0
  %v1445 = vand.u32 %v1245, 4294901760
  %v1446 = vsub.f32 %v1245, %v1445
  %v1447 = vand.u32 %v1446, 4294901760
  %v1448 = vsub.f32 %v1446, %v1447
  %v1449 = vand.u32 %v1448, 4294901760
  %1450 = vmatmul.mubr.f32.gmra.mrb[0].mxu0 %v1449
  %v1451 = vpop.f32.mrb[0].mxu0
  %v1452 = vadd.f32 %v1253, %v1451
  %v1453 = vpop.f32.mrb[0].mxu0
  %1454 = vmatprep.mubr.f32.mxu0 0.0
  %v1455 = vand.u32 %v1246, 4294901760
  %v1456 = vsub.f32 %v1246, %v1455
  %v1457 = vand.u32 %v1456, 4294901760
  %v1458 = vsub.f32 %v1456, %v1457
  %v1459 = vand.u32 %v1458, 4294901760
  %1460 = vmatmul.mubr.f32.gmra.mrb[0].mxu0 %v1459
  %v1461 = vpop.f32.mrb[0].mxu0
  %v1462 = vadd.f32 %v1253, %v1461
  %v1463 = vpop.f32.mrb[0].mxu0
  %1464 = vmatprep.mubr.f32.mxu0 0.0
  %v1465 = vand.u32 %v1247, 4294901760
  %v1466 = vsub.f32 %v1247, %v1465
  %v1467 = vand.u32 %v1466, 4294901760
  %v1468 = vsub.f32 %v1466, %v1467
  %v1469 = vand.u32 %v1468, 4294901760
  %1470 = vmatmul.mubr.f32.gmra.mrb[0].mxu0 %v1469
  %v1471 = vpop.f32.mrb[0].mxu0
  %v1472 = vadd.f32 %v1253, %v1471
  %v1473 = vpop.f32.mrb[0].mxu0
  %1474 = vmatprep.mubr.f32.mxu0 0.0
  %v1475 = vand.u32 %v1248, 4294901760
  %v1476 = vsub.f32 %v1248, %v1475
  %v1477 = vand.u32 %v1476, 4294901760
  %v1478 = vsub.f32 %v1476, %v1477
  %v1479 = vand.u32 %v1478, 4294901760
  %1480 = vmatmul.mubr.f32.gmra.mrb[0].mxu0 %v1479
  %v1481 = vpop.f32.mrb[0].mxu0
  %v1482 = vadd.f32 %v1253, %v1481
  %v1483 = vpop.f32.mrb[0].mxu0
  %1484 = vmatprep.mubr.f32.mxu0 0.0
  %v1485 = vand.u32 %v1249, 4294901760
  %v1486 = vsub.f32 %v1249, %v1485
  %v1487 = vand.u32 %v1486, 4294901760
  %v1488 = vsub.f32 %v1486, %v1487
  %v1489 = vand.u32 %v1488, 4294901760
  %1490 = vmatmul.mubr.f32.gmra.mrb[0].mxu0 %v1489
  %v1491 = vpop.f32.mrb[0].mxu0
  %v1492 = vadd.f32 %v1253, %v1491
  %v1493 = vpop.f32.mrb[0].mxu0
  %1494 = vdwg.mxu0
  %1495 = vmatprep.subr.mxu0 0.0
  %v1496 = vand.u32 %v12, 4294901760
  %v1497 = vsub.f32 %v12, %v1496
  %v1498 = vand.u32 %v1497, 4294901760
  %v1499 = vsub.f32 %v1497, %v1498
  %v1500 = vand.u32 %v1499, 4294901760
  %1501 = vmatpush1.msra.mxu0 %v1500
  %1502 = vmatprep.subr.mxu0 0.0
  %v1503 = vand.u32 %v13, 4294901760
  %v1504 = vsub.f32 %v13, %v1503
  %v1505 = vand.u32 %v1504, 4294901760
  %v1506 = vsub.f32 %v1504, %v1505
  %v1507 = vand.u32 %v1506, 4294901760
  %1508 = vmatpush1.msra.mxu0 %v1507
  %1509 = vmatprep.subr.mxu0 0.0
  %v1510 = vand.u32 %v14, 4294901760
  %v1511 = vsub.f32 %v14, %v1510
  %v1512 = vand.u32 %v1511, 4294901760
  %v1513 = vsub.f32 %v1511, %v1512
  %v1514 = vand.u32 %v1513, 4294901760
  %1515 = vmatpush1.msra.mxu0 %v1514
  %1516 = vmatprep.subr.mxu0 0.0
  %v1517 = vand.u32 %v15, 4294901760
  %v1518 = vsub.f32 %v15, %v1517
  %v1519 = vand.u32 %v1518, 4294901760
  %v1520 = vsub.f32 %v1518, %v1519
  %v1521 = vand.u32 %v1520, 4294901760
  %1522 = vmatpush1.msra.mxu0 %v1521
  %1523 = vmatprep.subr.mxu0 0.0
  %v1524 = vand.u32 %v16, 4294901760
  %v1525 = vsub.f32 %v16, %v1524
  %v1526 = vand.u32 %v1525, 4294901760
  %v1527 = vsub.f32 %v1525, %v1526
  %v1528 = vand.u32 %v1527, 4294901760
  %1529 = vmatpush1.msra.mxu0 %v1528
  %1530 = vmatprep.subr.mxu0 0.0
  %v1531 = vand.u32 %v17, 4294901760
  %v1532 = vsub.f32 %v17, %v1531
  %v1533 = vand.u32 %v1532, 4294901760
  %v1534 = vsub.f32 %v1532, %v1533
  %v1535 = vand.u32 %v1534, 4294901760
  %1536 = vmatpush1.msra.mxu0 %v1535
  %1537 = vmatprep.subr.mxu0 0.0
  %v1538 = vand.u32 %v18, 4294901760
  %v1539 = vsub.f32 %v18, %v1538
  %v1540 = vand.u32 %v1539, 4294901760
  %v1541 = vsub.f32 %v1539, %v1540
  %v1542 = vand.u32 %v1541, 4294901760
  %1543 = vmatpush1.msra.mxu0 %v1542
  %1544 = vmatprep.subr.mxu0 0.0
  %v1545 = vand.u32 %v19, 4294901760
  %v1546 = vsub.f32 %v19, %v1545
  %v1547 = vand.u32 %v1546, 4294901760
  %v1548 = vsub.f32 %v1546, %v1547
  %v1549 = vand.u32 %v1548, 4294901760
  %1550 = vmatpush1.msra.mxu0 %v1549
  %1551 = vmatprep.subr.mxu0 0.0
  %v1552 = vand.u32 %v20, 4294901760
  %v1553 = vsub.f32 %v20, %v1552
  %v1554 = vand.u32 %v1553, 4294901760
  %v1555 = vsub.f32 %v1553, %v1554
  %v1556 = vand.u32 %v1555, 4294901760
  %1557 = vmatpush1.msra.mxu0 %v1556
  %1558 = vmatprep.subr.mxu0 0.0
  %v1559 = vand.u32 %v21, 4294901760
  %v1560 = vsub.f32 %v21, %v1559
  %v1561 = vand.u32 %v1560, 4294901760
  %v1562 = vsub.f32 %v1560, %v1561
  %v1563 = vand.u32 %v1562, 4294901760
  %1564 = vmatpush1.msra.mxu0 %v1563
  %1565 = vmatprep.subr.mxu0 0.0
  %v1566 = vand.u32 %v22, 4294901760
  %v1567 = vsub.f32 %v22, %v1566
  %v1568 = vand.u32 %v1567, 4294901760
  %v1569 = vsub.f32 %v1567, %v1568
  %v1570 = vand.u32 %v1569, 4294901760
  %1571 = vmatpush1.msra.mxu0 %v1570
  %1572 = vmatprep.subr.mxu0 0.0
  %v1573 = vand.u32 %v23, 4294901760
  %v1574 = vsub.f32 %v23, %v1573
  %v1575 = vand.u32 %v1574, 4294901760
  %v1576 = vsub.f32 %v1574, %v1575
  %v1577 = vand.u32 %v1576, 4294901760
  %1578 = vmatpush1.msra.mxu0 %v1577
  %1579 = vmatprep.subr.mxu0 0.0
  %v1580 = vand.u32 %v24, 4294901760
  %v1581 = vsub.f32 %v24, %v1580
  %v1582 = vand.u32 %v1581, 4294901760
  %v1583 = vsub.f32 %v1581, %v1582
  %v1584 = vand.u32 %v1583, 4294901760
  %1585 = vmatpush1.msra.mxu0 %v1584
  %1586 = vmatprep.subr.mxu0 0.0
  %v1587 = vand.u32 %v25, 4294901760
  %v1588 = vsub.f32 %v25, %v1587
  %v1589 = vand.u32 %v1588, 4294901760
  %v1590 = vsub.f32 %v1588, %v1589
  %v1591 = vand.u32 %v1590, 4294901760
  %1592 = vmatpush1.msra.mxu0 %v1591
  %1593 = vmatprep.subr.mxu0 0.0
  %v1594 = vand.u32 %v26, 4294901760
  %v1595 = vsub.f32 %v26, %v1594
  %v1596 = vand.u32 %v1595, 4294901760
  %v1597 = vsub.f32 %v1595, %v1596
  %v1598 = vand.u32 %v1597, 4294901760
  %1599 = vmatpush1.msra.mxu0 %v1598
  %1600 = vmatprep.subr.mxu0 0.0
  %v1601 = vand.u32 %v27, 4294901760
  %v1602 = vsub.f32 %v27, %v1601
  %v1603 = vand.u32 %v1602, 4294901760
  %v1604 = vsub.f32 %v1602, %v1603
  %v1605 = vand.u32 %v1604, 4294901760
  %1606 = vmatpush1.msra.mxu0 %v1605
  %1607 = vmatprep.subr.mxu0 0.0
  %1608 = vmatpush1.msra.mxu0 0.0
  %1609 = vmatprep.subr.mxu0 0.0
  %1610 = vmatpush1.msra.mxu0 0.0
  %1611 = vmatprep.subr.mxu0 0.0
  %1612 = vmatpush1.msra.mxu0 0.0
  %1613 = vmatprep.subr.mxu0 0.0
  %1614 = vmatpush1.msra.mxu0 0.0
  %1615 = vmatprep.subr.mxu0 0.0
  %1616 = vmatpush1.msra.mxu0 0.0
  %1617 = vmatprep.subr.mxu0 0.0
  %1618 = vmatpush1.msra.mxu0 0.0
  %1619 = vmatprep.subr.mxu0 0.0
  %1620 = vmatpush1.msra.mxu0 0.0
  %1621 = vmatprep.subr.mxu0 0.0
  %1622 = vmatpush1.msra.mxu0 0.0
  %1623 = vmatprep.subr.mxu0 0.0
  %1624 = vmatpush1.msra.mxu0 0.0
  %1625 = vmatprep.subr.mxu0 0.0
  %1626 = vmatpush1.msra.mxu0 0.0
  %1627 = vmatprep.subr.mxu0 0.0
  %1628 = vmatpush1.msra.mxu0 0.0
  %1629 = vmatprep.subr.mxu0 0.0
  %1630 = vmatpush1.msra.mxu0 0.0
  %1631 = vmatprep.subr.mxu0 0.0
  %1632 = vmatpush1.msra.mxu0 0.0
  %1633 = vmatprep.subr.mxu0 0.0
  %1634 = vmatpush1.msra.mxu0 0.0
  %1635 = vmatprep.subr.mxu0 0.0
  %1636 = vmatpush1.msra.mxu0 0.0
  %1637 = vmatprep.subr.mxu0 0.0
  %1638 = vmatpush1.msra.mxu0 0.0
  %1639 = vmatprep.mubr.f32.mxu0 0.0
  %v1640 = vand.u32 %v1234, 4294901760
  %1641 = vmatmul.mubr.f32.gmra.mrb[0].mxu0 %v1640
  %v1642 = vpop.f32.mrb[0].mxu0
  %v1643 = vadd.f32 %v1342, %v1642
  %v1644 = vpop.f32.mrb[0].mxu0
  %1645 = vmatprep.mubr.f32.mxu0 0.0
  %v1646 = vand.u32 %v1235, 4294901760
  %1647 = vmatmul.mubr.f32.gmra.mrb[0].mxu0 %v1646
  %v1648 = vpop.f32.mrb[0].mxu0
  %v1649 = vadd.f32 %v1352, %v1648
  %v1650 = vpop.f32.mrb[0].mxu0
  %1651 = vmatprep.mubr.f32.mxu0 0.0
  %v1652 = vand.u32 %v1236, 4294901760
  %1653 = vmatmul.mubr.f32.gmra.mrb[0].mxu0 %v1652
  %v1654 = vpop.f32.mrb[0].mxu0
  %v1655 = vadd.f32 %v1362, %v1654
  %v1656 = vpop.f32.mrb[0].mxu0
  %1657 = vmatprep.mubr.f32.mxu0 0.0
  %v1658 = vand.u32 %v1237, 4294901760
  %1659 = vmatmul.mubr.f32.gmra.mrb[0].mxu0 %v1658
  %v1660 = vpop.f32.mrb[0].mxu0
  %v1661 = vadd.f32 %v1372, %v1660
  %v1662 = vpop.f32.mrb[0].mxu0
  %1663 = vmatprep.mubr.f32.mxu0 0.0
  %v1664 = vand.u32 %v1238, 4294901760
  %1665 = vmatmul.mubr.f32.gmra.mrb[0].mxu0 %v1664
  %v1666 = vpop.f32.mrb[0].mxu0
  %v1667 = vadd.f32 %v1382, %v1666
  %v1668 = vpop.f32.mrb[0].mxu0
  %1669 = vmatprep.mubr.f32.mxu0 0.0
  %v1670 = vand.u32 %v1239, 4294901760
  %1671 = vmatmul.mubr.f32.gmra.mrb[0].mxu0 %v1670
  %v1672 = vpop.f32.mrb[0].mxu0
  %v1673 = vadd.f32 %v1392, %v1672
  %v1674 = vpop.f32.mrb[0].mxu0
  %1675 = vmatprep.mubr.f32.mxu0 0.0
  %v1676 = vand.u32 %v1240, 4294901760
  %1677 = vmatmul.mubr.f32.gmra.mrb[0].mxu0 %v1676
  %v1678 = vpop.f32.mrb[0].mxu0
  %v1679 = vadd.f32 %v1402, %v1678
  %v1680 = vpop.f32.mrb[0].mxu0
  %1681 = vmatprep.mubr.f32.mxu0 0.0
  %v1682 = vand.u32 %v1241, 4294901760
  %1683 = vmatmul.mubr.f32.gmra.mrb[0].mxu0 %v1682
  %v1684 = vpop.f32.mrb[0].mxu0
  %v1685 = vadd.f32 %v1412, %v1684
  %v1686 = vpop.f32.mrb[0].mxu0
  %1687 = vmatprep.mubr.f32.mxu0 0.0
  %v1688 = vand.u32 %v1242, 4294901760
  %1689 = vmatmul.mubr.f32.gmra.mrb[0].mxu0 %v1688
  %v1690 = vpop.f32.mrb[0].mxu0
  %v1691 = vadd.f32 %v1422, %v1690
  %v1692 = vpop.f32.mrb[0].mxu0
  %1693 = vmatprep.mubr.f32.mxu0 0.0
  %v1694 = vand.u32 %v1243, 4294901760
  %1695 = vmatmul.mubr.f32.gmra.mrb[0].mxu0 %v1694
  %v1696 = vpop.f32.mrb[0].mxu0
  %v1697 = vadd.f32 %v1432, %v1696
  %v1698 = vpop.f32.mrb[0].mxu0
  %1699 = vmatprep.mubr.f32.mxu0 0.0
  %v1700 = vand.u32 %v1244, 4294901760
  %1701 = vmatmul.mubr.f32.gmra.mrb[0].mxu0 %v1700
  %v1702 = vpop.f32.mrb[0].mxu0
  %v1703 = vadd.f32 %v1442, %v1702
  %v1704 = vpop.f32.mrb[0].mxu0
  %1705 = vmatprep.mubr.f32.mxu0 0.0
  %v1706 = vand.u32 %v1245, 4294901760
  %1707 = vmatmul.mubr.f32.gmra.mrb[0].mxu0 %v1706
  %v1708 = vpop.f32.mrb[0].mxu0
  %v1709 = vadd.f32 %v1452, %v1708
  %v1710 = vpop.f32.mrb[0].mxu0
  %1711 = vmatprep.mubr.f32.mxu0 0.0
  %v1712 = vand.u32 %v1246, 4294901760
  %1713 = vmatmul.mubr.f32.gmra.mrb[0].mxu0 %v1712
  %v1714 = vpop.f32.mrb[0].mxu0
  %v1715 = vadd.f32 %v1462, %v1714
  %v1716 = vpop.f32.mrb[0].mxu0
  %1717 = vmatprep.mubr.f32.mxu0 0.0
  %v1718 = vand.u32 %v1247, 4294901760
  %1719 = vmatmul.mubr.f32.gmra.mrb[0].mxu0 %v1718
  %v1720 = vpop.f32.mrb[0].mxu0
  %v1721 = vadd.f32 %v1472, %v1720
  %v1722 = vpop.f32.mrb[0].mxu0
  %1723 = vmatprep.mubr.f32.mxu0 0.0
  %v1724 = vand.u32 %v1248, 4294901760
  %1725 = vmatmul.mubr.f32.gmra.mrb[0].mxu0 %v1724
  %v1726 = vpop.f32.mrb[0].mxu0
  %v1727 = vadd.f32 %v1482, %v1726
  %v1728 = vpop.f32.mrb[0].mxu0
  %1729 = vmatprep.mubr.f32.mxu0 0.0
  %v1730 = vand.u32 %v1249, 4294901760
  %1731 = vmatmul.mubr.f32.gmra.mrb[0].mxu0 %v1730
  %v1732 = vpop.f32.mrb[0].mxu0
  %v1733 = vadd.f32 %v1492, %v1732
  %v1734 = vpop.f32.mrb[0].mxu0
  %1735 = vdwg.mxu0
  %1736 = vmatprep.subr.mxu0 0.0
  %v1737 = vand.u32 %v12, 4294901760
  %v1738 = vsub.f32 %v12, %v1737
  %1739 = vmatpush1.msra.mxu0 %v1738
  %1740 = vmatprep.subr.mxu0 0.0
  %v1741 = vand.u32 %v13, 4294901760
  %v1742 = vsub.f32 %v13, %v1741
  %1743 = vmatpush1.msra.mxu0 %v1742
  %1744 = vmatprep.subr.mxu0 0.0
  %v1745 = vand.u32 %v14, 4294901760
  %v1746 = vsub.f32 %v14, %v1745
  %1747 = vmatpush1.msra.mxu0 %v1746
  %1748 = vmatprep.subr.mxu0 0.0
  %v1749 = vand.u32 %v15, 4294901760
  %v1750 = vsub.f32 %v15, %v1749
  %1751 = vmatpush1.msra.mxu0 %v1750
  %1752 = vmatprep.subr.mxu0 0.0
  %v1753 = vand.u32 %v16, 4294901760
  %v1754 = vsub.f32 %v16, %v1753
  %1755 = vmatpush1.msra.mxu0 %v1754
  %1756 = vmatprep.subr.mxu0 0.0
  %v1757 = vand.u32 %v17, 4294901760
  %v1758 = vsub.f32 %v17, %v1757
  %1759 = vmatpush1.msra.mxu0 %v1758
  %1760 = vmatprep.subr.mxu0 0.0
  %v1761 = vand.u32 %v18, 4294901760
  %v1762 = vsub.f32 %v18, %v1761
  %1763 = vmatpush1.msra.mxu0 %v1762
  %1764 = vmatprep.subr.mxu0 0.0
  %v1765 = vand.u32 %v19, 4294901760
  %v1766 = vsub.f32 %v19, %v1765
  %1767 = vmatpush1.msra.mxu0 %v1766
  %1768 = vmatprep.subr.mxu0 0.0
  %v1769 = vand.u32 %v20, 4294901760
  %v1770 = vsub.f32 %v20, %v1769
  %1771 = vmatpush1.msra.mxu0 %v1770
  %1772 = vmatprep.subr.mxu0 0.0
  %v1773 = vand.u32 %v21, 4294901760
  %v1774 = vsub.f32 %v21, %v1773
  %1775 = vmatpush1.msra.mxu0 %v1774
  %1776 = vmatprep.subr.mxu0 0.0
  %v1777 = vand.u32 %v22, 4294901760
  %v1778 = vsub.f32 %v22, %v1777
  %1779 = vmatpush1.msra.mxu0 %v1778
  %1780 = vmatprep.subr.mxu0 0.0
  %v1781 = vand.u32 %v23, 4294901760
  %v1782 = vsub.f32 %v23, %v1781
  %1783 = vmatpush1.msra.mxu0 %v1782
  %1784 = vmatprep.subr.mxu0 0.0
  %v1785 = vand.u32 %v24, 4294901760
  %v1786 = vsub.f32 %v24, %v1785
  %1787 = vmatpush1.msra.mxu0 %v1786
  %1788 = vmatprep.subr.mxu0 0.0
  %v1789 = vand.u32 %v25, 4294901760
  %v1790 = vsub.f32 %v25, %v1789
  %1791 = vmatpush1.msra.mxu0 %v1790
  %1792 = vmatprep.subr.mxu0 0.0
  %v1793 = vand.u32 %v26, 4294901760
  %v1794 = vsub.f32 %v26, %v1793
  %1795 = vmatpush1.msra.mxu0 %v1794
  %1796 = vmatprep.subr.mxu0 0.0
  %v1797 = vand.u32 %v27, 4294901760
  %v1798 = vsub.f32 %v27, %v1797
  %1799 = vmatpush1.msra.mxu0 %v1798
  %1800 = vmatprep.subr.mxu0 0.0
  %1801 = vmatpush1.msra.mxu0 0.0
  %1802 = vmatprep.subr.mxu0 0.0
  %1803 = vmatpush1.msra.mxu0 0.0
  %1804 = vmatprep.subr.mxu0 0.0
  %1805 = vmatpush1.msra.mxu0 0.0
  %1806 = vmatprep.subr.mxu0 0.0
  %1807 = vmatpush1.msra.mxu0 0.0
  %1808 = vmatprep.subr.mxu0 0.0
  %1809 = vmatpush1.msra.mxu0 0.0
  %1810 = vmatprep.subr.mxu0 0.0
  %1811 = vmatpush1.msra.mxu0 0.0
  %1812 = vmatprep.subr.mxu0 0.0
  %1813 = vmatpush1.msra.mxu0 0.0
  %1814 = vmatprep.subr.mxu0 0.0
  %1815 = vmatpush1.msra.mxu0 0.0
  %1816 = vmatprep.subr.mxu0 0.0
  %1817 = vmatpush1.msra.mxu0 0.0
  %1818 = vmatprep.subr.mxu0 0.0
  %1819 = vmatpush1.msra.mxu0 0.0
  %1820 = vmatprep.subr.mxu0 0.0
  %1821 = vmatpush1.msra.mxu0 0.0
  %1822 = vmatprep.subr.mxu0 0.0
  %1823 = vmatpush1.msra.mxu0 0.0
  %1824 = vmatprep.subr.mxu0 0.0
  %1825 = vmatpush1.msra.mxu0 0.0
  %1826 = vmatprep.subr.mxu0 0.0
  %1827 = vmatpush1.msra.mxu0 0.0
  %1828 = vmatprep.subr.mxu0 0.0
  %1829 = vmatpush1.msra.mxu0 0.0
  %1830 = vmatprep.subr.mxu0 0.0
  %1831 = vmatpush1.msra.mxu0 0.0
  %1832 = vmatprep.mubr.f32.mxu0 0.0
  %v1833 = vand.u32 %v1234, 4294901760
  %v1834 = vsub.f32 %v1234, %v1833
  %1835 = vmatmul.mubr.f32.gmra.mrb[0].mxu0 %v1834
  %v1836 = vpop.f32.mrb[0].mxu0
  %v1837 = vadd.f32 %v1643, %v1836
  %v1838 = vpop.f32.mrb[0].mxu0
  %1839 = vmatprep.mubr.f32.mxu0 0.0
  %v1840 = vand.u32 %v1235, 4294901760
  %v1841 = vsub.f32 %v1235, %v1840
  %1842 = vmatmul.mubr.f32.gmra.mrb[0].mxu0 %v1841
  %v1843 = vpop.f32.mrb[0].mxu0
  %v1844 = vadd.f32 %v1649, %v1843
  %v1845 = vpop.f32.mrb[0].mxu0
  %1846 = vmatprep.mubr.f32.mxu0 0.0
  %v1847 = vand.u32 %v1236, 4294901760
  %v1848 = vsub.f32 %v1236, %v1847
  %1849 = vmatmul.mubr.f32.gmra.mrb[0].mxu0 %v1848
  %v1850 = vpop.f32.mrb[0].mxu0
  %v1851 = vadd.f32 %v1655, %v1850
  %v1852 = vpop.f32.mrb[0].mxu0
  %1853 = vmatprep.mubr.f32.mxu0 0.0
  %v1854 = vand.u32 %v1237, 4294901760
  %v1855 = vsub.f32 %v1237, %v1854
  %1856 = vmatmul.mubr.f32.gmra.mrb[0].mxu0 %v1855
  %v1857 = vpop.f32.mrb[0].mxu0
  %v1858 = vadd.f32 %v1661, %v1857
  %v1859 = vpop.f32.mrb[0].mxu0
  %1860 = vmatprep.mubr.f32.mxu0 0.0
  %v1861 = vand.u32 %v1238, 4294901760
  %v1862 = vsub.f32 %v1238, %v1861
  %1863 = vmatmul.mubr.f32.gmra.mrb[0].mxu0 %v1862
  %v1864 = vpop.f32.mrb[0].mxu0
  %v1865 = vadd.f32 %v1667, %v1864
  %v1866 = vpop.f32.mrb[0].mxu0
  %1867 = vmatprep.mubr.f32.mxu0 0.0
  %v1868 = vand.u32 %v1239, 4294901760
  %v1869 = vsub.f32 %v1239, %v1868
  %1870 = vmatmul.mubr.f32.gmra.mrb[0].mxu0 %v1869
  %v1871 = vpop.f32.mrb[0].mxu0
  %v1872 = vadd.f32 %v1673, %v1871
  %v1873 = vpop.f32.mrb[0].mxu0
  %1874 = vmatprep.mubr.f32.mxu0 0.0
  %v1875 = vand.u32 %v1240, 4294901760
  %v1876 = vsub.f32 %v1240, %v1875
  %1877 = vmatmul.mubr.f32.gmra.mrb[0].mxu0 %v1876
  %v1878 = vpop.f32.mrb[0].mxu0
  %v1879 = vadd.f32 %v1679, %v1878
  %v1880 = vpop.f32.mrb[0].mxu0
  %1881 = vmatprep.mubr.f32.mxu0 0.0
  %v1882 = vand.u32 %v1241, 4294901760
  %v1883 = vsub.f32 %v1241, %v1882
  %1884 = vmatmul.mubr.f32.gmra.mrb[0].mxu0 %v1883
  %v1885 = vpop.f32.mrb[0].mxu0
  %v1886 = vadd.f32 %v1685, %v1885
  %v1887 = vpop.f32.mrb[0].mxu0
  %1888 = vmatprep.mubr.f32.mxu0 0.0
  %v1889 = vand.u32 %v1242, 4294901760
  %v1890 = vsub.f32 %v1242, %v1889
  %1891 = vmatmul.mubr.f32.gmra.mrb[0].mxu0 %v1890
  %v1892 = vpop.f32.mrb[0].mxu0
  %v1893 = vadd.f32 %v1691, %v1892
  %v1894 = vpop.f32.mrb[0].mxu0
  %1895 = vmatprep.mubr.f32.mxu0 0.0
  %v1896 = vand.u32 %v1243, 4294901760
  %v1897 = vsub.f32 %v1243, %v1896
  %1898 = vmatmul.mubr.f32.gmra.mrb[0].mxu0 %v1897
  %v1899 = vpop.f32.mrb[0].mxu0
  %v1900 = vadd.f32 %v1697, %v1899
  %v1901 = vpop.f32.mrb[0].mxu0
  %1902 = vmatprep.mubr.f32.mxu0 0.0
  %v1903 = vand.u32 %v1244, 4294901760
  %v1904 = vsub.f32 %v1244, %v1903
  %1905 = vmatmul.mubr.f32.gmra.mrb[0].mxu0 %v1904
  %v1906 = vpop.f32.mrb[0].mxu0
  %v1907 = vadd.f32 %v1703, %v1906
  %v1908 = vpop.f32.mrb[0].mxu0
  %1909 = vmatprep.mubr.f32.mxu0 0.0
  %v1910 = vand.u32 %v1245, 4294901760
  %v1911 = vsub.f32 %v1245, %v1910
  %1912 = vmatmul.mubr.f32.gmra.mrb[0].mxu0 %v1911
  %v1913 = vpop.f32.mrb[0].mxu0
  %v1914 = vadd.f32 %v1709, %v1913
  %v1915 = vpop.f32.mrb[0].mxu0
  %1916 = vmatprep.mubr.f32.mxu0 0.0
  %v1917 = vand.u32 %v1246, 4294901760
  %v1918 = vsub.f32 %v1246, %v1917
  %1919 = vmatmul.mubr.f32.gmra.mrb[0].mxu0 %v1918
  %v1920 = vpop.f32.mrb[0].mxu0
  %v1921 = vadd.f32 %v1715, %v1920
  %v1922 = vpop.f32.mrb[0].mxu0
  %1923 = vmatprep.mubr.f32.mxu0 0.0
  %v1924 = vand.u32 %v1247, 4294901760
  %v1925 = vsub.f32 %v1247, %v1924
  %1926 = vmatmul.mubr.f32.gmra.mrb[0].mxu0 %v1925
  %v1927 = vpop.f32.mrb[0].mxu0
  %v1928 = vadd.f32 %v1721, %v1927
  %v1929 = vpop.f32.mrb[0].mxu0
  %1930 = vmatprep.mubr.f32.mxu0 0.0
  %v1931 = vand.u32 %v1248, 4294901760
  %v1932 = vsub.f32 %v1248, %v1931
  %1933 = vmatmul.mubr.f32.gmra.mrb[0].mxu0 %v1932
  %v1934 = vpop.f32.mrb[0].mxu0
  %v1935 = vadd.f32 %v1727, %v1934
  %v1936 = vpop.f32.mrb[0].mxu0
  %1937 = vmatprep.mubr.f32.mxu0 0.0
  %v1938 = vand.u32 %v1249, 4294901760
  %v1939 = vsub.f32 %v1249, %v1938
  %1940 = vmatmul.mubr.f32.gmra.mrb[0].mxu0 %v1939
  %v1941 = vpop.f32.mrb[0].mxu0
  %v1942 = vadd.f32 %v1733, %v1941
  %v1943 = vpop.f32.mrb[0].mxu0
  %1944 = vdwg.mxu0
  %1945 = vmatprep.subr.mxu0 0.0
  %v1946 = vand.u32 %v12, 4294901760
  %1947 = vmatpush1.msra.mxu0 %v1946
  %1948 = vmatprep.subr.mxu0 0.0
  %v1949 = vand.u32 %v13, 4294901760
  %1950 = vmatpush1.msra.mxu0 %v1949
  %1951 = vmatprep.subr.mxu0 0.0
  %v1952 = vand.u32 %v14, 4294901760
  %1953 = vmatpush1.msra.mxu0 %v1952
  %1954 = vmatprep.subr.mxu0 0.0
  %v1955 = vand.u32 %v15, 4294901760
  %1956 = vmatpush1.msra.mxu0 %v1955
  %1957 = vmatprep.subr.mxu0 0.0
  %v1958 = vand.u32 %v16, 4294901760
  %1959 = vmatpush1.msra.mxu0 %v1958
  %1960 = vmatprep.subr.mxu0 0.0
  %v1961 = vand.u32 %v17, 4294901760
  %1962 = vmatpush1.msra.mxu0 %v1961
  %1963 = vmatprep.subr.mxu0 0.0
  %v1964 = vand.u32 %v18, 4294901760
  %1965 = vmatpush1.msra.mxu0 %v1964
  %1966 = vmatprep.subr.mxu0 0.0
  %v1967 = vand.u32 %v19, 4294901760
  %1968 = vmatpush1.msra.mxu0 %v1967
  %1969 = vmatprep.subr.mxu0 0.0
  %v1970 = vand.u32 %v20, 4294901760
  %1971 = vmatpush1.msra.mxu0 %v1970
  %1972 = vmatprep.subr.mxu0 0.0
  %v1973 = vand.u32 %v21, 4294901760
  %1974 = vmatpush1.msra.mxu0 %v1973
  %1975 = vmatprep.subr.mxu0 0.0
  %v1976 = vand.u32 %v22, 4294901760
  %1977 = vmatpush1.msra.mxu0 %v1976
  %1978 = vmatprep.subr.mxu0 0.0
  %v1979 = vand.u32 %v23, 4294901760
  %1980 = vmatpush1.msra.mxu0 %v1979
  %1981 = vmatprep.subr.mxu0 0.0
  %v1982 = vand.u32 %v24, 4294901760
  %1983 = vmatpush1.msra.mxu0 %v1982
  %1984 = vmatprep.subr.mxu0 0.0
  %v1985 = vand.u32 %v25, 4294901760
  %1986 = vmatpush1.msra.mxu0 %v1985
  %1987 = vmatprep.subr.mxu0 0.0
  %v1988 = vand.u32 %v26, 4294901760
  %1989 = vmatpush1.msra.mxu0 %v1988
  %1990 = vmatprep.subr.mxu0 0.0
  %v1991 = vand.u32 %v27, 4294901760
  %1992 = vmatpush1.msra.mxu0 %v1991
  %1993 = vmatprep.subr.mxu0 0.0
  %1994 = vmatpush1.msra.mxu0 0.0
  %1995 = vmatprep.subr.mxu0 0.0
  %1996 = vmatpush1.msra.mxu0 0.0
  %1997 = vmatprep.subr.mxu0 0.0
  %1998 = vmatpush1.msra.mxu0 0.0
  %1999 = vmatprep.subr.mxu0 0.0
  %2000 = vmatpush1.msra.mxu0 0.0
  %2001 = vmatprep.subr.mxu0 0.0
  %2002 = vmatpush1.msra.mxu0 0.0
  %2003 = vmatprep.subr.mxu0 0.0
  %2004 = vmatpush1.msra.mxu0 0.0
  %2005 = vmatprep.subr.mxu0 0.0
  %2006 = vmatpush1.msra.mxu0 0.0
  %2007 = vmatprep.subr.mxu0 0.0
  %2008 = vmatpush1.msra.mxu0 0.0
  %2009 = vmatprep.subr.mxu0 0.0
  %2010 = vmatpush1.msra.mxu0 0.0
  %2011 = vmatprep.subr.mxu0 0.0
  %2012 = vmatpush1.msra.mxu0 0.0
  %2013 = vmatprep.subr.mxu0 0.0
  %2014 = vmatpush1.msra.mxu0 0.0
  %2015 = vmatprep.subr.mxu0 0.0
  %2016 = vmatpush1.msra.mxu0 0.0
  %2017 = vmatprep.subr.mxu0 0.0
  %2018 = vmatpush1.msra.mxu0 0.0
  %2019 = vmatprep.subr.mxu0 0.0
  %2020 = vmatpush1.msra.mxu0 0.0
  %2021 = vmatprep.subr.mxu0 0.0
  %2022 = vmatpush1.msra.mxu0 0.0
  %2023 = vmatprep.subr.mxu0 0.0
  %2024 = vmatpush1.msra.mxu0 0.0
  %2025 = vmatprep.mubr.f32.mxu0 0.0
  %v2026 = vand.u32 %v1234, 4294901760
  %v2027 = vsub.f32 %v1234, %v2026
  %v2028 = vand.u32 %v2027, 4294901760
  %2029 = vmatmul.mubr.f32.gmra.mrb[0].mxu0 %v2028
  %v2030 = vpop.f32.mrb[0].mxu0
  %v2031 = vadd.f32 %v1837, %v2030
  %v2032 = vpop.f32.mrb[0].mxu0
  %2033 = vmatprep.mubr.f32.mxu0 0.0
  %v2034 = vand.u32 %v1235, 4294901760
  %v2035 = vsub.f32 %v1235, %v2034
  %v2036 = vand.u32 %v2035, 4294901760
  %2037 = vmatmul.mubr.f32.gmra.mrb[0].mxu0 %v2036
  %v2038 = vpop.f32.mrb[0].mxu0
  %v2039 = vadd.f32 %v1844, %v2038
  %v2040 = vpop.f32.mrb[0].mxu0
  %2041 = vmatprep.mubr.f32.mxu0 0.0
  %v2042 = vand.u32 %v1236, 4294901760
  %v2043 = vsub.f32 %v1236, %v2042
  %v2044 = vand.u32 %v2043, 4294901760
  %2045 = vmatmul.mubr.f32.gmra.mrb[0].mxu0 %v2044
  %v2046 = vpop.f32.mrb[0].mxu0
  %v2047 = vadd.f32 %v1851, %v2046
  %v2048 = vpop.f32.mrb[0].mxu0
  %2049 = vmatprep.mubr.f32.mxu0 0.0
  %v2050 = vand.u32 %v1237, 4294901760
  %v2051 = vsub.f32 %v1237, %v2050
  %v2052 = vand.u32 %v2051, 4294901760
  %2053 = vmatmul.mubr.f32.gmra.mrb[0].mxu0 %v2052
  %v2054 = vpop.f32.mrb[0].mxu0
  %v2055 = vadd.f32 %v1858, %v2054
  %v2056 = vpop.f32.mrb[0].mxu0
  %2057 = vmatprep.mubr.f32.mxu0 0.0
  %v2058 = vand.u32 %v1238, 4294901760
  %v2059 = vsub.f32 %v1238, %v2058
  %v2060 = vand.u32 %v2059, 4294901760
  %2061 = vmatmul.mubr.f32.gmra.mrb[0].mxu0 %v2060
  %v2062 = vpop.f32.mrb[0].mxu0
  %v2063 = vadd.f32 %v1865, %v2062
  %v2064 = vpop.f32.mrb[0].mxu0
  %2065 = vmatprep.mubr.f32.mxu0 0.0
  %v2066 = vand.u32 %v1239, 4294901760
  %v2067 = vsub.f32 %v1239, %v2066
  %v2068 = vand.u32 %v2067, 4294901760
  %2069 = vmatmul.mubr.f32.gmra.mrb[0].mxu0 %v2068
  %v2070 = vpop.f32.mrb[0].mxu0
  %v2071 = vadd.f32 %v1872, %v2070
  %v2072 = vpop.f32.mrb[0].mxu0
  %2073 = vmatprep.mubr.f32.mxu0 0.0
  %v2074 = vand.u32 %v1240, 4294901760
  %v2075 = vsub.f32 %v1240, %v2074
  %v2076 = vand.u32 %v2075, 4294901760
  %2077 = vmatmul.mubr.f32.gmra.mrb[0].mxu0 %v2076
  %v2078 = vpop.f32.mrb[0].mxu0
  %v2079 = vadd.f32 %v1879, %v2078
  %v2080 = vpop.f32.mrb[0].mxu0
  %2081 = vmatprep.mubr.f32.mxu0 0.0
  %v2082 = vand.u32 %v1241, 4294901760
  %v2083 = vsub.f32 %v1241, %v2082
  %v2084 = vand.u32 %v2083, 4294901760
  %2085 = vmatmul.mubr.f32.gmra.mrb[0].mxu0 %v2084
  %v2086 = vpop.f32.mrb[0].mxu0
  %v2087 = vadd.f32 %v1886, %v2086
  %v2088 = vpop.f32.mrb[0].mxu0
  %2089 = vmatprep.mubr.f32.mxu0 0.0
  %v2090 = vand.u32 %v1242, 4294901760
  %v2091 = vsub.f32 %v1242, %v2090
  %v2092 = vand.u32 %v2091, 4294901760
  %2093 = vmatmul.mubr.f32.gmra.mrb[0].mxu0 %v2092
  %v2094 = vpop.f32.mrb[0].mxu0
  %v2095 = vadd.f32 %v1893, %v2094
  %v2096 = vpop.f32.mrb[0].mxu0
  %2097 = vmatprep.mubr.f32.mxu0 0.0
  %v2098 = vand.u32 %v1243, 4294901760
  %v2099 = vsub.f32 %v1243, %v2098
  %v2100 = vand.u32 %v2099, 4294901760
  %2101 = vmatmul.mubr.f32.gmra.mrb[0].mxu0 %v2100
  %v2102 = vpop.f32.mrb[0].mxu0
  %v2103 = vadd.f32 %v1900, %v2102
  %v2104 = vpop.f32.mrb[0].mxu0
  %2105 = vmatprep.mubr.f32.mxu0 0.0
  %v2106 = vand.u32 %v1244, 4294901760
  %v2107 = vsub.f32 %v1244, %v2106
  %v2108 = vand.u32 %v2107, 4294901760
  %2109 = vmatmul.mubr.f32.gmra.mrb[0].mxu0 %v2108
  %v2110 = vpop.f32.mrb[0].mxu0
  %v2111 = vadd.f32 %v1907, %v2110
  %v2112 = vpop.f32.mrb[0].mxu0
  %2113 = vmatprep.mubr.f32.mxu0 0.0
  %v2114 = vand.u32 %v1245, 4294901760
  %v2115 = vsub.f32 %v1245, %v2114
  %v2116 = vand.u32 %v2115, 4294901760
  %2117 = vmatmul.mubr.f32.gmra.mrb[0].mxu0 %v2116
  %v2118 = vpop.f32.mrb[0].mxu0
  %v2119 = vadd.f32 %v1914, %v2118
  %v2120 = vpop.f32.mrb[0].mxu0
  %2121 = vmatprep.mubr.f32.mxu0 0.0
  %v2122 = vand.u32 %v1246, 4294901760
  %v2123 = vsub.f32 %v1246, %v2122
  %v2124 = vand.u32 %v2123, 4294901760
  %2125 = vmatmul.mubr.f32.gmra.mrb[0].mxu0 %v2124
  %v2126 = vpop.f32.mrb[0].mxu0
  %v2127 = vadd.f32 %v1921, %v2126
  %v2128 = vpop.f32.mrb[0].mxu0
  %2129 = vmatprep.mubr.f32.mxu0 0.0
  %v2130 = vand.u32 %v1247, 4294901760
  %v2131 = vsub.f32 %v1247, %v2130
  %v2132 = vand.u32 %v2131, 4294901760
  %2133 = vmatmul.mubr.f32.gmra.mrb[0].mxu0 %v2132
  %v2134 = vpop.f32.mrb[0].mxu0
  %v2135 = vadd.f32 %v1928, %v2134
  %v2136 = vpop.f32.mrb[0].mxu0
  %2137 = vmatprep.mubr.f32.mxu0 0.0
  %v2138 = vand.u32 %v1248, 4294901760
  %v2139 = vsub.f32 %v1248, %v2138
  %v2140 = vand.u32 %v2139, 4294901760
  %2141 = vmatmul.mubr.f32.gmra.mrb[0].mxu0 %v2140
  %v2142 = vpop.f32.mrb[0].mxu0
  %v2143 = vadd.f32 %v1935, %v2142
  %v2144 = vpop.f32.mrb[0].mxu0
  %2145 = vmatprep.mubr.f32.mxu0 0.0
  %v2146 = vand.u32 %v1249, 4294901760
  %v2147 = vsub.f32 %v1249, %v2146
  %v2148 = vand.u32 %v2147, 4294901760
  %2149 = vmatmul.mubr.f32.gmra.mrb[0].mxu0 %v2148
  %v2150 = vpop.f32.mrb[0].mxu0
  %v2151 = vadd.f32 %v1942, %v2150
  %v2152 = vpop.f32.mrb[0].mxu0
  %2153 = vdwg.mxu0
  %2154 = vmatprep.subr.mxu0 0.0
  %v2155 = vand.u32 %v12, 4294901760
  %v2156 = vsub.f32 %v12, %v2155
  %v2157 = vand.u32 %v2156, 4294901760
  %2158 = vmatpush1.msra.mxu0 %v2157
  %2159 = vmatprep.subr.mxu0 0.0
  %v2160 = vand.u32 %v13, 4294901760
  %v2161 = vsub.f32 %v13, %v2160
  %v2162 = vand.u32 %v2161, 4294901760
  %2163 = vmatpush1.msra.mxu0 %v2162
  %2164 = vmatprep.subr.mxu0 0.0
  %v2165 = vand.u32 %v14, 4294901760
  %v2166 = vsub.f32 %v14, %v2165
  %v2167 = vand.u32 %v2166, 4294901760
  %2168 = vmatpush1.msra.mxu0 %v2167
  %2169 = vmatprep.subr.mxu0 0.0
  %v2170 = vand.u32 %v15, 4294901760
  %v2171 = vsub.f32 %v15, %v2170
  %v2172 = vand.u32 %v2171, 4294901760
  %2173 = vmatpush1.msra.mxu0 %v2172
  %2174 = vmatprep.subr.mxu0 0.0
  %v2175 = vand.u32 %v16, 4294901760
  %v2176 = vsub.f32 %v16, %v2175
  %v2177 = vand.u32 %v2176, 4294901760
  %2178 = vmatpush1.msra.mxu0 %v2177
  %2179 = vmatprep.subr.mxu0 0.0
  %v2180 = vand.u32 %v17, 4294901760
  %v2181 = vsub.f32 %v17, %v2180
  %v2182 = vand.u32 %v2181, 4294901760
  %2183 = vmatpush1.msra.mxu0 %v2182
  %2184 = vmatprep.subr.mxu0 0.0
  %v2185 = vand.u32 %v18, 4294901760
  %v2186 = vsub.f32 %v18, %v2185
  %v2187 = vand.u32 %v2186, 4294901760
  %2188 = vmatpush1.msra.mxu0 %v2187
  %2189 = vmatprep.subr.mxu0 0.0
  %v2190 = vand.u32 %v19, 4294901760
  %v2191 = vsub.f32 %v19, %v2190
  %v2192 = vand.u32 %v2191, 4294901760
  %2193 = vmatpush1.msra.mxu0 %v2192
  %2194 = vmatprep.subr.mxu0 0.0
  %v2195 = vand.u32 %v20, 4294901760
  %v2196 = vsub.f32 %v20, %v2195
  %v2197 = vand.u32 %v2196, 4294901760
  %2198 = vmatpush1.msra.mxu0 %v2197
  %2199 = vmatprep.subr.mxu0 0.0
  %v2200 = vand.u32 %v21, 4294901760
  %v2201 = vsub.f32 %v21, %v2200
  %v2202 = vand.u32 %v2201, 4294901760
  %2203 = vmatpush1.msra.mxu0 %v2202
  %2204 = vmatprep.subr.mxu0 0.0
  %v2205 = vand.u32 %v22, 4294901760
  %v2206 = vsub.f32 %v22, %v2205
  %v2207 = vand.u32 %v2206, 4294901760
  %2208 = vmatpush1.msra.mxu0 %v2207
  %2209 = vmatprep.subr.mxu0 0.0
  %v2210 = vand.u32 %v23, 4294901760
  %v2211 = vsub.f32 %v23, %v2210
  %v2212 = vand.u32 %v2211, 4294901760
  %2213 = vmatpush1.msra.mxu0 %v2212
  %2214 = vmatprep.subr.mxu0 0.0
  %v2215 = vand.u32 %v24, 4294901760
  %v2216 = vsub.f32 %v24, %v2215
  %v2217 = vand.u32 %v2216, 4294901760
  %2218 = vmatpush1.msra.mxu0 %v2217
  %2219 = vmatprep.subr.mxu0 0.0
  %v2220 = vand.u32 %v25, 4294901760
  %v2221 = vsub.f32 %v25, %v2220
  %v2222 = vand.u32 %v2221, 4294901760
  %2223 = vmatpush1.msra.mxu0 %v2222
  %2224 = vmatprep.subr.mxu0 0.0
  %v2225 = vand.u32 %v26, 4294901760
  %v2226 = vsub.f32 %v26, %v2225
  %v2227 = vand.u32 %v2226, 4294901760
  %2228 = vmatpush1.msra.mxu0 %v2227
  %2229 = vmatprep.subr.mxu0 0.0
  %v2230 = vand.u32 %v27, 4294901760
  %v2231 = vsub.f32 %v27, %v2230
  %v2232 = vand.u32 %v2231, 4294901760
  %2233 = vmatpush1.msra.mxu0 %v2232
  %2234 = vmatprep.subr.mxu0 0.0
  %2235 = vmatpush1.msra.mxu0 0.0
  %2236 = vmatprep.subr.mxu0 0.0
  %2237 = vmatpush1.msra.mxu0 0.0
  %2238 = vmatprep.subr.mxu0 0.0
  %2239 = vmatpush1.msra.mxu0 0.0
  %2240 = vmatprep.subr.mxu0 0.0
  %2241 = vmatpush1.msra.mxu0 0.0
  %2242 = vmatprep.subr.mxu0 0.0
  %2243 = vmatpush1.msra.mxu0 0.0
  %2244 = vmatprep.subr.mxu0 0.0
  %2245 = vmatpush1.msra.mxu0 0.0
  %2246 = vmatprep.subr.mxu0 0.0
  %2247 = vmatpush1.msra.mxu0 0.0
  %2248 = vmatprep.subr.mxu0 0.0
  %2249 = vmatpush1.msra.mxu0 0.0
  %2250 = vmatprep.subr.mxu0 0.0
  %2251 = vmatpush1.msra.mxu0 0.0
  %2252 = vmatprep.subr.mxu0 0.0
  %2253 = vmatpush1.msra.mxu0 0.0
  %2254 = vmatprep.subr.mxu0 0.0
  %2255 = vmatpush1.msra.mxu0 0.0
  %2256 = vmatprep.subr.mxu0 0.0
  %2257 = vmatpush1.msra.mxu0 0.0
  %2258 = vmatprep.subr.mxu0 0.0
  %2259 = vmatpush1.msra.mxu0 0.0
  %2260 = vmatprep.subr.mxu0 0.0
  %2261 = vmatpush1.msra.mxu0 0.0
  %2262 = vmatprep.subr.mxu0 0.0
  %2263 = vmatpush1.msra.mxu0 0.0
  %2264 = vmatprep.subr.mxu0 0.0
  %2265 = vmatpush1.msra.mxu0 0.0
  %2266 = vmatprep.mubr.f32.mxu0 0.0
  %v2267 = vand.u32 %v1234, 4294901760
  %2268 = vmatmul.mubr.f32.gmra.mrb[0].mxu0 %v2267
  %v2269 = vpop.f32.mrb[0].mxu0
  %v2270 = vadd.f32 %v2031, %v2269
  %v2271 = vpop.f32.mrb[0].mxu0
  %2272 = vmatprep.mubr.f32.mxu0 0.0
  %v2273 = vand.u32 %v1235, 4294901760
  %2274 = vmatmul.mubr.f32.gmra.mrb[0].mxu0 %v2273
  %v2275 = vpop.f32.mrb[0].mxu0
  %v2276 = vadd.f32 %v2039, %v2275
  %v2277 = vpop.f32.mrb[0].mxu0
  %2278 = vmatprep.mubr.f32.mxu0 0.0
  %v2279 = vand.u32 %v1236, 4294901760
  %2280 = vmatmul.mubr.f32.gmra.mrb[0].mxu0 %v2279
  %v2281 = vpop.f32.mrb[0].mxu0
  %v2282 = vadd.f32 %v2047, %v2281
  %v2283 = vpop.f32.mrb[0].mxu0
  %2284 = vmatprep.mubr.f32.mxu0 0.0
  %v2285 = vand.u32 %v1237, 4294901760
  %2286 = vmatmul.mubr.f32.gmra.mrb[0].mxu0 %v2285
  %v2287 = vpop.f32.mrb[0].mxu0
  %v2288 = vadd.f32 %v2055, %v2287
  %v2289 = vpop.f32.mrb[0].mxu0
  %2290 = vmatprep.mubr.f32.mxu0 0.0
  %v2291 = vand.u32 %v1238, 4294901760
  %2292 = vmatmul.mubr.f32.gmra.mrb[0].mxu0 %v2291
  %v2293 = vpop.f32.mrb[0].mxu0
  %v2294 = vadd.f32 %v2063, %v2293
  %v2295 = vpop.f32.mrb[0].mxu0
  %2296 = vmatprep.mubr.f32.mxu0 0.0
  %v2297 = vand.u32 %v1239, 4294901760
  %2298 = vmatmul.mubr.f32.gmra.mrb[0].mxu0 %v2297
  %v2299 = vpop.f32.mrb[0].mxu0
  %v2300 = vadd.f32 %v2071, %v2299
  %v2301 = vpop.f32.mrb[0].mxu0
  %2302 = vmatprep.mubr.f32.mxu0 0.0
  %v2303 = vand.u32 %v1240, 4294901760
  %2304 = vmatmul.mubr.f32.gmra.mrb[0].mxu0 %v2303
  %v2305 = vpop.f32.mrb[0].mxu0
  %v2306 = vadd.f32 %v2079, %v2305
  %v2307 = vpop.f32.mrb[0].mxu0
  %2308 = vmatprep.mubr.f32.mxu0 0.0
  %v2309 = vand.u32 %v1241, 4294901760
  %2310 = vmatmul.mubr.f32.gmra.mrb[0].mxu0 %v2309
  %v2311 = vpop.f32.mrb[0].mxu0
  %v2312 = vadd.f32 %v2087, %v2311
  %v2313 = vpop.f32.mrb[0].mxu0
  %2314 = vmatprep.mubr.f32.mxu0 0.0
  %v2315 = vand.u32 %v1242, 4294901760
  %2316 = vmatmul.mubr.f32.gmra.mrb[0].mxu0 %v2315
  %v2317 = vpop.f32.mrb[0].mxu0
  %v2318 = vadd.f32 %v2095, %v2317
  %v2319 = vpop.f32.mrb[0].mxu0
  %2320 = vmatprep.mubr.f32.mxu0 0.0
  %v2321 = vand.u32 %v1243, 4294901760
  %2322 = vmatmul.mubr.f32.gmra.mrb[0].mxu0 %v2321
  %v2323 = vpop.f32.mrb[0].mxu0
  %v2324 = vadd.f32 %v2103, %v2323
  %v2325 = vpop.f32.mrb[0].mxu0
  %2326 = vmatprep.mubr.f32.mxu0 0.0
  %v2327 = vand.u32 %v1244, 4294901760
  %2328 = vmatmul.mubr.f32.gmra.mrb[0].mxu0 %v2327
  %v2329 = vpop.f32.mrb[0].mxu0
  %v2330 = vadd.f32 %v2111, %v2329
  %v2331 = vpop.f32.mrb[0].mxu0
  %2332 = vmatprep.mubr.f32.mxu0 0.0
  %v2333 = vand.u32 %v1245, 4294901760
  %2334 = vmatmul.mubr.f32.gmra.mrb[0].mxu0 %v2333
  %v2335 = vpop.f32.mrb[0].mxu0
  %v2336 = vadd.f32 %v2119, %v2335
  %v2337 = vpop.f32.mrb[0].mxu0
  %2338 = vmatprep.mubr.f32.mxu0 0.0
  %v2339 = vand.u32 %v1246, 4294901760
  %2340 = vmatmul.mubr.f32.gmra.mrb[0].mxu0 %v2339
  %v2341 = vpop.f32.mrb[0].mxu0
  %v2342 = vadd.f32 %v2127, %v2341
  %v2343 = vpop.f32.mrb[0].mxu0
  %2344 = vmatprep.mubr.f32.mxu0 0.0
  %v2345 = vand.u32 %v1247, 4294901760
  %2346 = vmatmul.mubr.f32.gmra.mrb[0].mxu0 %v2345
  %v2347 = vpop.f32.mrb[0].mxu0
  %v2348 = vadd.f32 %v2135, %v2347
  %v2349 = vpop.f32.mrb[0].mxu0
  %2350 = vmatprep.mubr.f32.mxu0 0.0
  %v2351 = vand.u32 %v1248, 4294901760
  %2352 = vmatmul.mubr.f32.gmra.mrb[0].mxu0 %v2351
  %v2353 = vpop.f32.mrb[0].mxu0
  %v2354 = vadd.f32 %v2143, %v2353
  %v2355 = vpop.f32.mrb[0].mxu0
  %2356 = vmatprep.mubr.f32.mxu0 0.0
  %v2357 = vand.u32 %v1249, 4294901760
  %2358 = vmatmul.mubr.f32.gmra.mrb[0].mxu0 %v2357
  %v2359 = vpop.f32.mrb[0].mxu0
  %v2360 = vadd.f32 %v2151, %v2359
  %v2361 = vpop.f32.mrb[0].mxu0
  %2362 = vdwg.mxu0
  %2363 = vmatprep.subr.mxu0 0.0
  %v2364 = vand.u32 %v12, 4294901760
  %2365 = vmatpush1.msra.mxu0 %v2364
  %2366 = vmatprep.subr.mxu0 0.0
  %v2367 = vand.u32 %v13, 4294901760
  %2368 = vmatpush1.msra.mxu0 %v2367
  %2369 = vmatprep.subr.mxu0 0.0
  %v2370 = vand.u32 %v14, 4294901760
  %2371 = vmatpush1.msra.mxu0 %v2370
  %2372 = vmatprep.subr.mxu0 0.0
  %v2373 = vand.u32 %v15, 4294901760
  %2374 = vmatpush1.msra.mxu0 %v2373
  %2375 = vmatprep.subr.mxu0 0.0
  %v2376 = vand.u32 %v16, 4294901760
  %2377 = vmatpush1.msra.mxu0 %v2376
  %2378 = vmatprep.subr.mxu0 0.0
  %v2379 = vand.u32 %v17, 4294901760
  %2380 = vmatpush1.msra.mxu0 %v2379
  %2381 = vmatprep.subr.mxu0 0.0
  %v2382 = vand.u32 %v18, 4294901760
  %2383 = vmatpush1.msra.mxu0 %v2382
  %2384 = vmatprep.subr.mxu0 0.0
  %v2385 = vand.u32 %v19, 4294901760
  %2386 = vmatpush1.msra.mxu0 %v2385
  %2387 = vmatprep.subr.mxu0 0.0
  %v2388 = vand.u32 %v20, 4294901760
  %2389 = vmatpush1.msra.mxu0 %v2388
  %2390 = vmatprep.subr.mxu0 0.0
  %v2391 = vand.u32 %v21, 4294901760
  %2392 = vmatpush1.msra.mxu0 %v2391
  %2393 = vmatprep.subr.mxu0 0.0
  %v2394 = vand.u32 %v22, 4294901760
  %2395 = vmatpush1.msra.mxu0 %v2394
  %2396 = vmatprep.subr.mxu0 0.0
  %v2397 = vand.u32 %v23, 4294901760
  %2398 = vmatpush1.msra.mxu0 %v2397
  %2399 = vmatprep.subr.mxu0 0.0
  %v2400 = vand.u32 %v24, 4294901760
  %2401 = vmatpush1.msra.mxu0 %v2400
  %2402 = vmatprep.subr.mxu0 0.0
  %v2403 = vand.u32 %v25, 4294901760
  %2404 = vmatpush1.msra.mxu0 %v2403
  %2405 = vmatprep.subr.mxu0 0.0
  %v2406 = vand.u32 %v26, 4294901760
  %2407 = vmatpush1.msra.mxu0 %v2406
  %2408 = vmatprep.subr.mxu0 0.0
  %v2409 = vand.u32 %v27, 4294901760
  %2410 = vmatpush1.msra.mxu0 %v2409
  %2411 = vmatprep.subr.mxu0 0.0
  %2412 = vmatpush1.msra.mxu0 0.0
  %2413 = vmatprep.subr.mxu0 0.0
  %2414 = vmatpush1.msra.mxu0 0.0
  %2415 = vmatprep.subr.mxu0 0.0
  %2416 = vmatpush1.msra.mxu0 0.0
  %2417 = vmatprep.subr.mxu0 0.0
  %2418 = vmatpush1.msra.mxu0 0.0
  %2419 = vmatprep.subr.mxu0 0.0
  %2420 = vmatpush1.msra.mxu0 0.0
  %2421 = vmatprep.subr.mxu0 0.0
  %2422 = vmatpush1.msra.mxu0 0.0
  %2423 = vmatprep.subr.mxu0 0.0
  %2424 = vmatpush1.msra.mxu0 0.0
  %2425 = vmatprep.subr.mxu0 0.0
  %2426 = vmatpush1.msra.mxu0 0.0
  %2427 = vmatprep.subr.mxu0 0.0
  %2428 = vmatpush1.msra.mxu0 0.0
  %2429 = vmatprep.subr.mxu0 0.0
  %2430 = vmatpush1.msra.mxu0 0.0
  %2431 = vmatprep.subr.mxu0 0.0
  %2432 = vmatpush1.msra.mxu0 0.0
  %2433 = vmatprep.subr.mxu0 0.0
  %2434 = vmatpush1.msra.mxu0 0.0
  %2435 = vmatprep.subr.mxu0 0.0
  %2436 = vmatpush1.msra.mxu0 0.0
  %2437 = vmatprep.subr.mxu0 0.0
  %2438 = vmatpush1.msra.mxu0 0.0
  %2439 = vmatprep.subr.mxu0 0.0
  %2440 = vmatpush1.msra.mxu0 0.0
  %2441 = vmatprep.subr.mxu0 0.0
  %2442 = vmatpush1.msra.mxu0 0.0
  %2443 = vmatprep.mubr.f32.mxu0 0.0
  %v2444 = vand.u32 %v1234, 4294901760
  %2445 = vmatmul.mubr.f32.gmra.mrb[0].mxu0 %v2444
  %v2446 = vpop.f32.mrb[0].mxu0
  %v2447 = vadd.f32 %v2270, %v2446
  %v2448 = vpop.f32.mrb[0].mxu0
  %2449 = vmatprep.mubr.f32.mxu0 0.0
  %v2450 = vand.u32 %v1235, 4294901760
  %2451 = vmatmul.mubr.f32.gmra.mrb[0].mxu0 %v2450
  %v2452 = vpop.f32.mrb[0].mxu0
  %v2453 = vadd.f32 %v2276, %v2452
  %v2454 = vpop.f32.mrb[0].mxu0
  %2455 = vmatprep.mubr.f32.mxu0 0.0
  %v2456 = vand.u32 %v1236, 4294901760
  %2457 = vmatmul.mubr.f32.gmra.mrb[0].mxu0 %v2456
  %v2458 = vpop.f32.mrb[0].mxu0
  %v2459 = vadd.f32 %v2282, %v2458
  %v2460 = vpop.f32.mrb[0].mxu0
  %2461 = vmatprep.mubr.f32.mxu0 0.0
  %v2462 = vand.u32 %v1237, 4294901760
  %2463 = vmatmul.mubr.f32.gmra.mrb[0].mxu0 %v2462
  %v2464 = vpop.f32.mrb[0].mxu0
  %v2465 = vadd.f32 %v2288, %v2464
  %v2466 = vpop.f32.mrb[0].mxu0
  %2467 = vmatprep.mubr.f32.mxu0 0.0
  %v2468 = vand.u32 %v1238, 4294901760
  %2469 = vmatmul.mubr.f32.gmra.mrb[0].mxu0 %v2468
  %v2470 = vpop.f32.mrb[0].mxu0
  %v2471 = vadd.f32 %v2294, %v2470
  %v2472 = vpop.f32.mrb[0].mxu0
  %2473 = vmatprep.mubr.f32.mxu0 0.0
  %v2474 = vand.u32 %v1239, 4294901760
  %2475 = vmatmul.mubr.f32.gmra.mrb[0].mxu0 %v2474
  %v2476 = vpop.f32.mrb[0].mxu0
  %v2477 = vadd.f32 %v2300, %v2476
  %v2478 = vpop.f32.mrb[0].mxu0
  %2479 = vmatprep.mubr.f32.mxu0 0.0
  %v2480 = vand.u32 %v1240, 4294901760
  %2481 = vmatmul.mubr.f32.gmra.mrb[0].mxu0 %v2480
  %v2482 = vpop.f32.mrb[0].mxu0
  %v2483 = vadd.f32 %v2306, %v2482
  %v2484 = vpop.f32.mrb[0].mxu0
  %2485 = vmatprep.mubr.f32.mxu0 0.0
  %v2486 = vand.u32 %v1241, 4294901760
  %2487 = vmatmul.mubr.f32.gmra.mrb[0].mxu0 %v2486
  %v2488 = vpop.f32.mrb[0].mxu0
  %v2489 = vadd.f32 %v2312, %v2488
  %v2490 = vpop.f32.mrb[0].mxu0
  %2491 = vmatprep.mubr.f32.mxu0 0.0
  %v2492 = vand.u32 %v1242, 4294901760
  %2493 = vmatmul.mubr.f32.gmra.mrb[0].mxu0 %v2492
  %v2494 = vpop.f32.mrb[0].mxu0
  %v2495 = vadd.f32 %v2318, %v2494
  %v2496 = vpop.f32.mrb[0].mxu0
  %2497 = vmatprep.mubr.f32.mxu0 0.0
  %v2498 = vand.u32 %v1243, 4294901760
  %2499 = vmatmul.mubr.f32.gmra.mrb[0].mxu0 %v2498
  %v2500 = vpop.f32.mrb[0].mxu0
  %v2501 = vadd.f32 %v2324, %v2500
  %v2502 = vpop.f32.mrb[0].mxu0
  %2503 = vmatprep.mubr.f32.mxu0 0.0
  %v2504 = vand.u32 %v1244, 4294901760
  %2505 = vmatmul.mubr.f32.gmra.mrb[0].mxu0 %v2504
  %v2506 = vpop.f32.mrb[0].mxu0
  %v2507 = vadd.f32 %v2330, %v2506
  %v2508 = vpop.f32.mrb[0].mxu0
  %2509 = vmatprep.mubr.f32.mxu0 0.0
  %v2510 = vand.u32 %v1245, 4294901760
  %2511 = vmatmul.mubr.f32.gmra.mrb[0].mxu0 %v2510
  %v2512 = vpop.f32.mrb[0].mxu0
  %v2513 = vadd.f32 %v2336, %v2512
  %v2514 = vpop.f32.mrb[0].mxu0
  %2515 = vmatprep.mubr.f32.mxu0 0.0
  %v2516 = vand.u32 %v1246, 4294901760
  %2517 = vmatmul.mubr.f32.gmra.mrb[0].mxu0 %v2516
  %v2518 = vpop.f32.mrb[0].mxu0
  %v2519 = vadd.f32 %v2342, %v2518
  %v2520 = vpop.f32.mrb[0].mxu0
  %2521 = vmatprep.mubr.f32.mxu0 0.0
  %v2522 = vand.u32 %v1247, 4294901760
  %2523 = vmatmul.mubr.f32.gmra.mrb[0].mxu0 %v2522
  %v2524 = vpop.f32.mrb[0].mxu0
  %v2525 = vadd.f32 %v2348, %v2524
  %v2526 = vpop.f32.mrb[0].mxu0
  %2527 = vmatprep.mubr.f32.mxu0 0.0
  %v2528 = vand.u32 %v1248, 4294901760
  %2529 = vmatmul.mubr.f32.gmra.mrb[0].mxu0 %v2528
  %v2530 = vpop.f32.mrb[0].mxu0
  %v2531 = vadd.f32 %v2354, %v2530
  %v2532 = vpop.f32.mrb[0].mxu0
  %2533 = vmatprep.mubr.f32.mxu0 0.0
  %v2534 = vand.u32 %v1249, 4294901760
  %2535 = vmatmul.mubr.f32.gmra.mrb[0].mxu0 %v2534
  %v2536 = vpop.f32.mrb[0].mxu0
  %v2537 = vadd.f32 %v2360, %v2536
  %v2538 = vpop.f32.mrb[0].mxu0
  %2539 = vdwg.mxu0
  %v2540 = vxor.u32 %v2447, 2147483648
  %v2541 = vxor.u32 %v2453, 2147483648
  %v2542 = vxor.u32 %v2459, 2147483648
  %v2543 = vxor.u32 %v2465, 2147483648
  %v2544 = vxor.u32 %v2471, 2147483648
  %v2545 = vxor.u32 %v2477, 2147483648
  %v2546 = vxor.u32 %v2483, 2147483648
  %v2547 = vxor.u32 %v2489, 2147483648
  %v2548 = vxor.u32 %v2495, 2147483648
  %v2549 = vxor.u32 %v2501, 2147483648
  %v2550 = vxor.u32 %v2507, 2147483648
  %v2551 = vxor.u32 %v2513, 2147483648
  %v2552 = vxor.u32 %v2519, 2147483648
  %v2553 = vxor.u32 %v2525, 2147483648
  %v2554 = vxor.u32 %v2531, 2147483648
  %v2555 = vxor.u32 %v2537, 2147483648
  %v2556 = vmul.f32 %v2540, 1.442695
  %v2557 = vpow.pop %v2556
  %v2558 = vmul.f32 %v2541, 1.442695
  %v2559 = vpow.pop %v2558
  %v2560 = vmul.f32 %v2542, 1.442695
  %v2561 = vpow.pop %v2560
  %v2562 = vmul.f32 %v2543, 1.442695
  %v2563 = vpow.pop %v2562
  %v2564 = vmul.f32 %v2544, 1.442695
  %v2565 = vpow.pop %v2564
  %v2566 = vmul.f32 %v2545, 1.442695
  %v2567 = vpow.pop %v2566
  %v2568 = vmul.f32 %v2546, 1.442695
  %v2569 = vpow.pop %v2568
  %v2570 = vmul.f32 %v2547, 1.442695
  %v2571 = vpow.pop %v2570
  %v2572 = vmul.f32 %v2548, 1.442695
  %v2573 = vpow.pop %v2572
  %v2574 = vmul.f32 %v2549, 1.442695
  %v2575 = vpow.pop %v2574
  %v2576 = vmul.f32 %v2550, 1.442695
  %v2577 = vpow.pop %v2576
  %v2578 = vmul.f32 %v2551, 1.442695
  %v2579 = vpow.pop %v2578
  %v2580 = vmul.f32 %v2552, 1.442695
  %v2581 = vpow.pop %v2580
  %v2582 = vmul.f32 %v2553, 1.442695
  %v2583 = vpow.pop %v2582
  %v2584 = vmul.f32 %v2554, 1.442695
  %v2585 = vpow.pop %v2584
  %v2586 = vmul.f32 %v2555, 1.442695
  %v2587 = vpow.pop %v2586
  %v2588 = vadd.f32 %v2557, 1.0
  %v2589 = vadd.f32 %v2559, 1.0
  %v2590 = vadd.f32 %v2561, 1.0
  %v2591 = vadd.f32 %v2563, 1.0
  %v2592 = vadd.f32 %v2565, 1.0
  %v2593 = vadd.f32 %v2567, 1.0
  %v2594 = vadd.f32 %v2569, 1.0
  %v2595 = vadd.f32 %v2571, 1.0
  %v2596 = vadd.f32 %v2573, 1.0
  %v2597 = vadd.f32 %v2575, 1.0
  %v2598 = vadd.f32 %v2577, 1.0
  %v2599 = vadd.f32 %v2579, 1.0
  %v2600 = vadd.f32 %v2581, 1.0
  %v2601 = vadd.f32 %v2583, 1.0
  %v2602 = vadd.f32 %v2585, 1.0
  %v2603 = vadd.f32 %v2587, 1.0
  %v2604 = vrcp.pop %v2588
  %v2605 = vmul.f32 1.0, %v2604
  %v2606 = vrcp.pop %v2589
  %v2607 = vmul.f32 1.0, %v2606
  %v2608 = vrcp.pop %v2590
  %v2609 = vmul.f32 1.0, %v2608
  %v2610 = vrcp.pop %v2591
  %v2611 = vmul.f32 1.0, %v2610
  %v2612 = vrcp.pop %v2592
  %v2613 = vmul.f32 1.0, %v2612
  %v2614 = vrcp.pop %v2593
  %v2615 = vmul.f32 1.0, %v2614
  %v2616 = vrcp.pop %v2594
  %v2617 = vmul.f32 1.0, %v2616
  %v2618 = vrcp.pop %v2595
  %v2619 = vmul.f32 1.0, %v2618
  %v2620 = vrcp.pop %v2596
  %v2621 = vmul.f32 1.0, %v2620
  %v2622 = vrcp.pop %v2597
  %v2623 = vmul.f32 1.0, %v2622
  %v2624 = vrcp.pop %v2598
  %v2625 = vmul.f32 1.0, %v2624
  %v2626 = vrcp.pop %v2599
  %v2627 = vmul.f32 1.0, %v2626
  %v2628 = vrcp.pop %v2600
  %v2629 = vmul.f32 1.0, %v2628
  %v2630 = vrcp.pop %v2601
  %v2631 = vmul.f32 1.0, %v2630
  %v2632 = vrcp.pop %v2602
  %v2633 = vmul.f32 1.0, %v2632
  %v2634 = vrcp.pop %v2603
  %v2635 = vmul.f32 1.0, %v2634
  %v2636 = vlaneseq
  %v2637 = vshrl.u32 %v2636, 7
  %v2638 = vsub.s32 0, %v2637
  %v2639 = vrot.slane %v45, %v2638
  %2640 = vmatprep.subr.mxu0 0.0
  %v2641 = vand.u32 %v28, 4294901760
  %2642 = vmatpush1.msra.mxu0 %v2641
  %2643 = vmatprep.subr.mxu0 0.0
  %v2644 = vand.u32 %v29, 4294901760
  %2645 = vmatpush1.msra.mxu0 %v2644
  %2646 = vmatprep.subr.mxu0 0.0
  %v2647 = vand.u32 %v30, 4294901760
  %2648 = vmatpush1.msra.mxu0 %v2647
  %2649 = vmatprep.subr.mxu0 0.0
  %v2650 = vand.u32 %v31, 4294901760
  %2651 = vmatpush1.msra.mxu0 %v2650
  %2652 = vmatprep.subr.mxu0 0.0
  %v2653 = vand.u32 %v32, 4294901760
  %2654 = vmatpush1.msra.mxu0 %v2653
  %2655 = vmatprep.subr.mxu0 0.0
  %v2656 = vand.u32 %v33, 4294901760
  %2657 = vmatpush1.msra.mxu0 %v2656
  %2658 = vmatprep.subr.mxu0 0.0
  %v2659 = vand.u32 %v34, 4294901760
  %2660 = vmatpush1.msra.mxu0 %v2659
  %2661 = vmatprep.subr.mxu0 0.0
  %v2662 = vand.u32 %v35, 4294901760
  %2663 = vmatpush1.msra.mxu0 %v2662
  %2664 = vmatprep.subr.mxu0 0.0
  %v2665 = vand.u32 %v36, 4294901760
  %2666 = vmatpush1.msra.mxu0 %v2665
  %2667 = vmatprep.subr.mxu0 0.0
  %v2668 = vand.u32 %v37, 4294901760
  %2669 = vmatpush1.msra.mxu0 %v2668
  %2670 = vmatprep.subr.mxu0 0.0
  %v2671 = vand.u32 %v38, 4294901760
  %2672 = vmatpush1.msra.mxu0 %v2671
  %2673 = vmatprep.subr.mxu0 0.0
  %v2674 = vand.u32 %v39, 4294901760
  %2675 = vmatpush1.msra.mxu0 %v2674
  %2676 = vmatprep.subr.mxu0 0.0
  %v2677 = vand.u32 %v40, 4294901760
  %2678 = vmatpush1.msra.mxu0 %v2677
  %2679 = vmatprep.subr.mxu0 0.0
  %v2680 = vand.u32 %v41, 4294901760
  %2681 = vmatpush1.msra.mxu0 %v2680
  %2682 = vmatprep.subr.mxu0 0.0
  %v2683 = vand.u32 %v42, 4294901760
  %2684 = vmatpush1.msra.mxu0 %v2683
  %2685 = vmatprep.subr.mxu0 0.0
  %v2686 = vand.u32 %v43, 4294901760
  %2687 = vmatpush1.msra.mxu0 %v2686
  %2688 = vmatprep.subr.mxu0 0.0
  %2689 = vmatpush1.msra.mxu0 0.0
  %2690 = vmatprep.subr.mxu0 0.0
  %2691 = vmatpush1.msra.mxu0 0.0
  %2692 = vmatprep.subr.mxu0 0.0
  %2693 = vmatpush1.msra.mxu0 0.0
  %2694 = vmatprep.subr.mxu0 0.0
  %2695 = vmatpush1.msra.mxu0 0.0
  %2696 = vmatprep.subr.mxu0 0.0
  %2697 = vmatpush1.msra.mxu0 0.0
  %2698 = vmatprep.subr.mxu0 0.0
  %2699 = vmatpush1.msra.mxu0 0.0
  %2700 = vmatprep.subr.mxu0 0.0
  %2701 = vmatpush1.msra.mxu0 0.0
  %2702 = vmatprep.subr.mxu0 0.0
  %2703 = vmatpush1.msra.mxu0 0.0
  %2704 = vmatprep.subr.mxu0 0.0
  %2705 = vmatpush1.msra.mxu0 0.0
  %2706 = vmatprep.subr.mxu0 0.0
  %2707 = vmatpush1.msra.mxu0 0.0
  %2708 = vmatprep.subr.mxu0 0.0
  %2709 = vmatpush1.msra.mxu0 0.0
  %2710 = vmatprep.subr.mxu0 0.0
  %2711 = vmatpush1.msra.mxu0 0.0
  %2712 = vmatprep.subr.mxu0 0.0
  %2713 = vmatpush1.msra.mxu0 0.0
  %2714 = vmatprep.subr.mxu0 0.0
  %2715 = vmatpush1.msra.mxu0 0.0
  %2716 = vmatprep.subr.mxu0 0.0
  %2717 = vmatpush1.msra.mxu0 0.0
  %2718 = vmatprep.subr.mxu0 0.0
  %2719 = vmatpush1.msra.mxu0 0.0
  %2720 = vmatprep.mubr.f32.mxu0 0.0
  %v2721 = vand.u32 %v2605, 4294901760
  %v2722 = vsub.f32 %v2605, %v2721
  %v2723 = vand.u32 %v2722, 4294901760
  %v2724 = vsub.f32 %v2722, %v2723
  %v2725 = vand.u32 %v2724, 4294901760
  %2726 = vmatmul.mubr.f32.gmra.mrb[0].mxu0 %v2725
  %v2727 = vpop.f32.mrb[0].mxu0
  %v2728 = vadd.f32 %v2639, %v2727
  %v2729 = vpop.f32.mrb[0].mxu0
  %2730 = vmatprep.mubr.f32.mxu0 0.0
  %v2731 = vand.u32 %v2607, 4294901760
  %v2732 = vsub.f32 %v2607, %v2731
  %v2733 = vand.u32 %v2732, 4294901760
  %v2734 = vsub.f32 %v2732, %v2733
  %v2735 = vand.u32 %v2734, 4294901760
  %2736 = vmatmul.mubr.f32.gmra.mrb[0].mxu0 %v2735
  %v2737 = vpop.f32.mrb[0].mxu0
  %v2738 = vadd.f32 %v2639, %v2737
  %v2739 = vpop.f32.mrb[0].mxu0
  %2740 = vmatprep.mubr.f32.mxu0 0.0
  %v2741 = vand.u32 %v2609, 4294901760
  %v2742 = vsub.f32 %v2609, %v2741
  %v2743 = vand.u32 %v2742, 4294901760
  %v2744 = vsub.f32 %v2742, %v2743
  %v2745 = vand.u32 %v2744, 4294901760
  %2746 = vmatmul.mubr.f32.gmra.mrb[0].mxu0 %v2745
  %v2747 = vpop.f32.mrb[0].mxu0
  %v2748 = vadd.f32 %v2639, %v2747
  %v2749 = vpop.f32.mrb[0].mxu0
  %2750 = vmatprep.mubr.f32.mxu0 0.0
  %v2751 = vand.u32 %v2611, 4294901760
  %v2752 = vsub.f32 %v2611, %v2751
  %v2753 = vand.u32 %v2752, 4294901760
  %v2754 = vsub.f32 %v2752, %v2753
  %v2755 = vand.u32 %v2754, 4294901760
  %2756 = vmatmul.mubr.f32.gmra.mrb[0].mxu0 %v2755
  %v2757 = vpop.f32.mrb[0].mxu0
  %v2758 = vadd.f32 %v2639, %v2757
  %v2759 = vpop.f32.mrb[0].mxu0
  %2760 = vmatprep.mubr.f32.mxu0 0.0
  %v2761 = vand.u32 %v2613, 4294901760
  %v2762 = vsub.f32 %v2613, %v2761
  %v2763 = vand.u32 %v2762, 4294901760
  %v2764 = vsub.f32 %v2762, %v2763
  %v2765 = vand.u32 %v2764, 4294901760
  %2766 = vmatmul.mubr.f32.gmra.mrb[0].mxu0 %v2765
  %v2767 = vpop.f32.mrb[0].mxu0
  %v2768 = vadd.f32 %v2639, %v2767
  %v2769 = vpop.f32.mrb[0].mxu0
  %2770 = vmatprep.mubr.f32.mxu0 0.0
  %v2771 = vand.u32 %v2615, 4294901760
  %v2772 = vsub.f32 %v2615, %v2771
  %v2773 = vand.u32 %v2772, 4294901760
  %v2774 = vsub.f32 %v2772, %v2773
  %v2775 = vand.u32 %v2774, 4294901760
  %2776 = vmatmul.mubr.f32.gmra.mrb[0].mxu0 %v2775
  %v2777 = vpop.f32.mrb[0].mxu0
  %v2778 = vadd.f32 %v2639, %v2777
  %v2779 = vpop.f32.mrb[0].mxu0
  %2780 = vmatprep.mubr.f32.mxu0 0.0
  %v2781 = vand.u32 %v2617, 4294901760
  %v2782 = vsub.f32 %v2617, %v2781
  %v2783 = vand.u32 %v2782, 4294901760
  %v2784 = vsub.f32 %v2782, %v2783
  %v2785 = vand.u32 %v2784, 4294901760
  %2786 = vmatmul.mubr.f32.gmra.mrb[0].mxu0 %v2785
  %v2787 = vpop.f32.mrb[0].mxu0
  %v2788 = vadd.f32 %v2639, %v2787
  %v2789 = vpop.f32.mrb[0].mxu0
  %2790 = vmatprep.mubr.f32.mxu0 0.0
  %v2791 = vand.u32 %v2619, 4294901760
  %v2792 = vsub.f32 %v2619, %v2791
  %v2793 = vand.u32 %v2792, 4294901760
  %v2794 = vsub.f32 %v2792, %v2793
  %v2795 = vand.u32 %v2794, 4294901760
  %2796 = vmatmul.mubr.f32.gmra.mrb[0].mxu0 %v2795
  %v2797 = vpop.f32.mrb[0].mxu0
  %v2798 = vadd.f32 %v2639, %v2797
  %v2799 = vpop.f32.mrb[0].mxu0
  %2800 = vmatprep.mubr.f32.mxu0 0.0
  %v2801 = vand.u32 %v2621, 4294901760
  %v2802 = vsub.f32 %v2621, %v2801
  %v2803 = vand.u32 %v2802, 4294901760
  %v2804 = vsub.f32 %v2802, %v2803
  %v2805 = vand.u32 %v2804, 4294901760
  %2806 = vmatmul.mubr.f32.gmra.mrb[0].mxu0 %v2805
  %v2807 = vpop.f32.mrb[0].mxu0
  %v2808 = vadd.f32 %v2639, %v2807
  %v2809 = vpop.f32.mrb[0].mxu0
  %2810 = vmatprep.mubr.f32.mxu0 0.0
  %v2811 = vand.u32 %v2623, 4294901760
  %v2812 = vsub.f32 %v2623, %v2811
  %v2813 = vand.u32 %v2812, 4294901760
  %v2814 = vsub.f32 %v2812, %v2813
  %v2815 = vand.u32 %v2814, 4294901760
  %2816 = vmatmul.mubr.f32.gmra.mrb[0].mxu0 %v2815
  %v2817 = vpop.f32.mrb[0].mxu0
  %v2818 = vadd.f32 %v2639, %v2817
  %v2819 = vpop.f32.mrb[0].mxu0
  %2820 = vmatprep.mubr.f32.mxu0 0.0
  %v2821 = vand.u32 %v2625, 4294901760
  %v2822 = vsub.f32 %v2625, %v2821
  %v2823 = vand.u32 %v2822, 4294901760
  %v2824 = vsub.f32 %v2822, %v2823
  %v2825 = vand.u32 %v2824, 4294901760
  %2826 = vmatmul.mubr.f32.gmra.mrb[0].mxu0 %v2825
  %v2827 = vpop.f32.mrb[0].mxu0
  %v2828 = vadd.f32 %v2639, %v2827
  %v2829 = vpop.f32.mrb[0].mxu0
  %2830 = vmatprep.mubr.f32.mxu0 0.0
  %v2831 = vand.u32 %v2627, 4294901760
  %v2832 = vsub.f32 %v2627, %v2831
  %v2833 = vand.u32 %v2832, 4294901760
  %v2834 = vsub.f32 %v2832, %v2833
  %v2835 = vand.u32 %v2834, 4294901760
  %2836 = vmatmul.mubr.f32.gmra.mrb[0].mxu0 %v2835
  %v2837 = vpop.f32.mrb[0].mxu0
  %v2838 = vadd.f32 %v2639, %v2837
  %v2839 = vpop.f32.mrb[0].mxu0
  %2840 = vmatprep.mubr.f32.mxu0 0.0
  %v2841 = vand.u32 %v2629, 4294901760
  %v2842 = vsub.f32 %v2629, %v2841
  %v2843 = vand.u32 %v2842, 4294901760
  %v2844 = vsub.f32 %v2842, %v2843
  %v2845 = vand.u32 %v2844, 4294901760
  %2846 = vmatmul.mubr.f32.gmra.mrb[0].mxu0 %v2845
  %v2847 = vpop.f32.mrb[0].mxu0
  %v2848 = vadd.f32 %v2639, %v2847
  %v2849 = vpop.f32.mrb[0].mxu0
  %2850 = vmatprep.mubr.f32.mxu0 0.0
  %v2851 = vand.u32 %v2631, 4294901760
  %v2852 = vsub.f32 %v2631, %v2851
  %v2853 = vand.u32 %v2852, 4294901760
  %v2854 = vsub.f32 %v2852, %v2853
  %v2855 = vand.u32 %v2854, 4294901760
  %2856 = vmatmul.mubr.f32.gmra.mrb[0].mxu0 %v2855
  %v2857 = vpop.f32.mrb[0].mxu0
  %v2858 = vadd.f32 %v2639, %v2857
  %v2859 = vpop.f32.mrb[0].mxu0
  %2860 = vmatprep.mubr.f32.mxu0 0.0
  %v2861 = vand.u32 %v2633, 4294901760
  %v2862 = vsub.f32 %v2633, %v2861
  %v2863 = vand.u32 %v2862, 4294901760
  %v2864 = vsub.f32 %v2862, %v2863
  %v2865 = vand.u32 %v2864, 4294901760
  %2866 = vmatmul.mubr.f32.gmra.mrb[0].mxu0 %v2865
  %v2867 = vpop.f32.mrb[0].mxu0
  %v2868 = vadd.f32 %v2639, %v2867
  %v2869 = vpop.f32.mrb[0].mxu0
  %2870 = vmatprep.mubr.f32.mxu0 0.0
  %v2871 = vand.u32 %v2635, 4294901760
  %v2872 = vsub.f32 %v2635, %v2871
  %v2873 = vand.u32 %v2872, 4294901760
  %v2874 = vsub.f32 %v2872, %v2873
  %v2875 = vand.u32 %v2874, 4294901760
  %2876 = vmatmul.mubr.f32.gmra.mrb[0].mxu0 %v2875
  %v2877 = vpop.f32.mrb[0].mxu0
  %v2878 = vadd.f32 %v2639, %v2877
  %v2879 = vpop.f32.mrb[0].mxu0
  %2880 = vdwg.mxu0
  %2881 = vmatprep.subr.mxu0 0.0
  %v2882 = vand.u32 %v28, 4294901760
  %v2883 = vsub.f32 %v28, %v2882
  %v2884 = vand.u32 %v2883, 4294901760
  %v2885 = vsub.f32 %v2883, %v2884
  %v2886 = vand.u32 %v2885, 4294901760
  %2887 = vmatpush1.msra.mxu0 %v2886
  %2888 = vmatprep.subr.mxu0 0.0
  %v2889 = vand.u32 %v29, 4294901760
  %v2890 = vsub.f32 %v29, %v2889
  %v2891 = vand.u32 %v2890, 4294901760
  %v2892 = vsub.f32 %v2890, %v2891
  %v2893 = vand.u32 %v2892, 4294901760
  %2894 = vmatpush1.msra.mxu0 %v2893
  %2895 = vmatprep.subr.mxu0 0.0
  %v2896 = vand.u32 %v30, 4294901760
  %v2897 = vsub.f32 %v30, %v2896
  %v2898 = vand.u32 %v2897, 4294901760
  %v2899 = vsub.f32 %v2897, %v2898
  %v2900 = vand.u32 %v2899, 4294901760
  %2901 = vmatpush1.msra.mxu0 %v2900
  %2902 = vmatprep.subr.mxu0 0.0
  %v2903 = vand.u32 %v31, 4294901760
  %v2904 = vsub.f32 %v31, %v2903
  %v2905 = vand.u32 %v2904, 4294901760
  %v2906 = vsub.f32 %v2904, %v2905
  %v2907 = vand.u32 %v2906, 4294901760
  %2908 = vmatpush1.msra.mxu0 %v2907
  %2909 = vmatprep.subr.mxu0 0.0
  %v2910 = vand.u32 %v32, 4294901760
  %v2911 = vsub.f32 %v32, %v2910
  %v2912 = vand.u32 %v2911, 4294901760
  %v2913 = vsub.f32 %v2911, %v2912
  %v2914 = vand.u32 %v2913, 4294901760
  %2915 = vmatpush1.msra.mxu0 %v2914
  %2916 = vmatprep.subr.mxu0 0.0
  %v2917 = vand.u32 %v33, 4294901760
  %v2918 = vsub.f32 %v33, %v2917
  %v2919 = vand.u32 %v2918, 4294901760
  %v2920 = vsub.f32 %v2918, %v2919
  %v2921 = vand.u32 %v2920, 4294901760
  %2922 = vmatpush1.msra.mxu0 %v2921
  %2923 = vmatprep.subr.mxu0 0.0
  %v2924 = vand.u32 %v34, 4294901760
  %v2925 = vsub.f32 %v34, %v2924
  %v2926 = vand.u32 %v2925, 4294901760
  %v2927 = vsub.f32 %v2925, %v2926
  %v2928 = vand.u32 %v2927, 4294901760
  %2929 = vmatpush1.msra.mxu0 %v2928
  %2930 = vmatprep.subr.mxu0 0.0
  %v2931 = vand.u32 %v35, 4294901760
  %v2932 = vsub.f32 %v35, %v2931
  %v2933 = vand.u32 %v2932, 4294901760
  %v2934 = vsub.f32 %v2932, %v2933
  %v2935 = vand.u32 %v2934, 4294901760
  %2936 = vmatpush1.msra.mxu0 %v2935
  %2937 = vmatprep.subr.mxu0 0.0
  %v2938 = vand.u32 %v36, 4294901760
  %v2939 = vsub.f32 %v36, %v2938
  %v2940 = vand.u32 %v2939, 4294901760
  %v2941 = vsub.f32 %v2939, %v2940
  %v2942 = vand.u32 %v2941, 4294901760
  %2943 = vmatpush1.msra.mxu0 %v2942
  %2944 = vmatprep.subr.mxu0 0.0
  %v2945 = vand.u32 %v37, 4294901760
  %v2946 = vsub.f32 %v37, %v2945
  %v2947 = vand.u32 %v2946, 4294901760
  %v2948 = vsub.f32 %v2946, %v2947
  %v2949 = vand.u32 %v2948, 4294901760
  %2950 = vmatpush1.msra.mxu0 %v2949
  %2951 = vmatprep.subr.mxu0 0.0
  %v2952 = vand.u32 %v38, 4294901760
  %v2953 = vsub.f32 %v38, %v2952
  %v2954 = vand.u32 %v2953, 4294901760
  %v2955 = vsub.f32 %v2953, %v2954
  %v2956 = vand.u32 %v2955, 4294901760
  %2957 = vmatpush1.msra.mxu0 %v2956
  %2958 = vmatprep.subr.mxu0 0.0
  %v2959 = vand.u32 %v39, 4294901760
  %v2960 = vsub.f32 %v39, %v2959
  %v2961 = vand.u32 %v2960, 4294901760
  %v2962 = vsub.f32 %v2960, %v2961
  %v2963 = vand.u32 %v2962, 4294901760
  %2964 = vmatpush1.msra.mxu0 %v2963
  %2965 = vmatprep.subr.mxu0 0.0
  %v2966 = vand.u32 %v40, 4294901760
  %v2967 = vsub.f32 %v40, %v2966
  %v2968 = vand.u32 %v2967, 4294901760
  %v2969 = vsub.f32 %v2967, %v2968
  %v2970 = vand.u32 %v2969, 4294901760
  %2971 = vmatpush1.msra.mxu0 %v2970
  %2972 = vmatprep.subr.mxu0 0.0
  %v2973 = vand.u32 %v41, 4294901760
  %v2974 = vsub.f32 %v41, %v2973
  %v2975 = vand.u32 %v2974, 4294901760
  %v2976 = vsub.f32 %v2974, %v2975
  %v2977 = vand.u32 %v2976, 4294901760
  %2978 = vmatpush1.msra.mxu0 %v2977
  %2979 = vmatprep.subr.mxu0 0.0
  %v2980 = vand.u32 %v42, 4294901760
  %v2981 = vsub.f32 %v42, %v2980
  %v2982 = vand.u32 %v2981, 4294901760
  %v2983 = vsub.f32 %v2981, %v2982
  %v2984 = vand.u32 %v2983, 4294901760
  %2985 = vmatpush1.msra.mxu0 %v2984
  %2986 = vmatprep.subr.mxu0 0.0
  %v2987 = vand.u32 %v43, 4294901760
  %v2988 = vsub.f32 %v43, %v2987
  %v2989 = vand.u32 %v2988, 4294901760
  %v2990 = vsub.f32 %v2988, %v2989
  %v2991 = vand.u32 %v2990, 4294901760
  %2992 = vmatpush1.msra.mxu0 %v2991
  %2993 = vmatprep.subr.mxu0 0.0
  %2994 = vmatpush1.msra.mxu0 0.0
  %2995 = vmatprep.subr.mxu0 0.0
  %2996 = vmatpush1.msra.mxu0 0.0
  %2997 = vmatprep.subr.mxu0 0.0
  %2998 = vmatpush1.msra.mxu0 0.0
  %2999 = vmatprep.subr.mxu0 0.0
  %3000 = vmatpush1.msra.mxu0 0.0
  %3001 = vmatprep.subr.mxu0 0.0
  %3002 = vmatpush1.msra.mxu0 0.0
  %3003 = vmatprep.subr.mxu0 0.0
  %3004 = vmatpush1.msra.mxu0 0.0
  %3005 = vmatprep.subr.mxu0 0.0
  %3006 = vmatpush1.msra.mxu0 0.0
  %3007 = vmatprep.subr.mxu0 0.0
  %3008 = vmatpush1.msra.mxu0 0.0
  %3009 = vmatprep.subr.mxu0 0.0
  %3010 = vmatpush1.msra.mxu0 0.0
  %3011 = vmatprep.subr.mxu0 0.0
  %3012 = vmatpush1.msra.mxu0 0.0
  %3013 = vmatprep.subr.mxu0 0.0
  %3014 = vmatpush1.msra.mxu0 0.0
  %3015 = vmatprep.subr.mxu0 0.0
  %3016 = vmatpush1.msra.mxu0 0.0
  %3017 = vmatprep.subr.mxu0 0.0
  %3018 = vmatpush1.msra.mxu0 0.0
  %3019 = vmatprep.subr.mxu0 0.0
  %3020 = vmatpush1.msra.mxu0 0.0
  %3021 = vmatprep.subr.mxu0 0.0
  %3022 = vmatpush1.msra.mxu0 0.0
  %3023 = vmatprep.subr.mxu0 0.0
  %3024 = vmatpush1.msra.mxu0 0.0
  %3025 = vmatprep.mubr.f32.mxu0 0.0
  %v3026 = vand.u32 %v2605, 4294901760
  %3027 = vmatmul.mubr.f32.gmra.mrb[0].mxu0 %v3026
  %v3028 = vpop.f32.mrb[0].mxu0
  %v3029 = vadd.f32 %v2728, %v3028
  %v3030 = vpop.f32.mrb[0].mxu0
  %3031 = vmatprep.mubr.f32.mxu0 0.0
  %v3032 = vand.u32 %v2607, 4294901760
  %3033 = vmatmul.mubr.f32.gmra.mrb[0].mxu0 %v3032
  %v3034 = vpop.f32.mrb[0].mxu0
  %v3035 = vadd.f32 %v2738, %v3034
  %v3036 = vpop.f32.mrb[0].mxu0
  %3037 = vmatprep.mubr.f32.mxu0 0.0
  %v3038 = vand.u32 %v2609, 4294901760
  %3039 = vmatmul.mubr.f32.gmra.mrb[0].mxu0 %v3038
  %v3040 = vpop.f32.mrb[0].mxu0
  %v3041 = vadd.f32 %v2748, %v3040
  %v3042 = vpop.f32.mrb[0].mxu0
  %3043 = vmatprep.mubr.f32.mxu0 0.0
  %v3044 = vand.u32 %v2611, 4294901760
  %3045 = vmatmul.mubr.f32.gmra.mrb[0].mxu0 %v3044
  %v3046 = vpop.f32.mrb[0].mxu0
  %v3047 = vadd.f32 %v2758, %v3046
  %v3048 = vpop.f32.mrb[0].mxu0
  %3049 = vmatprep.mubr.f32.mxu0 0.0
  %v3050 = vand.u32 %v2613, 4294901760
  %3051 = vmatmul.mubr.f32.gmra.mrb[0].mxu0 %v3050
  %v3052 = vpop.f32.mrb[0].mxu0
  %v3053 = vadd.f32 %v2768, %v3052
  %v3054 = vpop.f32.mrb[0].mxu0
  %3055 = vmatprep.mubr.f32.mxu0 0.0
  %v3056 = vand.u32 %v2615, 4294901760
  %3057 = vmatmul.mubr.f32.gmra.mrb[0].mxu0 %v3056
  %v3058 = vpop.f32.mrb[0].mxu0
  %v3059 = vadd.f32 %v2778, %v3058
  %v3060 = vpop.f32.mrb[0].mxu0
  %3061 = vmatprep.mubr.f32.mxu0 0.0
  %v3062 = vand.u32 %v2617, 4294901760
  %3063 = vmatmul.mubr.f32.gmra.mrb[0].mxu0 %v3062
  %v3064 = vpop.f32.mrb[0].mxu0
  %v3065 = vadd.f32 %v2788, %v3064
  %v3066 = vpop.f32.mrb[0].mxu0
  %3067 = vmatprep.mubr.f32.mxu0 0.0
  %v3068 = vand.u32 %v2619, 4294901760
  %3069 = vmatmul.mubr.f32.gmra.mrb[0].mxu0 %v3068
  %v3070 = vpop.f32.mrb[0].mxu0
  %v3071 = vadd.f32 %v2798, %v3070
  %v3072 = vpop.f32.mrb[0].mxu0
  %3073 = vmatprep.mubr.f32.mxu0 0.0
  %v3074 = vand.u32 %v2621, 4294901760
  %3075 = vmatmul.mubr.f32.gmra.mrb[0].mxu0 %v3074
  %v3076 = vpop.f32.mrb[0].mxu0
  %v3077 = vadd.f32 %v2808, %v3076
  %v3078 = vpop.f32.mrb[0].mxu0
  %3079 = vmatprep.mubr.f32.mxu0 0.0
  %v3080 = vand.u32 %v2623, 4294901760
  %3081 = vmatmul.mubr.f32.gmra.mrb[0].mxu0 %v3080
  %v3082 = vpop.f32.mrb[0].mxu0
  %v3083 = vadd.f32 %v2818, %v3082
  %v3084 = vpop.f32.mrb[0].mxu0
  %3085 = vmatprep.mubr.f32.mxu0 0.0
  %v3086 = vand.u32 %v2625, 4294901760
  %3087 = vmatmul.mubr.f32.gmra.mrb[0].mxu0 %v3086
  %v3088 = vpop.f32.mrb[0].mxu0
  %v3089 = vadd.f32 %v2828, %v3088
  %v3090 = vpop.f32.mrb[0].mxu0
  %3091 = vmatprep.mubr.f32.mxu0 0.0
  %v3092 = vand.u32 %v2627, 4294901760
  %3093 = vmatmul.mubr.f32.gmra.mrb[0].mxu0 %v3092
  %v3094 = vpop.f32.mrb[0].mxu0
  %v3095 = vadd.f32 %v2838, %v3094
  %v3096 = vpop.f32.mrb[0].mxu0
  %3097 = vmatprep.mubr.f32.mxu0 0.0
  %v3098 = vand.u32 %v2629, 4294901760
  %3099 = vmatmul.mubr.f32.gmra.mrb[0].mxu0 %v3098
  %v3100 = vpop.f32.mrb[0].mxu0
  %v3101 = vadd.f32 %v2848, %v3100
  %v3102 = vpop.f32.mrb[0].mxu0
  %3103 = vmatprep.mubr.f32.mxu0 0.0
  %v3104 = vand.u32 %v2631, 4294901760
  %3105 = vmatmul.mubr.f32.gmra.mrb[0].mxu0 %v3104
  %v3106 = vpop.f32.mrb[0].mxu0
  %v3107 = vadd.f32 %v2858, %v3106
  %v3108 = vpop.f32.mrb[0].mxu0
  %3109 = vmatprep.mubr.f32.mxu0 0.0
  %v3110 = vand.u32 %v2633, 4294901760
  %3111 = vmatmul.mubr.f32.gmra.mrb[0].mxu0 %v3110
  %v3112 = vpop.f32.mrb[0].mxu0
  %v3113 = vadd.f32 %v2868, %v3112
  %v3114 = vpop.f32.mrb[0].mxu0
  %3115 = vmatprep.mubr.f32.mxu0 0.0
  %v3116 = vand.u32 %v2635, 4294901760
  %3117 = vmatmul.mubr.f32.gmra.mrb[0].mxu0 %v3116
  %v3118 = vpop.f32.mrb[0].mxu0
  %v3119 = vadd.f32 %v2878, %v3118
  %v3120 = vpop.f32.mrb[0].mxu0
  %3121 = vdwg.mxu0
  %3122 = vmatprep.subr.mxu0 0.0
  %v3123 = vand.u32 %v28, 4294901760
  %v3124 = vsub.f32 %v28, %v3123
  %3125 = vmatpush1.msra.mxu0 %v3124
  %3126 = vmatprep.subr.mxu0 0.0
  %v3127 = vand.u32 %v29, 4294901760
  %v3128 = vsub.f32 %v29, %v3127
  %3129 = vmatpush1.msra.mxu0 %v3128
  %3130 = vmatprep.subr.mxu0 0.0
  %v3131 = vand.u32 %v30, 4294901760
  %v3132 = vsub.f32 %v30, %v3131
  %3133 = vmatpush1.msra.mxu0 %v3132
  %3134 = vmatprep.subr.mxu0 0.0
  %v3135 = vand.u32 %v31, 4294901760
  %v3136 = vsub.f32 %v31, %v3135
  %3137 = vmatpush1.msra.mxu0 %v3136
  %3138 = vmatprep.subr.mxu0 0.0
  %v3139 = vand.u32 %v32, 4294901760
  %v3140 = vsub.f32 %v32, %v3139
  %3141 = vmatpush1.msra.mxu0 %v3140
  %3142 = vmatprep.subr.mxu0 0.0
  %v3143 = vand.u32 %v33, 4294901760
  %v3144 = vsub.f32 %v33, %v3143
  %3145 = vmatpush1.msra.mxu0 %v3144
  %3146 = vmatprep.subr.mxu0 0.0
  %v3147 = vand.u32 %v34, 4294901760
  %v3148 = vsub.f32 %v34, %v3147
  %3149 = vmatpush1.msra.mxu0 %v3148
  %3150 = vmatprep.subr.mxu0 0.0
  %v3151 = vand.u32 %v35, 4294901760
  %v3152 = vsub.f32 %v35, %v3151
  %3153 = vmatpush1.msra.mxu0 %v3152
  %3154 = vmatprep.subr.mxu0 0.0
  %v3155 = vand.u32 %v36, 4294901760
  %v3156 = vsub.f32 %v36, %v3155
  %3157 = vmatpush1.msra.mxu0 %v3156
  %3158 = vmatprep.subr.mxu0 0.0
  %v3159 = vand.u32 %v37, 4294901760
  %v3160 = vsub.f32 %v37, %v3159
  %3161 = vmatpush1.msra.mxu0 %v3160
  %3162 = vmatprep.subr.mxu0 0.0
  %v3163 = vand.u32 %v38, 4294901760
  %v3164 = vsub.f32 %v38, %v3163
  %3165 = vmatpush1.msra.mxu0 %v3164
  %3166 = vmatprep.subr.mxu0 0.0
  %v3167 = vand.u32 %v39, 4294901760
  %v3168 = vsub.f32 %v39, %v3167
  %3169 = vmatpush1.msra.mxu0 %v3168
  %3170 = vmatprep.subr.mxu0 0.0
  %v3171 = vand.u32 %v40, 4294901760
  %v3172 = vsub.f32 %v40, %v3171
  %3173 = vmatpush1.msra.mxu0 %v3172
  %3174 = vmatprep.subr.mxu0 0.0
  %v3175 = vand.u32 %v41, 4294901760
  %v3176 = vsub.f32 %v41, %v3175
  %3177 = vmatpush1.msra.mxu0 %v3176
  %3178 = vmatprep.subr.mxu0 0.0
  %v3179 = vand.u32 %v42, 4294901760
  %v3180 = vsub.f32 %v42, %v3179
  %3181 = vmatpush1.msra.mxu0 %v3180
  %3182 = vmatprep.subr.mxu0 0.0
  %v3183 = vand.u32 %v43, 4294901760
  %v3184 = vsub.f32 %v43, %v3183
  %3185 = vmatpush1.msra.mxu0 %v3184
  %3186 = vmatprep.subr.mxu0 0.0
  %3187 = vmatpush1.msra.mxu0 0.0
  %3188 = vmatprep.subr.mxu0 0.0
  %3189 = vmatpush1.msra.mxu0 0.0
  %3190 = vmatprep.subr.mxu0 0.0
  %3191 = vmatpush1.msra.mxu0 0.0
  %3192 = vmatprep.subr.mxu0 0.0
  %3193 = vmatpush1.msra.mxu0 0.0
  %3194 = vmatprep.subr.mxu0 0.0
  %3195 = vmatpush1.msra.mxu0 0.0
  %3196 = vmatprep.subr.mxu0 0.0
  %3197 = vmatpush1.msra.mxu0 0.0
  %3198 = vmatprep.subr.mxu0 0.0
  %3199 = vmatpush1.msra.mxu0 0.0
  %3200 = vmatprep.subr.mxu0 0.0
  %3201 = vmatpush1.msra.mxu0 0.0
  %3202 = vmatprep.subr.mxu0 0.0
  %3203 = vmatpush1.msra.mxu0 0.0
  %3204 = vmatprep.subr.mxu0 0.0
  %3205 = vmatpush1.msra.mxu0 0.0
  %3206 = vmatprep.subr.mxu0 0.0
  %3207 = vmatpush1.msra.mxu0 0.0
  %3208 = vmatprep.subr.mxu0 0.0
  %3209 = vmatpush1.msra.mxu0 0.0
  %3210 = vmatprep.subr.mxu0 0.0
  %3211 = vmatpush1.msra.mxu0 0.0
  %3212 = vmatprep.subr.mxu0 0.0
  %3213 = vmatpush1.msra.mxu0 0.0
  %3214 = vmatprep.subr.mxu0 0.0
  %3215 = vmatpush1.msra.mxu0 0.0
  %3216 = vmatprep.subr.mxu0 0.0
  %3217 = vmatpush1.msra.mxu0 0.0
  %3218 = vmatprep.mubr.f32.mxu0 0.0
  %v3219 = vand.u32 %v2605, 4294901760
  %v3220 = vsub.f32 %v2605, %v3219
  %3221 = vmatmul.mubr.f32.gmra.mrb[0].mxu0 %v3220
  %v3222 = vpop.f32.mrb[0].mxu0
  %v3223 = vadd.f32 %v3029, %v3222
  %v3224 = vpop.f32.mrb[0].mxu0
  %3225 = vmatprep.mubr.f32.mxu0 0.0
  %v3226 = vand.u32 %v2607, 4294901760
  %v3227 = vsub.f32 %v2607, %v3226
  %3228 = vmatmul.mubr.f32.gmra.mrb[0].mxu0 %v3227
  %v3229 = vpop.f32.mrb[0].mxu0
  %v3230 = vadd.f32 %v3035, %v3229
  %v3231 = vpop.f32.mrb[0].mxu0
  %3232 = vmatprep.mubr.f32.mxu0 0.0
  %v3233 = vand.u32 %v2609, 4294901760
  %v3234 = vsub.f32 %v2609, %v3233
  %3235 = vmatmul.mubr.f32.gmra.mrb[0].mxu0 %v3234
  %v3236 = vpop.f32.mrb[0].mxu0
  %v3237 = vadd.f32 %v3041, %v3236
  %v3238 = vpop.f32.mrb[0].mxu0
  %3239 = vmatprep.mubr.f32.mxu0 0.0
  %v3240 = vand.u32 %v2611, 4294901760
  %v3241 = vsub.f32 %v2611, %v3240
  %3242 = vmatmul.mubr.f32.gmra.mrb[0].mxu0 %v3241
  %v3243 = vpop.f32.mrb[0].mxu0
  %v3244 = vadd.f32 %v3047, %v3243
  %v3245 = vpop.f32.mrb[0].mxu0
  %3246 = vmatprep.mubr.f32.mxu0 0.0
  %v3247 = vand.u32 %v2613, 4294901760
  %v3248 = vsub.f32 %v2613, %v3247
  %3249 = vmatmul.mubr.f32.gmra.mrb[0].mxu0 %v3248
  %v3250 = vpop.f32.mrb[0].mxu0
  %v3251 = vadd.f32 %v3053, %v3250
  %v3252 = vpop.f32.mrb[0].mxu0
  %3253 = vmatprep.mubr.f32.mxu0 0.0
  %v3254 = vand.u32 %v2615, 4294901760
  %v3255 = vsub.f32 %v2615, %v3254
  %3256 = vmatmul.mubr.f32.gmra.mrb[0].mxu0 %v3255
  %v3257 = vpop.f32.mrb[0].mxu0
  %v3258 = vadd.f32 %v3059, %v3257
  %v3259 = vpop.f32.mrb[0].mxu0
  %3260 = vmatprep.mubr.f32.mxu0 0.0
  %v3261 = vand.u32 %v2617, 4294901760
  %v3262 = vsub.f32 %v2617, %v3261
  %3263 = vmatmul.mubr.f32.gmra.mrb[0].mxu0 %v3262
  %v3264 = vpop.f32.mrb[0].mxu0
  %v3265 = vadd.f32 %v3065, %v3264
  %v3266 = vpop.f32.mrb[0].mxu0
  %3267 = vmatprep.mubr.f32.mxu0 0.0
  %v3268 = vand.u32 %v2619, 4294901760
  %v3269 = vsub.f32 %v2619, %v3268
  %3270 = vmatmul.mubr.f32.gmra.mrb[0].mxu0 %v3269
  %v3271 = vpop.f32.mrb[0].mxu0
  %v3272 = vadd.f32 %v3071, %v3271
  %v3273 = vpop.f32.mrb[0].mxu0
  %3274 = vmatprep.mubr.f32.mxu0 0.0
  %v3275 = vand.u32 %v2621, 4294901760
  %v3276 = vsub.f32 %v2621, %v3275
  %3277 = vmatmul.mubr.f32.gmra.mrb[0].mxu0 %v3276
  %v3278 = vpop.f32.mrb[0].mxu0
  %v3279 = vadd.f32 %v3077, %v3278
  %v3280 = vpop.f32.mrb[0].mxu0
  %3281 = vmatprep.mubr.f32.mxu0 0.0
  %v3282 = vand.u32 %v2623, 4294901760
  %v3283 = vsub.f32 %v2623, %v3282
  %3284 = vmatmul.mubr.f32.gmra.mrb[0].mxu0 %v3283
  %v3285 = vpop.f32.mrb[0].mxu0
  %v3286 = vadd.f32 %v3083, %v3285
  %v3287 = vpop.f32.mrb[0].mxu0
  %3288 = vmatprep.mubr.f32.mxu0 0.0
  %v3289 = vand.u32 %v2625, 4294901760
  %v3290 = vsub.f32 %v2625, %v3289
  %3291 = vmatmul.mubr.f32.gmra.mrb[0].mxu0 %v3290
  %v3292 = vpop.f32.mrb[0].mxu0
  %v3293 = vadd.f32 %v3089, %v3292
  %v3294 = vpop.f32.mrb[0].mxu0
  %3295 = vmatprep.mubr.f32.mxu0 0.0
  %v3296 = vand.u32 %v2627, 4294901760
  %v3297 = vsub.f32 %v2627, %v3296
  %3298 = vmatmul.mubr.f32.gmra.mrb[0].mxu0 %v3297
  %v3299 = vpop.f32.mrb[0].mxu0
  %v3300 = vadd.f32 %v3095, %v3299
  %v3301 = vpop.f32.mrb[0].mxu0
  %3302 = vmatprep.mubr.f32.mxu0 0.0
  %v3303 = vand.u32 %v2629, 4294901760
  %v3304 = vsub.f32 %v2629, %v3303
  %3305 = vmatmul.mubr.f32.gmra.mrb[0].mxu0 %v3304
  %v3306 = vpop.f32.mrb[0].mxu0
  %v3307 = vadd.f32 %v3101, %v3306
  %v3308 = vpop.f32.mrb[0].mxu0
  %3309 = vmatprep.mubr.f32.mxu0 0.0
  %v3310 = vand.u32 %v2631, 4294901760
  %v3311 = vsub.f32 %v2631, %v3310
  %3312 = vmatmul.mubr.f32.gmra.mrb[0].mxu0 %v3311
  %v3313 = vpop.f32.mrb[0].mxu0
  %v3314 = vadd.f32 %v3107, %v3313
  %v3315 = vpop.f32.mrb[0].mxu0
  %3316 = vmatprep.mubr.f32.mxu0 0.0
  %v3317 = vand.u32 %v2633, 4294901760
  %v3318 = vsub.f32 %v2633, %v3317
  %3319 = vmatmul.mubr.f32.gmra.mrb[0].mxu0 %v3318
  %v3320 = vpop.f32.mrb[0].mxu0
  %v3321 = vadd.f32 %v3113, %v3320
  %v3322 = vpop.f32.mrb[0].mxu0
  %3323 = vmatprep.mubr.f32.mxu0 0.0
  %v3324 = vand.u32 %v2635, 4294901760
  %v3325 = vsub.f32 %v2635, %v3324
  %3326 = vmatmul.mubr.f32.gmra.mrb[0].mxu0 %v3325
  %v3327 = vpop.f32.mrb[0].mxu0
  %v3328 = vadd.f32 %v3119, %v3327
  %v3329 = vpop.f32.mrb[0].mxu0
  %3330 = vdwg.mxu0
  %3331 = vmatprep.subr.mxu0 0.0
  %v3332 = vand.u32 %v28, 4294901760
  %3333 = vmatpush1.msra.mxu0 %v3332
  %3334 = vmatprep.subr.mxu0 0.0
  %v3335 = vand.u32 %v29, 4294901760
  %3336 = vmatpush1.msra.mxu0 %v3335
  %3337 = vmatprep.subr.mxu0 0.0
  %v3338 = vand.u32 %v30, 4294901760
  %3339 = vmatpush1.msra.mxu0 %v3338
  %3340 = vmatprep.subr.mxu0 0.0
  %v3341 = vand.u32 %v31, 4294901760
  %3342 = vmatpush1.msra.mxu0 %v3341
  %3343 = vmatprep.subr.mxu0 0.0
  %v3344 = vand.u32 %v32, 4294901760
  %3345 = vmatpush1.msra.mxu0 %v3344
  %3346 = vmatprep.subr.mxu0 0.0
  %v3347 = vand.u32 %v33, 4294901760
  %3348 = vmatpush1.msra.mxu0 %v3347
  %3349 = vmatprep.subr.mxu0 0.0
  %v3350 = vand.u32 %v34, 4294901760
  %3351 = vmatpush1.msra.mxu0 %v3350
  %3352 = vmatprep.subr.mxu0 0.0
  %v3353 = vand.u32 %v35, 4294901760
  %3354 = vmatpush1.msra.mxu0 %v3353
  %3355 = vmatprep.subr.mxu0 0.0
  %v3356 = vand.u32 %v36, 4294901760
  %3357 = vmatpush1.msra.mxu0 %v3356
  %3358 = vmatprep.subr.mxu0 0.0
  %v3359 = vand.u32 %v37, 4294901760
  %3360 = vmatpush1.msra.mxu0 %v3359
  %3361 = vmatprep.subr.mxu0 0.0
  %v3362 = vand.u32 %v38, 4294901760
  %3363 = vmatpush1.msra.mxu0 %v3362
  %3364 = vmatprep.subr.mxu0 0.0
  %v3365 = vand.u32 %v39, 4294901760
  %3366 = vmatpush1.msra.mxu0 %v3365
  %3367 = vmatprep.subr.mxu0 0.0
  %v3368 = vand.u32 %v40, 4294901760
  %3369 = vmatpush1.msra.mxu0 %v3368
  %3370 = vmatprep.subr.mxu0 0.0
  %v3371 = vand.u32 %v41, 4294901760
  %3372 = vmatpush1.msra.mxu0 %v3371
  %3373 = vmatprep.subr.mxu0 0.0
  %v3374 = vand.u32 %v42, 4294901760
  %3375 = vmatpush1.msra.mxu0 %v3374
  %3376 = vmatprep.subr.mxu0 0.0
  %v3377 = vand.u32 %v43, 4294901760
  %3378 = vmatpush1.msra.mxu0 %v3377
  %3379 = vmatprep.subr.mxu0 0.0
  %3380 = vmatpush1.msra.mxu0 0.0
  %3381 = vmatprep.subr.mxu0 0.0
  %3382 = vmatpush1.msra.mxu0 0.0
  %3383 = vmatprep.subr.mxu0 0.0
  %3384 = vmatpush1.msra.mxu0 0.0
  %3385 = vmatprep.subr.mxu0 0.0
  %3386 = vmatpush1.msra.mxu0 0.0
  %3387 = vmatprep.subr.mxu0 0.0
  %3388 = vmatpush1.msra.mxu0 0.0
  %3389 = vmatprep.subr.mxu0 0.0
  %3390 = vmatpush1.msra.mxu0 0.0
  %3391 = vmatprep.subr.mxu0 0.0
  %3392 = vmatpush1.msra.mxu0 0.0
  %3393 = vmatprep.subr.mxu0 0.0
  %3394 = vmatpush1.msra.mxu0 0.0
  %3395 = vmatprep.subr.mxu0 0.0
  %3396 = vmatpush1.msra.mxu0 0.0
  %3397 = vmatprep.subr.mxu0 0.0
  %3398 = vmatpush1.msra.mxu0 0.0
  %3399 = vmatprep.subr.mxu0 0.0
  %3400 = vmatpush1.msra.mxu0 0.0
  %3401 = vmatprep.subr.mxu0 0.0
  %3402 = vmatpush1.msra.mxu0 0.0
  %3403 = vmatprep.subr.mxu0 0.0
  %3404 = vmatpush1.msra.mxu0 0.0
  %3405 = vmatprep.subr.mxu0 0.0
  %3406 = vmatpush1.msra.mxu0 0.0
  %3407 = vmatprep.subr.mxu0 0.0
  %3408 = vmatpush1.msra.mxu0 0.0
  %3409 = vmatprep.subr.mxu0 0.0
  %3410 = vmatpush1.msra.mxu0 0.0
  %3411 = vmatprep.mubr.f32.mxu0 0.0
  %v3412 = vand.u32 %v2605, 4294901760
  %v3413 = vsub.f32 %v2605, %v3412
  %v3414 = vand.u32 %v3413, 4294901760
  %3415 = vmatmul.mubr.f32.gmra.mrb[0].mxu0 %v3414
  %v3416 = vpop.f32.mrb[0].mxu0
  %v3417 = vadd.f32 %v3223, %v3416
  %v3418 = vpop.f32.mrb[0].mxu0
  %3419 = vmatprep.mubr.f32.mxu0 0.0
  %v3420 = vand.u32 %v2607, 4294901760
  %v3421 = vsub.f32 %v2607, %v3420
  %v3422 = vand.u32 %v3421, 4294901760
  %3423 = vmatmul.mubr.f32.gmra.mrb[0].mxu0 %v3422
  %v3424 = vpop.f32.mrb[0].mxu0
  %v3425 = vadd.f32 %v3230, %v3424
  %v3426 = vpop.f32.mrb[0].mxu0
  %3427 = vmatprep.mubr.f32.mxu0 0.0
  %v3428 = vand.u32 %v2609, 4294901760
  %v3429 = vsub.f32 %v2609, %v3428
  %v3430 = vand.u32 %v3429, 4294901760
  %3431 = vmatmul.mubr.f32.gmra.mrb[0].mxu0 %v3430
  %v3432 = vpop.f32.mrb[0].mxu0
  %v3433 = vadd.f32 %v3237, %v3432
  %v3434 = vpop.f32.mrb[0].mxu0
  %3435 = vmatprep.mubr.f32.mxu0 0.0
  %v3436 = vand.u32 %v2611, 4294901760
  %v3437 = vsub.f32 %v2611, %v3436
  %v3438 = vand.u32 %v3437, 4294901760
  %3439 = vmatmul.mubr.f32.gmra.mrb[0].mxu0 %v3438
  %v3440 = vpop.f32.mrb[0].mxu0
  %v3441 = vadd.f32 %v3244, %v3440
  %v3442 = vpop.f32.mrb[0].mxu0
  %3443 = vmatprep.mubr.f32.mxu0 0.0
  %v3444 = vand.u32 %v2613, 4294901760
  %v3445 = vsub.f32 %v2613, %v3444
  %v3446 = vand.u32 %v3445, 4294901760
  %3447 = vmatmul.mubr.f32.gmra.mrb[0].mxu0 %v3446
  %v3448 = vpop.f32.mrb[0].mxu0
  %v3449 = vadd.f32 %v3251, %v3448
  %v3450 = vpop.f32.mrb[0].mxu0
  %3451 = vmatprep.mubr.f32.mxu0 0.0
  %v3452 = vand.u32 %v2615, 4294901760
  %v3453 = vsub.f32 %v2615, %v3452
  %v3454 = vand.u32 %v3453, 4294901760
  %3455 = vmatmul.mubr.f32.gmra.mrb[0].mxu0 %v3454
  %v3456 = vpop.f32.mrb[0].mxu0
  %v3457 = vadd.f32 %v3258, %v3456
  %v3458 = vpop.f32.mrb[0].mxu0
  %3459 = vmatprep.mubr.f32.mxu0 0.0
  %v3460 = vand.u32 %v2617, 4294901760
  %v3461 = vsub.f32 %v2617, %v3460
  %v3462 = vand.u32 %v3461, 4294901760
  %3463 = vmatmul.mubr.f32.gmra.mrb[0].mxu0 %v3462
  %v3464 = vpop.f32.mrb[0].mxu0
  %v3465 = vadd.f32 %v3265, %v3464
  %v3466 = vpop.f32.mrb[0].mxu0
  %3467 = vmatprep.mubr.f32.mxu0 0.0
  %v3468 = vand.u32 %v2619, 4294901760
  %v3469 = vsub.f32 %v2619, %v3468
  %v3470 = vand.u32 %v3469, 4294901760
  %3471 = vmatmul.mubr.f32.gmra.mrb[0].mxu0 %v3470
  %v3472 = vpop.f32.mrb[0].mxu0
  %v3473 = vadd.f32 %v3272, %v3472
  %v3474 = vpop.f32.mrb[0].mxu0
  %3475 = vmatprep.mubr.f32.mxu0 0.0
  %v3476 = vand.u32 %v2621, 4294901760
  %v3477 = vsub.f32 %v2621, %v3476
  %v3478 = vand.u32 %v3477, 4294901760
  %3479 = vmatmul.mubr.f32.gmra.mrb[0].mxu0 %v3478
  %v3480 = vpop.f32.mrb[0].mxu0
  %v3481 = vadd.f32 %v3279, %v3480
  %v3482 = vpop.f32.mrb[0].mxu0
  %3483 = vmatprep.mubr.f32.mxu0 0.0
  %v3484 = vand.u32 %v2623, 4294901760
  %v3485 = vsub.f32 %v2623, %v3484
  %v3486 = vand.u32 %v3485, 4294901760
  %3487 = vmatmul.mubr.f32.gmra.mrb[0].mxu0 %v3486
  %v3488 = vpop.f32.mrb[0].mxu0
  %v3489 = vadd.f32 %v3286, %v3488
  %v3490 = vpop.f32.mrb[0].mxu0
  %3491 = vmatprep.mubr.f32.mxu0 0.0
  %v3492 = vand.u32 %v2625, 4294901760
  %v3493 = vsub.f32 %v2625, %v3492
  %v3494 = vand.u32 %v3493, 4294901760
  %3495 = vmatmul.mubr.f32.gmra.mrb[0].mxu0 %v3494
  %v3496 = vpop.f32.mrb[0].mxu0
  %v3497 = vadd.f32 %v3293, %v3496
  %v3498 = vpop.f32.mrb[0].mxu0
  %3499 = vmatprep.mubr.f32.mxu0 0.0
  %v3500 = vand.u32 %v2627, 4294901760
  %v3501 = vsub.f32 %v2627, %v3500
  %v3502 = vand.u32 %v3501, 4294901760
  %3503 = vmatmul.mubr.f32.gmra.mrb[0].mxu0 %v3502
  %v3504 = vpop.f32.mrb[0].mxu0
  %v3505 = vadd.f32 %v3300, %v3504
  %v3506 = vpop.f32.mrb[0].mxu0
  %3507 = vmatprep.mubr.f32.mxu0 0.0
  %v3508 = vand.u32 %v2629, 4294901760
  %v3509 = vsub.f32 %v2629, %v3508
  %v3510 = vand.u32 %v3509, 4294901760
  %3511 = vmatmul.mubr.f32.gmra.mrb[0].mxu0 %v3510
  %v3512 = vpop.f32.mrb[0].mxu0
  %v3513 = vadd.f32 %v3307, %v3512
  %v3514 = vpop.f32.mrb[0].mxu0
  %3515 = vmatprep.mubr.f32.mxu0 0.0
  %v3516 = vand.u32 %v2631, 4294901760
  %v3517 = vsub.f32 %v2631, %v3516
  %v3518 = vand.u32 %v3517, 4294901760
  %3519 = vmatmul.mubr.f32.gmra.mrb[0].mxu0 %v3518
  %v3520 = vpop.f32.mrb[0].mxu0
  %v3521 = vadd.f32 %v3314, %v3520
  %v3522 = vpop.f32.mrb[0].mxu0
  %3523 = vmatprep.mubr.f32.mxu0 0.0
  %v3524 = vand.u32 %v2633, 4294901760
  %v3525 = vsub.f32 %v2633, %v3524
  %v3526 = vand.u32 %v3525, 4294901760
  %3527 = vmatmul.mubr.f32.gmra.mrb[0].mxu0 %v3526
  %v3528 = vpop.f32.mrb[0].mxu0
  %v3529 = vadd.f32 %v3321, %v3528
  %v3530 = vpop.f32.mrb[0].mxu0
  %3531 = vmatprep.mubr.f32.mxu0 0.0
  %v3532 = vand.u32 %v2635, 4294901760
  %v3533 = vsub.f32 %v2635, %v3532
  %v3534 = vand.u32 %v3533, 4294901760
  %3535 = vmatmul.mubr.f32.gmra.mrb[0].mxu0 %v3534
  %v3536 = vpop.f32.mrb[0].mxu0
  %v3537 = vadd.f32 %v3328, %v3536
  %v3538 = vpop.f32.mrb[0].mxu0
  %3539 = vdwg.mxu0
  %3540 = vmatprep.subr.mxu0 0.0
  %v3541 = vand.u32 %v28, 4294901760
  %v3542 = vsub.f32 %v28, %v3541
  %v3543 = vand.u32 %v3542, 4294901760
  %3544 = vmatpush1.msra.mxu0 %v3543
  %3545 = vmatprep.subr.mxu0 0.0
  %v3546 = vand.u32 %v29, 4294901760
  %v3547 = vsub.f32 %v29, %v3546
  %v3548 = vand.u32 %v3547, 4294901760
  %3549 = vmatpush1.msra.mxu0 %v3548
  %3550 = vmatprep.subr.mxu0 0.0
  %v3551 = vand.u32 %v30, 4294901760
  %v3552 = vsub.f32 %v30, %v3551
  %v3553 = vand.u32 %v3552, 4294901760
  %3554 = vmatpush1.msra.mxu0 %v3553
  %3555 = vmatprep.subr.mxu0 0.0
  %v3556 = vand.u32 %v31, 4294901760
  %v3557 = vsub.f32 %v31, %v3556
  %v3558 = vand.u32 %v3557, 4294901760
  %3559 = vmatpush1.msra.mxu0 %v3558
  %3560 = vmatprep.subr.mxu0 0.0
  %v3561 = vand.u32 %v32, 4294901760
  %v3562 = vsub.f32 %v32, %v3561
  %v3563 = vand.u32 %v3562, 4294901760
  %3564 = vmatpush1.msra.mxu0 %v3563
  %3565 = vmatprep.subr.mxu0 0.0
  %v3566 = vand.u32 %v33, 4294901760
  %v3567 = vsub.f32 %v33, %v3566
  %v3568 = vand.u32 %v3567, 4294901760
  %3569 = vmatpush1.msra.mxu0 %v3568
  %3570 = vmatprep.subr.mxu0 0.0
  %v3571 = vand.u32 %v34, 4294901760
  %v3572 = vsub.f32 %v34, %v3571
  %v3573 = vand.u32 %v3572, 4294901760
  %3574 = vmatpush1.msra.mxu0 %v3573
  %3575 = vmatprep.subr.mxu0 0.0
  %v3576 = vand.u32 %v35, 4294901760
  %v3577 = vsub.f32 %v35, %v3576
  %v3578 = vand.u32 %v3577, 4294901760
  %3579 = vmatpush1.msra.mxu0 %v3578
  %3580 = vmatprep.subr.mxu0 0.0
  %v3581 = vand.u32 %v36, 4294901760
  %v3582 = vsub.f32 %v36, %v3581
  %v3583 = vand.u32 %v3582, 4294901760
  %3584 = vmatpush1.msra.mxu0 %v3583
  %3585 = vmatprep.subr.mxu0 0.0
  %v3586 = vand.u32 %v37, 4294901760
  %v3587 = vsub.f32 %v37, %v3586
  %v3588 = vand.u32 %v3587, 4294901760
  %3589 = vmatpush1.msra.mxu0 %v3588
  %3590 = vmatprep.subr.mxu0 0.0
  %v3591 = vand.u32 %v38, 4294901760
  %v3592 = vsub.f32 %v38, %v3591
  %v3593 = vand.u32 %v3592, 4294901760
  %3594 = vmatpush1.msra.mxu0 %v3593
  %3595 = vmatprep.subr.mxu0 0.0
  %v3596 = vand.u32 %v39, 4294901760
  %v3597 = vsub.f32 %v39, %v3596
  %v3598 = vand.u32 %v3597, 4294901760
  %3599 = vmatpush1.msra.mxu0 %v3598
  %3600 = vmatprep.subr.mxu0 0.0
  %v3601 = vand.u32 %v40, 4294901760
  %v3602 = vsub.f32 %v40, %v3601
  %v3603 = vand.u32 %v3602, 4294901760
  %3604 = vmatpush1.msra.mxu0 %v3603
  %3605 = vmatprep.subr.mxu0 0.0
  %v3606 = vand.u32 %v41, 4294901760
  %v3607 = vsub.f32 %v41, %v3606
  %v3608 = vand.u32 %v3607, 4294901760
  %3609 = vmatpush1.msra.mxu0 %v3608
  %3610 = vmatprep.subr.mxu0 0.0
  %v3611 = vand.u32 %v42, 4294901760
  %v3612 = vsub.f32 %v42, %v3611
  %v3613 = vand.u32 %v3612, 4294901760
  %3614 = vmatpush1.msra.mxu0 %v3613
  %3615 = vmatprep.subr.mxu0 0.0
  %v3616 = vand.u32 %v43, 4294901760
  %v3617 = vsub.f32 %v43, %v3616
  %v3618 = vand.u32 %v3617, 4294901760
  %3619 = vmatpush1.msra.mxu0 %v3618
  %3620 = vmatprep.subr.mxu0 0.0
  %3621 = vmatpush1.msra.mxu0 0.0
  %3622 = vmatprep.subr.mxu0 0.0
  %3623 = vmatpush1.msra.mxu0 0.0
  %3624 = vmatprep.subr.mxu0 0.0
  %3625 = vmatpush1.msra.mxu0 0.0
  %3626 = vmatprep.subr.mxu0 0.0
  %3627 = vmatpush1.msra.mxu0 0.0
  %3628 = vmatprep.subr.mxu0 0.0
  %3629 = vmatpush1.msra.mxu0 0.0
  %3630 = vmatprep.subr.mxu0 0.0
  %3631 = vmatpush1.msra.mxu0 0.0
  %3632 = vmatprep.subr.mxu0 0.0
  %3633 = vmatpush1.msra.mxu0 0.0
  %3634 = vmatprep.subr.mxu0 0.0
  %3635 = vmatpush1.msra.mxu0 0.0
  %3636 = vmatprep.subr.mxu0 0.0
  %3637 = vmatpush1.msra.mxu0 0.0
  %3638 = vmatprep.subr.mxu0 0.0
  %3639 = vmatpush1.msra.mxu0 0.0
  %3640 = vmatprep.subr.mxu0 0.0
  %3641 = vmatpush1.msra.mxu0 0.0
  %3642 = vmatprep.subr.mxu0 0.0
  %3643 = vmatpush1.msra.mxu0 0.0
  %3644 = vmatprep.subr.mxu0 0.0
  %3645 = vmatpush1.msra.mxu0 0.0
  %3646 = vmatprep.subr.mxu0 0.0
  %3647 = vmatpush1.msra.mxu0 0.0
  %3648 = vmatprep.subr.mxu0 0.0
  %3649 = vmatpush1.msra.mxu0 0.0
  %3650 = vmatprep.subr.mxu0 0.0
  %3651 = vmatpush1.msra.mxu0 0.0
  %3652 = vmatprep.mubr.f32.mxu0 0.0
  %v3653 = vand.u32 %v2605, 4294901760
  %3654 = vmatmul.mubr.f32.gmra.mrb[0].mxu0 %v3653
  %v3655 = vpop.f32.mrb[0].mxu0
  %v3656 = vadd.f32 %v3417, %v3655
  %v3657 = vpop.f32.mrb[0].mxu0
  %3658 = vmatprep.mubr.f32.mxu0 0.0
  %v3659 = vand.u32 %v2607, 4294901760
  %3660 = vmatmul.mubr.f32.gmra.mrb[0].mxu0 %v3659
  %v3661 = vpop.f32.mrb[0].mxu0
  %v3662 = vadd.f32 %v3425, %v3661
  %v3663 = vpop.f32.mrb[0].mxu0
  %3664 = vmatprep.mubr.f32.mxu0 0.0
  %v3665 = vand.u32 %v2609, 4294901760
  %3666 = vmatmul.mubr.f32.gmra.mrb[0].mxu0 %v3665
  %v3667 = vpop.f32.mrb[0].mxu0
  %v3668 = vadd.f32 %v3433, %v3667
  %v3669 = vpop.f32.mrb[0].mxu0
  %3670 = vmatprep.mubr.f32.mxu0 0.0
  %v3671 = vand.u32 %v2611, 4294901760
  %3672 = vmatmul.mubr.f32.gmra.mrb[0].mxu0 %v3671
  %v3673 = vpop.f32.mrb[0].mxu0
  %v3674 = vadd.f32 %v3441, %v3673
  %v3675 = vpop.f32.mrb[0].mxu0
  %3676 = vmatprep.mubr.f32.mxu0 0.0
  %v3677 = vand.u32 %v2613, 4294901760
  %3678 = vmatmul.mubr.f32.gmra.mrb[0].mxu0 %v3677
  %v3679 = vpop.f32.mrb[0].mxu0
  %v3680 = vadd.f32 %v3449, %v3679
  %v3681 = vpop.f32.mrb[0].mxu0
  %3682 = vmatprep.mubr.f32.mxu0 0.0
  %v3683 = vand.u32 %v2615, 4294901760
  %3684 = vmatmul.mubr.f32.gmra.mrb[0].mxu0 %v3683
  %v3685 = vpop.f32.mrb[0].mxu0
  %v3686 = vadd.f32 %v3457, %v3685
  %v3687 = vpop.f32.mrb[0].mxu0
  %3688 = vmatprep.mubr.f32.mxu0 0.0
  %v3689 = vand.u32 %v2617, 4294901760
  %3690 = vmatmul.mubr.f32.gmra.mrb[0].mxu0 %v3689
  %v3691 = vpop.f32.mrb[0].mxu0
  %v3692 = vadd.f32 %v3465, %v3691
  %v3693 = vpop.f32.mrb[0].mxu0
  %3694 = vmatprep.mubr.f32.mxu0 0.0
  %v3695 = vand.u32 %v2619, 4294901760
  %3696 = vmatmul.mubr.f32.gmra.mrb[0].mxu0 %v3695
  %v3697 = vpop.f32.mrb[0].mxu0
  %v3698 = vadd.f32 %v3473, %v3697
  %v3699 = vpop.f32.mrb[0].mxu0
  %3700 = vmatprep.mubr.f32.mxu0 0.0
  %v3701 = vand.u32 %v2621, 4294901760
  %3702 = vmatmul.mubr.f32.gmra.mrb[0].mxu0 %v3701
  %v3703 = vpop.f32.mrb[0].mxu0
  %v3704 = vadd.f32 %v3481, %v3703
  %v3705 = vpop.f32.mrb[0].mxu0
  %3706 = vmatprep.mubr.f32.mxu0 0.0
  %v3707 = vand.u32 %v2623, 4294901760
  %3708 = vmatmul.mubr.f32.gmra.mrb[0].mxu0 %v3707
  %v3709 = vpop.f32.mrb[0].mxu0
  %v3710 = vadd.f32 %v3489, %v3709
  %v3711 = vpop.f32.mrb[0].mxu0
  %3712 = vmatprep.mubr.f32.mxu0 0.0
  %v3713 = vand.u32 %v2625, 4294901760
  %3714 = vmatmul.mubr.f32.gmra.mrb[0].mxu0 %v3713
  %v3715 = vpop.f32.mrb[0].mxu0
  %v3716 = vadd.f32 %v3497, %v3715
  %v3717 = vpop.f32.mrb[0].mxu0
  %3718 = vmatprep.mubr.f32.mxu0 0.0
  %v3719 = vand.u32 %v2627, 4294901760
  %3720 = vmatmul.mubr.f32.gmra.mrb[0].mxu0 %v3719
  %v3721 = vpop.f32.mrb[0].mxu0
  %v3722 = vadd.f32 %v3505, %v3721
  %v3723 = vpop.f32.mrb[0].mxu0
  %3724 = vmatprep.mubr.f32.mxu0 0.0
  %v3725 = vand.u32 %v2629, 4294901760
  %3726 = vmatmul.mubr.f32.gmra.mrb[0].mxu0 %v3725
  %v3727 = vpop.f32.mrb[0].mxu0
  %v3728 = vadd.f32 %v3513, %v3727
  %v3729 = vpop.f32.mrb[0].mxu0
  %3730 = vmatprep.mubr.f32.mxu0 0.0
  %v3731 = vand.u32 %v2631, 4294901760
  %3732 = vmatmul.mubr.f32.gmra.mrb[0].mxu0 %v3731
  %v3733 = vpop.f32.mrb[0].mxu0
  %v3734 = vadd.f32 %v3521, %v3733
  %v3735 = vpop.f32.mrb[0].mxu0
  %3736 = vmatprep.mubr.f32.mxu0 0.0
  %v3737 = vand.u32 %v2633, 4294901760
  %3738 = vmatmul.mubr.f32.gmra.mrb[0].mxu0 %v3737
  %v3739 = vpop.f32.mrb[0].mxu0
  %v3740 = vadd.f32 %v3529, %v3739
  %v3741 = vpop.f32.mrb[0].mxu0
  %3742 = vmatprep.mubr.f32.mxu0 0.0
  %v3743 = vand.u32 %v2635, 4294901760
  %3744 = vmatmul.mubr.f32.gmra.mrb[0].mxu0 %v3743
  %v3745 = vpop.f32.mrb[0].mxu0
  %v3746 = vadd.f32 %v3537, %v3745
  %v3747 = vpop.f32.mrb[0].mxu0
  %3748 = vdwg.mxu0
  %3749 = vmatprep.subr.mxu0 0.0
  %v3750 = vand.u32 %v28, 4294901760
  %3751 = vmatpush1.msra.mxu0 %v3750
  %3752 = vmatprep.subr.mxu0 0.0
  %v3753 = vand.u32 %v29, 4294901760
  %3754 = vmatpush1.msra.mxu0 %v3753
  %3755 = vmatprep.subr.mxu0 0.0
  %v3756 = vand.u32 %v30, 4294901760
  %3757 = vmatpush1.msra.mxu0 %v3756
  %3758 = vmatprep.subr.mxu0 0.0
  %v3759 = vand.u32 %v31, 4294901760
  %3760 = vmatpush1.msra.mxu0 %v3759
  %3761 = vmatprep.subr.mxu0 0.0
  %v3762 = vand.u32 %v32, 4294901760
  %3763 = vmatpush1.msra.mxu0 %v3762
  %3764 = vmatprep.subr.mxu0 0.0
  %v3765 = vand.u32 %v33, 4294901760
  %3766 = vmatpush1.msra.mxu0 %v3765
  %3767 = vmatprep.subr.mxu0 0.0
  %v3768 = vand.u32 %v34, 4294901760
  %3769 = vmatpush1.msra.mxu0 %v3768
  %3770 = vmatprep.subr.mxu0 0.0
  %v3771 = vand.u32 %v35, 4294901760
  %3772 = vmatpush1.msra.mxu0 %v3771
  %3773 = vmatprep.subr.mxu0 0.0
  %v3774 = vand.u32 %v36, 4294901760
  %3775 = vmatpush1.msra.mxu0 %v3774
  %3776 = vmatprep.subr.mxu0 0.0
  %v3777 = vand.u32 %v37, 4294901760
  %3778 = vmatpush1.msra.mxu0 %v3777
  %3779 = vmatprep.subr.mxu0 0.0
  %v3780 = vand.u32 %v38, 4294901760
  %3781 = vmatpush1.msra.mxu0 %v3780
  %3782 = vmatprep.subr.mxu0 0.0
  %v3783 = vand.u32 %v39, 4294901760
  %3784 = vmatpush1.msra.mxu0 %v3783
  %3785 = vmatprep.subr.mxu0 0.0
  %v3786 = vand.u32 %v40, 4294901760
  %3787 = vmatpush1.msra.mxu0 %v3786
  %3788 = vmatprep.subr.mxu0 0.0
  %v3789 = vand.u32 %v41, 4294901760
  %3790 = vmatpush1.msra.mxu0 %v3789
  %3791 = vmatprep.subr.mxu0 0.0
  %v3792 = vand.u32 %v42, 4294901760
  %3793 = vmatpush1.msra.mxu0 %v3792
  %3794 = vmatprep.subr.mxu0 0.0
  %v3795 = vand.u32 %v43, 4294901760
  %3796 = vmatpush1.msra.mxu0 %v3795
  %3797 = vmatprep.subr.mxu0 0.0
  %3798 = vmatpush1.msra.mxu0 0.0
  %3799 = vmatprep.subr.mxu0 0.0
  %3800 = vmatpush1.msra.mxu0 0.0
  %3801 = vmatprep.subr.mxu0 0.0
  %3802 = vmatpush1.msra.mxu0 0.0
  %3803 = vmatprep.subr.mxu0 0.0
  %3804 = vmatpush1.msra.mxu0 0.0
  %3805 = vmatprep.subr.mxu0 0.0
  %3806 = vmatpush1.msra.mxu0 0.0
  %3807 = vmatprep.subr.mxu0 0.0
  %3808 = vmatpush1.msra.mxu0 0.0
  %3809 = vmatprep.subr.mxu0 0.0
  %3810 = vmatpush1.msra.mxu0 0.0
  %3811 = vmatprep.subr.mxu0 0.0
  %3812 = vmatpush1.msra.mxu0 0.0
  %3813 = vmatprep.subr.mxu0 0.0
  %3814 = vmatpush1.msra.mxu0 0.0
  %3815 = vmatprep.subr.mxu0 0.0
  %3816 = vmatpush1.msra.mxu0 0.0
  %3817 = vmatprep.subr.mxu0 0.0
  %3818 = vmatpush1.msra.mxu0 0.0
  %3819 = vmatprep.subr.mxu0 0.0
  %3820 = vmatpush1.msra.mxu0 0.0
  %3821 = vmatprep.subr.mxu0 0.0
  %3822 = vmatpush1.msra.mxu0 0.0
  %3823 = vmatprep.subr.mxu0 0.0
  %3824 = vmatpush1.msra.mxu0 0.0
  %3825 = vmatprep.subr.mxu0 0.0
  %3826 = vmatpush1.msra.mxu0 0.0
  %3827 = vmatprep.subr.mxu0 0.0
  %3828 = vmatpush1.msra.mxu0 0.0
  %3829 = vmatprep.mubr.f32.mxu0 0.0
  %v3830 = vand.u32 %v2605, 4294901760
  %3831 = vmatmul.mubr.f32.gmra.mrb[0].mxu0 %v3830
  %v3832 = vpop.f32.mrb[0].mxu0
  %v3833 = vadd.f32 %v3656, %v3832
  %v3834 = vpop.f32.mrb[0].mxu0
  %3835 = vmatprep.mubr.f32.mxu0 0.0
  %v3836 = vand.u32 %v2607, 4294901760
  %3837 = vmatmul.mubr.f32.gmra.mrb[0].mxu0 %v3836
  %v3838 = vpop.f32.mrb[0].mxu0
  %v3839 = vadd.f32 %v3662, %v3838
  %v3840 = vpop.f32.mrb[0].mxu0
  %3841 = vmatprep.mubr.f32.mxu0 0.0
  %v3842 = vand.u32 %v2609, 4294901760
  %3843 = vmatmul.mubr.f32.gmra.mrb[0].mxu0 %v3842
  %v3844 = vpop.f32.mrb[0].mxu0
  %v3845 = vadd.f32 %v3668, %v3844
  %v3846 = vpop.f32.mrb[0].mxu0
  %3847 = vmatprep.mubr.f32.mxu0 0.0
  %v3848 = vand.u32 %v2611, 4294901760
  %3849 = vmatmul.mubr.f32.gmra.mrb[0].mxu0 %v3848
  %v3850 = vpop.f32.mrb[0].mxu0
  %v3851 = vadd.f32 %v3674, %v3850
  %v3852 = vpop.f32.mrb[0].mxu0
  %3853 = vmatprep.mubr.f32.mxu0 0.0
  %v3854 = vand.u32 %v2613, 4294901760
  %3855 = vmatmul.mubr.f32.gmra.mrb[0].mxu0 %v3854
  %v3856 = vpop.f32.mrb[0].mxu0
  %v3857 = vadd.f32 %v3680, %v3856
  %v3858 = vpop.f32.mrb[0].mxu0
  %3859 = vmatprep.mubr.f32.mxu0 0.0
  %v3860 = vand.u32 %v2615, 4294901760
  %3861 = vmatmul.mubr.f32.gmra.mrb[0].mxu0 %v3860
  %v3862 = vpop.f32.mrb[0].mxu0
  %v3863 = vadd.f32 %v3686, %v3862
  %v3864 = vpop.f32.mrb[0].mxu0
  %3865 = vmatprep.mubr.f32.mxu0 0.0
  %v3866 = vand.u32 %v2617, 4294901760
  %3867 = vmatmul.mubr.f32.gmra.mrb[0].mxu0 %v3866
  %v3868 = vpop.f32.mrb[0].mxu0
  %v3869 = vadd.f32 %v3692, %v3868
  %v3870 = vpop.f32.mrb[0].mxu0
  %3871 = vmatprep.mubr.f32.mxu0 0.0
  %v3872 = vand.u32 %v2619, 4294901760
  %3873 = vmatmul.mubr.f32.gmra.mrb[0].mxu0 %v3872
  %v3874 = vpop.f32.mrb[0].mxu0
  %v3875 = vadd.f32 %v3698, %v3874
  %v3876 = vpop.f32.mrb[0].mxu0
  %3877 = vmatprep.mubr.f32.mxu0 0.0
  %v3878 = vand.u32 %v2621, 4294901760
  %3879 = vmatmul.mubr.f32.gmra.mrb[0].mxu0 %v3878
  %v3880 = vpop.f32.mrb[0].mxu0
  %v3881 = vadd.f32 %v3704, %v3880
  %v3882 = vpop.f32.mrb[0].mxu0
  %3883 = vmatprep.mubr.f32.mxu0 0.0
  %v3884 = vand.u32 %v2623, 4294901760
  %3885 = vmatmul.mubr.f32.gmra.mrb[0].mxu0 %v3884
  %v3886 = vpop.f32.mrb[0].mxu0
  %v3887 = vadd.f32 %v3710, %v3886
  %v3888 = vpop.f32.mrb[0].mxu0
  %3889 = vmatprep.mubr.f32.mxu0 0.0
  %v3890 = vand.u32 %v2625, 4294901760
  %3891 = vmatmul.mubr.f32.gmra.mrb[0].mxu0 %v3890
  %v3892 = vpop.f32.mrb[0].mxu0
  %v3893 = vadd.f32 %v3716, %v3892
  %v3894 = vpop.f32.mrb[0].mxu0
  %3895 = vmatprep.mubr.f32.mxu0 0.0
  %v3896 = vand.u32 %v2627, 4294901760
  %3897 = vmatmul.mubr.f32.gmra.mrb[0].mxu0 %v3896
  %v3898 = vpop.f32.mrb[0].mxu0
  %v3899 = vadd.f32 %v3722, %v3898
  %v3900 = vpop.f32.mrb[0].mxu0
  %3901 = vmatprep.mubr.f32.mxu0 0.0
  %v3902 = vand.u32 %v2629, 4294901760
  %3903 = vmatmul.mubr.f32.gmra.mrb[0].mxu0 %v3902
  %v3904 = vpop.f32.mrb[0].mxu0
  %v3905 = vadd.f32 %v3728, %v3904
  %v3906 = vpop.f32.mrb[0].mxu0
  %3907 = vmatprep.mubr.f32.mxu0 0.0
  %v3908 = vand.u32 %v2631, 4294901760
  %3909 = vmatmul.mubr.f32.gmra.mrb[0].mxu0 %v3908
  %v3910 = vpop.f32.mrb[0].mxu0
  %v3911 = vadd.f32 %v3734, %v3910
  %v3912 = vpop.f32.mrb[0].mxu0
  %3913 = vmatprep.mubr.f32.mxu0 0.0
  %v3914 = vand.u32 %v2633, 4294901760
  %3915 = vmatmul.mubr.f32.gmra.mrb[0].mxu0 %v3914
  %v3916 = vpop.f32.mrb[0].mxu0
  %v3917 = vadd.f32 %v3740, %v3916
  %v3918 = vpop.f32.mrb[0].mxu0
  %3919 = vmatprep.mubr.f32.mxu0 0.0
  %v3920 = vand.u32 %v2635, 4294901760
  %3921 = vmatmul.mubr.f32.gmra.mrb[0].mxu0 %v3920
  %v3922 = vpop.f32.mrb[0].mxu0
  %v3923 = vadd.f32 %v3746, %v3922
  %v3924 = vpop.f32.mrb[0].mxu0
  %3925 = vdwg.mxu0
  %3926 = vst [vmem:[%s2] sm:$0xff] %v3833
  %3927 = vst [vmem:[%s2 + $0x8] sm:$0xff] %v3839
  %3928 = vst [vmem:[%s2 + $0x10] sm:$0xff] %v3845
  %3929 = vst [vmem:[%s2 + $0x18] sm:$0xff] %v3851
  %3930 = vst [vmem:[%s2 + $0x20] sm:$0xff] %v3857
  %3931 = vst [vmem:[%s2 + $0x28] sm:$0xff] %v3863
  %3932 = vst [vmem:[%s2 + $0x30] sm:$0xff] %v3869
  %3933 = vst [vmem:[%s2 + $0x38] sm:$0xff] %v3875
  %3934 = vst [vmem:[%s2 + $0x40] sm:$0xff] %v3881
  %3935 = vst [vmem:[%s2 + $0x48] sm:$0xff] %v3887
  %3936 = vst [vmem:[%s2 + $0x50] sm:$0xff] %v3893
  %3937 = vst [vmem:[%s2 + $0x58] sm:$0xff] %v3899
  %3938 = vst [vmem:[%s2 + $0x60] sm:$0xff] %v3905
  %3939 = vst [vmem:[%s2 + $0x68] sm:$0xff] %v3911
  %3940 = vst [vmem:[%s2 + $0x70] sm:$0xff] %v3917
  %3941 = vst [vmem:[%s2 + $0x78] sm:$0xff] %v3923
  // Predicated region
  $region10: #{action_conditioned_ff_batched.1} parent=0 // pred_check
    _
  $region11: #{action_conditioned_ff_batched.1} parent=0 // pred_check_branch
    %3943 = sbr.rel (0) target = $region13
  $region12: #{action_conditioned_ff_batched.1} parent=0 // pred_region
    _
  $region13: #{action_conditioned_ff_batched.1} parent=0 // pred_fallthru
    _
  // Predicated region
  $region14: #{action_conditioned_ff_batched.1} parent=0 // pred_check
    _
  $region15: #{action_conditioned_ff_batched.1} parent=0 // pred_check_branch
    %3945 = sbr.rel (0) target = $region17
  $region16: #{action_conditioned_ff_batched.1} parent=0 // pred_region
    _
  $region17: #{action_conditioned_ff_batched.1} parent=0 // pred_fallthru
    _

</llo_original>
